<compile_context>
chip_gen: v7x
topology: tpu7x:2x2x1
jax: 0.10.0
libtpu: 0.0.40
codegen_flags: <defaults>
</compile_context>

<pallas_src>
import functools

import jax
import jax.numpy as jnp
from jax import lax
from jax.experimental import pallas as pl
from jax.experimental.pallas import tpu as pltpu

# Model hyper-parameters (VisionTransformer __init__ defaults).
DIM = 128
DEPTH = 4
HEADS = 4
HEAD_DIM = DIM // HEADS
MLP_DIM = 256
NUM_CLASSES = 7
HEAD_PAD = 128          # lane-dense padded width of the mlp_head output
LN_EPS = 1e-5
ATTN_SCALE = 1.0 / (HEAD_DIM ** 0.5)


def _layer_norm(x, gamma, beta):
    mean = jnp.mean(x, axis=-1, keepdims=True)
    var = jnp.mean((x - mean) ** 2, axis=-1, keepdims=True)
    return (x - mean) * lax.rsqrt(var + LN_EPS) * gamma + beta


# ---------------------------------------------------------------------------
# Pallas kernel: one encoder layer per grid step; mlp_head folded into the last step.
# ---------------------------------------------------------------------------
def vit_layer_kernel(mask_ref, x_ref,
                     wqkv_ref, bqkv_ref, wo_ref, bo_ref,
                     g1_ref, be1_ref, w1_ref, bf1_ref,
                     w2_ref, bf2_ref, g2_ref, be2_ref,
                     gh_ref, bh_ref, wh_ref, bhb_ref,
                     o_ref, x_state, *, seq_len):
    """Grid axis = layer index d.  Per-layer weight refs carry a leading size-1 block on the
    DEPTH axis (double-buffered by Pallas).  x_state (VMEM scratch, f32) carries the
    activation slab across grid steps; attention groups are contiguous blocks of `seq_len`
    rows, enforced by the precomputed additive mask."""
    d = pl.program_id(0)

    @pl.when(d == 0)
    def _():
        x_state[...] = x_ref[...]

    x = x_state[...]                                   # (rows, DIM) float32
    rows = x.shape[0]
    neg_mask = mask_ref[...]                           # (rows, rows) f32, hoisted

    # --- multi-head self-attention -----------------------------------------------------
    # Softmax scale is already folded into the Q columns of wqkv / bqkv (prepare_params).
    xb = x.astype(jnp.bfloat16)
    qkv = jnp.dot(xb, wqkv_ref[0], preferred_element_type=jnp.float32) + bqkv_ref[0]
    qkv_b = qkv.astype(jnp.bfloat16)                   # (rows, 3*DIM)
    q = qkv_b[:, :DIM]
    v = qkv_b[:, 2 * DIM:]
    # Transpose K once per layer; per-head K^T slices below are aligned sublane views.
    kT = qkv[:, DIM:2 * DIM].T.astype(jnp.bfloat16)    # (DIM, rows)

    # Per-head score matmuls (4 MXU pushes), then ONE batched softmax over all heads.
    s_heads = [
        jnp.dot(q[:, h * HEAD_DIM:(h + 1) * HEAD_DIM],
                kT[h * HEAD_DIM:(h + 1) * HEAD_DIM, :],
                preferred_element_type=jnp.float32)
        for h in range(HEADS)]
    s = jnp.stack(s_heads, axis=0) + neg_mask[None]    # (HEADS, rows, rows)
    s = s - jnp.max(s, axis=-1, keepdims=True)
    p = jnp.exp(s)
    p = p * pl.reciprocal(jnp.sum(p, axis=-1, keepdims=True), approx=True)
    p = p.astype(jnp.bfloat16)

    # Output projection without concat: accumulate per-head (rows,Hd)@(Hd,DIM) in f32.
    attn = jnp.zeros((rows, DIM), jnp.float32)
    for h in range(HEADS):
        o_h = jnp.dot(p[h], v[:, h * HEAD_DIM:(h + 1) * HEAD_DIM],
                      preferred_element_type=jnp.float32)            # (rows, HEAD_DIM)
        attn = attn + jnp.dot(o_h.astype(jnp.bfloat16),
                              wo_ref[0, h * HEAD_DIM:(h + 1) * HEAD_DIM, :],
                              preferred_element_type=jnp.float32)
    attn = attn + bo_ref[0]

    x = _layer_norm(x + attn, g1_ref[0], be1_ref[0])   # post-LN (torch default)

    # --- feed-forward --------------------------------------------------------------------
    h1 = jnp.dot(x.astype(jnp.bfloat16), w1_ref[0],
                 preferred_element_type=jnp.float32) + bf1_ref[0]
    h1 = jnp.maximum(h1, 0.0)
    ffn = jnp.dot(h1.astype(jnp.bfloat16), w2_ref[0],
                  preferred_element_type=jnp.float32) + bf2_ref[0]
    x = _layer_norm(x + ffn, g2_ref[0], be2_ref[0])

    x_state[...] = x

    # --- mlp_head on torch's x[:, 0, :] (first `seq_len` rows of the batch-major slab) ----
    @pl.when(d == DEPTH - 1)
    def _():
        cls = _layer_norm(x[:seq_len, :], gh_ref[...], bh_ref[...])
        o_ref[...] = jnp.dot(cls.astype(jnp.bfloat16), wh_ref[...],
                             preferred_element_type=jnp.float32) + bhb_ref[...]


# ---------------------------------------------------------------------------
# Wrappers
# ---------------------------------------------------------------------------
def run_vit_fused(x2d, neg_mask, prepped, seq_len):
    rows = x2d.shape[0]
    s, h = prepped["stacked"], prepped["head"]

    def per_layer(arr):
        n_rest = arr.ndim - 1

        def imap(d):
            return (d,) + (0,) * n_rest
        return pl.BlockSpec((1,) + arr.shape[1:], imap)

    def resident(arr):
        n = arr.ndim

        def imap(d):
            return (0,) * n
        return pl.BlockSpec(arr.shape, imap)

    layer_keys = ("wqkv", "bqkv", "wo", "bo", "g1", "be1",
                  "w1", "bf1", "w2", "bf2", "g2", "be2")
    head_keys = ("g", "b", "w", "bias")

    args = (neg_mask, x2d) + tuple(s[k] for k in layer_keys) + tuple(h[k] for k in head_keys)
    in_specs = ([resident(neg_mask), resident(x2d)]
                + [per_layer(s[k]) for k in layer_keys]
                + [resident(h[k]) for k in head_keys])

    kern = functools.partial(vit_layer_kernel, seq_len=seq_len)
    return pl.pallas_call(
        kern,
        out_shape=jax.ShapeDtypeStruct((seq_len, HEAD_PAD), jnp.float32),
        grid_spec=pltpu.PrefetchScalarGridSpec(
            num_scalar_prefetch=0,
            grid=(DEPTH,),
            in_specs=in_specs,
            out_specs=pl.BlockSpec((seq_len, HEAD_PAD), lambda d: (0, 0)),
            scratch_shapes=[pltpu.VMEM((rows, DIM), jnp.float32)],
        ),
        compiler_params=pltpu.CompilerParams(
            dimension_semantics=("arbitrary",)),   # depth axis is sequential (carried state)
    )(*args)


@jax.jit
def vit_forward(x, prepped):
    batch = x.shape[0]
    xv = x.reshape(batch, -1, DIM)        # torch view -> (seq=B, batch=S, DIM)
    L, N, _ = xv.shape                    # L = B (attention axis), N = S
    # batch-major 2-D slab: row = n*L + l  (attention groups are contiguous blocks of L rows)
    x2d = jnp.transpose(xv, (1, 0, 2)).reshape(N * L, DIM).astype(jnp.float32)
    rows = N * L
    # Block-diagonal additive mask, built once per forward from static shapes (const-folded).
    row_g = lax.broadcasted_iota(jnp.int32, (rows, rows), 0) // L
    col_g = lax.broadcasted_iota(jnp.int32, (rows, rows), 1) // L
    neg_mask = jnp.where(row_g == col_g, 0.0, -1e30).astype(jnp.float32)
    logits_padded = run_vit_fused(x2d, neg_mask, prepped, L)
    return logits_padded[:, :NUM_CLASSES]


def prepare_params(params):
    """Host-side, call ONCE at parameter-load time: transpose to x@W layout, fold the softmax
    scale into the Q columns of wqkv/bqkv, stack per-layer weights along a leading DEPTH axis,
    cast matmul weights to bf16, pad the head to 128 lanes."""
    layers = params["layers"]

    def stack(fn):
        return jnp.stack([fn(p) for p in layers], axis=0)

    def qkv_w(p):
        w = p["in_w"].T                                        # (DIM, 3*DIM), x @ W layout
        w = jnp.concatenate([w[:, :DIM] * ATTN_SCALE, w[:, DIM:]], axis=1)
        return w.astype(jnp.bfloat16)

    def qkv_b(p):
        b = jnp.concatenate([p["in_b"][:DIM] * ATTN_SCALE, p["in_b"][DIM:]])
        return b.reshape(1, 3 * DIM)

    stacked = dict(
        wqkv=stack(qkv_w),                                     # (DEPTH, DIM, 3*DIM) bf16
        bqkv=stack(qkv_b),                                     # (DEPTH, 1, 3*DIM)   f32
        wo=stack(lambda p: p["out_w"].T.astype(jnp.bfloat16)),  # (DEPTH, DIM, DIM)
        bo=stack(lambda p: p["out_b"].reshape(1, DIM)),
        g1=stack(lambda p: p["g1"].reshape(1, DIM)),
        be1=stack(lambda p: p["be1"].reshape(1, DIM)),
        w1=stack(lambda p: p["lin1_w"].T.astype(jnp.bfloat16)),  # (DEPTH, DIM, MLP_DIM)
        bf1=stack(lambda p: p["lin1_b"].reshape(1, MLP_DIM)),
        w2=stack(lambda p: p["lin2_w"].T.astype(jnp.bfloat16)),  # (DEPTH, MLP_DIM, DIM)
        bf2=stack(lambda p: p["lin2_b"].reshape(1, DIM)),
        g2=stack(lambda p: p["g2"].reshape(1, DIM)),
        be2=stack(lambda p: p["be2"].reshape(1, DIM)),
    )
    hp = params["head"]
    w_pad = jnp.zeros((DIM, HEAD_PAD), jnp.float32).at[:, :NUM_CLASSES].set(hp["w"].T)
    b_pad = jnp.zeros((1, HEAD_PAD), jnp.float32).at[:, :NUM_CLASSES].set(hp["bias"])
    head = dict(g=hp["g"].reshape(1, DIM), b=hp["b"].reshape(1, DIM),
                w=w_pad.astype(jnp.bfloat16), bias=b_pad)
    return dict(stacked=stacked, head=head)


# ---------------------------------------------------------------------------
# Deterministic parameter init (shapes per torch module __init__, torch conventions)
# ---------------------------------------------------------------------------
def init_vit_params(key, scale=0.05):
    layers = []
    for _ in range(DEPTH):
        key, k0, k1, k2, k3, k4, k5 = jax.random.split(key, 7)
        layers.append(dict(
            in_w=jax.random.normal(k0, (3 * DIM, DIM), jnp.float32) * scale,
            in_b=jax.random.normal(k1, (3 * DIM,), jnp.float32) * scale,
            out_w=jax.random.normal(k2, (DIM, DIM), jnp.float32) * scale,
            out_b=jax.random.normal(k3, (DIM,), jnp.float32) * scale,
            g1=jnp.ones((DIM,), jnp.float32), be1=jnp.zeros((DIM,), jnp.float32),
            lin1_w=jax.random.normal(k4, (MLP_DIM, DIM), jnp.float32) * scale,
            lin1_b=jnp.zeros((MLP_DIM,), jnp.float32),
            lin2_w=jax.random.normal(k5, (DIM, MLP_DIM), jnp.float32) * scale,
            lin2_b=jnp.zeros((DIM,), jnp.float32),
            g2=jnp.ones((DIM,), jnp.float32), be2=jnp.zeros((DIM,), jnp.float32),
        ))
    key, kh0, kh1 = jax.random.split(key, 3)
    head = dict(
        g=jnp.ones((DIM,), jnp.float32), b=jnp.zeros((DIM,), jnp.float32),
        w=jax.random.normal(kh0, (NUM_CLASSES, DIM), jnp.float32) * scale,
        bias=jax.random.normal(kh1, (NUM_CLASSES,), jnp.float32) * scale,
    )
    return dict(layers=layers, head=head)


# ---------------------------------------------------------------------------
# Pure-JAX f32 reference (torch layout / torch math) for validation
# ---------------------------------------------------------------------------
_HI = lax.Precision.HIGHEST


def _ref_ln(x, g, b):
    mean = jnp.mean(x, axis=-1, keepdims=True)
    var = jnp.mean((x - mean) ** 2, axis=-1, keepdims=True)
    return (x - mean) / jnp.sqrt(var + LN_EPS) * g + b


def _ref_mha(x, in_w, in_b, out_w, out_b):
    L, N, D = x.shape
    qkv = jnp.einsum("lnd,ed->lne", x, in_w, precision=_HI) + in_b
    q, k, v = jnp.split(qkv, 3, axis=-1)
    q = q.reshape(L, N, HEADS, HEAD_DIM)
    k = k.reshape(L, N, HEADS, HEAD_DIM)
    v = v.reshape(L, N, HEADS, HEAD_DIM)
    s = jnp.einsum("qnhd,knhd->nhqk", q, k, precision=_HI) / jnp.sqrt(jnp.float32(HEAD_DIM))
    p = jax.nn.softmax(s, axis=-1)
    o = jnp.einsum("nhqk,knhd->qnhd", p, v, precision=_HI).reshape(L, N, D)
    return jnp.einsum("lnd,ed->lne", o, out_w, precision=_HI) + out_b


def ref_forward(x, params):
    batch = x.shape[0]
    h = x.reshape(batch, -1, DIM).astype(jnp.float32)
    for p in params["layers"]:
        a = _ref_mha(h, p["in_w"], p["in_b"], p["out_w"], p["out_b"])
        h = _ref_ln(h + a, p["g1"], p["be1"])
        f = jnp.maximum(jnp.einsum("lnd,md->lnm", h, p["lin1_w"], precision=_HI)
                        + p["lin1_b"], 0.0)
        f = jnp.einsum("lnm,dm->lnd", f, p["lin2_w"], precision=_HI) + p["lin2_b"]
        h = _ref_ln(h + f, p["g2"], p["be2"])
    cls = h[:, 0, :]
    hp = params["head"]
    return jnp.dot(_ref_ln(cls, hp["g"], hp["b"]), hp["w"].T, precision=_HI) + hp["bias"]


if __name__ == "__main__":
    key = jax.random.PRNGKey(0)
    pkey, xkey = jax.random.split(key)
    params = init_vit_params(pkey)
    prepped = prepare_params(params)      # once, at parameter-load time

    # Input: NCHW, (2, 4, 16, 16) -> view(B, -1, 128) = (2, 8, 128).
    x = jax.random.normal(xkey, (2, 4, 16, 16), jnp.float32)

    out = jax.block_until_ready(vit_forward(x, prepped))
    assert out.shape == (2, NUM_CLASSES), out.shape

    ref = ref_forward(x, params)
    err = float(jnp.max(jnp.abs(out - ref)))
    # bf16 MXU operands (f32 accumulation) across 4 layers + approx reciprocal in softmax
    # vs an f32-HIGHEST reference: expect ~1e-2-level absolute deviation on O(1) logits.
    assert err < 7.5e-2, f"mismatch vs reference: max abs err = {err}"

    print("KERNEL_OK")
</pallas_src>

<mosaic_0001>
module attributes {stable_mosaic.version = 11 : i64} {
  func.func @vit_layer_kernel(%arg0: i32, %arg1: memref<16x16xf32, #tpu.memory_space<vmem>>, %arg2: memref<16x128xf32, #tpu.memory_space<vmem>>, %arg3: memref<1x128x384xbf16, #tpu.memory_space<vmem>>, %arg4: memref<1x1x384xf32, #tpu.memory_space<vmem>>, %arg5: memref<1x128x128xbf16, #tpu.memory_space<vmem>>, %arg6: memref<1x1x128xf32, #tpu.memory_space<vmem>>, %arg7: memref<1x1x128xf32, #tpu.memory_space<vmem>>, %arg8: memref<1x1x128xf32, #tpu.memory_space<vmem>>, %arg9: memref<1x128x256xbf16, #tpu.memory_space<vmem>>, %arg10: memref<1x1x256xf32, #tpu.memory_space<vmem>>, %arg11: memref<1x256x128xbf16, #tpu.memory_space<vmem>>, %arg12: memref<1x1x128xf32, #tpu.memory_space<vmem>>, %arg13: memref<1x1x128xf32, #tpu.memory_space<vmem>>, %arg14: memref<1x1x128xf32, #tpu.memory_space<vmem>>, %arg15: memref<1x128xf32, #tpu.memory_space<vmem>>, %arg16: memref<1x128xf32, #tpu.memory_space<vmem>>, %arg17: memref<128x128xbf16, #tpu.memory_space<vmem>>, %arg18: memref<1x128xf32, #tpu.memory_space<vmem>>, %arg19: memref<2x128xf32, #tpu.memory_space<vmem>>, %arg20: memref<16x128xf32, #tpu.memory_space<vmem>>) attributes {dimension_semantics = [#tpu.dimension_semantics<arbitrary>], iteration_bounds = array<i64: 4>, scalar_prefetch = 0 : i64, scratch_operands = 1 : i64, tpu.core_type = #tpu.core_type<tc>, window_params = [{pipeline_mode = #tpu.pipeline_mode<synchronous>, transform_indices = @transform_0, window_bounds = array<i64: 16, 16>}, {pipeline_mode = #tpu.pipeline_mode<synchronous>, transform_indices = @transform_1, window_bounds = array<i64: 16, 128>}, {transform_indices = @transform_2, window_bounds = array<i64: 1, 128, 384>}, {transform_indices = @transform_3, window_bounds = array<i64: 1, 1, 384>}, {transform_indices = @transform_4, window_bounds = array<i64: 1, 128, 128>}, {transform_indices = @transform_5, window_bounds = array<i64: 1, 1, 128>}, {transform_indices = @transform_6, window_bounds = array<i64: 1, 1, 128>}, {transform_indices = @transform_7, window_bounds = array<i64: 1, 1, 128>}, {transform_indices = @transform_8, window_bounds = array<i64: 1, 128, 256>}, {transform_indices = @transform_9, window_bounds = array<i64: 1, 1, 256>}, {transform_indices = @transform_10, window_bounds = array<i64: 1, 256, 128>}, {transform_indices = @transform_11, window_bounds = array<i64: 1, 1, 128>}, {transform_indices = @transform_12, window_bounds = array<i64: 1, 1, 128>}, {transform_indices = @transform_13, window_bounds = array<i64: 1, 1, 128>}, {pipeline_mode = #tpu.pipeline_mode<synchronous>, transform_indices = @transform_14, window_bounds = array<i64: 1, 128>}, {pipeline_mode = #tpu.pipeline_mode<synchronous>, transform_indices = @transform_15, window_bounds = array<i64: 1, 128>}, {pipeline_mode = #tpu.pipeline_mode<synchronous>, transform_indices = @transform_16, window_bounds = array<i64: 128, 128>}, {pipeline_mode = #tpu.pipeline_mode<synchronous>, transform_indices = @transform_17, window_bounds = array<i64: 1, 128>}, {pipeline_mode = #tpu.pipeline_mode<synchronous>, transform_indices = @transform_18, window_bounds = array<i64: 2, 128>}]} {
    %c0_i32 = arith.constant 0 : i32
    %0 = arith.cmpi eq, %arg0, %c0_i32 : i32
    %1 = arith.extui %0 : i1 to i32
    %c0_i32_0 = arith.constant 0 : i32
    %2 = arith.cmpi ne, %1, %c0_i32_0 : i32
    scf.if %2 {
      %c0_77 = arith.constant 0 : index
      %c0_78 = arith.constant 0 : index
      %167 = vector.load %arg2[%c0_77, %c0_78] : memref<16x128xf32, #tpu.memory_space<vmem>>, vector<16x128xf32>
      %c0_79 = arith.constant 0 : index
      %c0_80 = arith.constant 0 : index
      %168 = vector.load %arg20[%c0_79, %c0_80] : memref<16x128xf32, #tpu.memory_space<vmem>>, vector<16x128xf32>
      tpu.vector_store %arg20[%c0_79, %c0_80], %167 {strides = array<i32>} : memref<16x128xf32, #tpu.memory_space<vmem>>, vector<16x128xf32>,
    } else {
    }
    %c0 = arith.constant 0 : index
    %c0_1 = arith.constant 0 : index
    %3 = vector.load %arg20[%c0, %c0_1] : memref<16x128xf32, #tpu.memory_space<vmem>>, vector<16x128xf32>
    %c0_2 = arith.constant 0 : index
    %c0_3 = arith.constant 0 : index
    %4 = vector.load %arg1[%c0_2, %c0_3] : memref<16x16xf32, #tpu.memory_space<vmem>>, vector<16x16xf32>
    %5 = arith.truncf %3 : vector<16x128xf32> to vector<16x128xbf16>
    %c0_4 = arith.constant 0 : index
    %c0_5 = arith.constant 0 : index
    %c0_6 = arith.constant 0 : index
    %6 = vector.load %arg3[%c0_4, %c0_5, %c0_6] : memref<1x128x384xbf16, #tpu.memory_space<vmem>>, vector<1x128x384xbf16>
    %7 = vector.shape_cast %6 : vector<1x128x384xbf16> to vector<128x384xbf16>
    %cst = arith.constant dense<0.000000e+00> : vector<16x384xf32>
    %8 = tpu.matmul %5, %7, %cst {dimension_numbers = #tpu.dot_dimension_numbers<[1], [0], [0], [1], [0, 0, 1, 1], [], []>} : vector<16x128xbf16>, vector<128x384xbf16>, vector<16x384xf32> -> vector<16x384xf32>
    %c0_7 = arith.constant 0 : index
    %c0_8 = arith.constant 0 : index
    %c0_9 = arith.constant 0 : index
    %9 = vector.load %arg4[%c0_7, %c0_8, %c0_9] : memref<1x1x384xf32, #tpu.memory_space<vmem>>, vector<1x1x384xf32>
    %10 = vector.shape_cast %9 : vector<1x1x384xf32> to vector<1x384xf32>
    %11 = vector.broadcast %10 : vector<1x384xf32> to vector<16x384xf32>
    %12 = arith.addf %8, %11 : vector<16x384xf32>
    %13 = arith.truncf %12 : vector<16x384xf32> to vector<16x384xbf16>
    %14 = vector.extract_strided_slice %13 {offsets = [0, 0], sizes = [16, 128], strides = [1, 1]} : vector<16x384xbf16> to vector<16x128xbf16>
    %15 = vector.extract_strided_slice %13 {offsets = [0, 256], sizes = [16, 128], strides = [1, 1]} : vector<16x384xbf16> to vector<16x128xbf16>
    %16 = vector.extract_strided_slice %12 {offsets = [0, 128], sizes = [16, 128], strides = [1, 1]} : vector<16x384xf32> to vector<16x128xf32>
    %17 = tpu.transpose %16, [1, 0] : vector<16x128xf32> -> vector<128x16xf32>
    %18 = arith.truncf %17 : vector<128x16xf32> to vector<128x16xbf16>
    %19 = vector.extract_strided_slice %14 {offsets = [0, 0], sizes = [16, 32], strides = [1, 1]} : vector<16x128xbf16> to vector<16x32xbf16>
    %20 = vector.extract_strided_slice %18 {offsets = [0, 0], sizes = [32, 16], strides = [1, 1]} : vector<128x16xbf16> to vector<32x16xbf16>
    %cst_10 = arith.constant dense<0.000000e+00> : vector<16x16xf32>
    %21 = tpu.matmul %19, %20, %cst_10 {dimension_numbers = #tpu.dot_dimension_numbers<[1], [0], [0], [1], [0, 0, 1, 1], [], []>} : vector<16x32xbf16>, vector<32x16xbf16>, vector<16x16xf32> -> vector<16x16xf32>
    %22 = vector.extract_strided_slice %14 {offsets = [0, 32], sizes = [16, 32], strides = [1, 1]} : vector<16x128xbf16> to vector<16x32xbf16>
    %23 = vector.extract_strided_slice %18 {offsets = [32, 0], sizes = [32, 16], strides = [1, 1]} : vector<128x16xbf16> to vector<32x16xbf16>
    %cst_11 = arith.constant dense<0.000000e+00> : vector<16x16xf32>
    %24 = tpu.matmul %22, %23, %cst_11 {dimension_numbers = #tpu.dot_dimension_numbers<[1], [0], [0], [1], [0, 0, 1, 1], [], []>} : vector<16x32xbf16>, vector<32x16xbf16>, vector<16x16xf32> -> vector<16x16xf32>
    %25 = vector.extract_strided_slice %14 {offsets = [0, 64], sizes = [16, 32], strides = [1, 1]} : vector<16x128xbf16> to vector<16x32xbf16>
    %26 = vector.extract_strided_slice %18 {offsets = [64, 0], sizes = [32, 16], strides = [1, 1]} : vector<128x16xbf16> to vector<32x16xbf16>
    %cst_12 = arith.constant dense<0.000000e+00> : vector<16x16xf32>
    %27 = tpu.matmul %25, %26, %cst_12 {dimension_numbers = #tpu.dot_dimension_numbers<[1], [0], [0], [1], [0, 0, 1, 1], [], []>} : vector<16x32xbf16>, vector<32x16xbf16>, vector<16x16xf32> -> vector<16x16xf32>
    %28 = vector.extract_strided_slice %14 {offsets = [0, 96], sizes = [16, 32], strides = [1, 1]} : vector<16x128xbf16> to vector<16x32xbf16>
    %29 = vector.extract_strided_slice %18 {offsets = [96, 0], sizes = [32, 16], strides = [1, 1]} : vector<128x16xbf16> to vector<32x16xbf16>
    %cst_13 = arith.constant dense<0.000000e+00> : vector<16x16xf32>
    %30 = tpu.matmul %28, %29, %cst_13 {dimension_numbers = #tpu.dot_dimension_numbers<[1], [0], [0], [1], [0, 0, 1, 1], [], []>} : vector<16x32xbf16>, vector<32x16xbf16>, vector<16x16xf32> -> vector<16x16xf32>
    %31 = vector.shape_cast %21 : vector<16x16xf32> to vector<1x16x16xf32>
    %32 = vector.shape_cast %24 : vector<16x16xf32> to vector<1x16x16xf32>
    %33 = vector.shape_cast %27 : vector<16x16xf32> to vector<1x16x16xf32>
    %34 = vector.shape_cast %30 : vector<16x16xf32> to vector<1x16x16xf32>
    %35 = tpu.concatenate %31, %32, %33, %34 in 0 : vector<1x16x16xf32>, vector<1x16x16xf32>, vector<1x16x16xf32>, vector<1x16x16xf32> -> vector<4x16x16xf32>
    %36 = vector.shape_cast %4 : vector<16x16xf32> to vector<1x16x16xf32>
    %37 = vector.broadcast %36 : vector<1x16x16xf32> to vector<4x16x16xf32>
    %38 = arith.addf %35, %37 : vector<4x16x16xf32>
    %cst_14 = arith.constant dense<0xFF800000> : vector<4x16xf32>
    %39 = vector.multi_reduction <maximumf>, %38, %cst_14 [2] : vector<4x16x16xf32> to vector<4x16xf32>
    %40 = vector.shape_cast %39 : vector<4x16xf32> to vector<4x16x1xf32>
    %41 = vector.broadcast %40 : vector<4x16x1xf32> to vector<4x16x16xf32>
    %42 = arith.subf %38, %41 : vector<4x16x16xf32>
    %43 = math.exp %42 : vector<4x16x16xf32>
    %cst_15 = arith.constant dense<0.000000e+00> : vector<4x16xf32>
    %44 = vector.multi_reduction <add>, %43, %cst_15 [2] : vector<4x16x16xf32> to vector<4x16xf32>
    %45 = vector.shape_cast %44 : vector<4x16xf32> to vector<4x16x1xf32>
    %46 = tpu.reciprocal %45 {approx = true} : vector<4x16x1xf32> -> vector<4x16x1xf32>
    %47 = vector.broadcast %46 : vector<4x16x1xf32> to vector<4x16x16xf32>
    %48 = arith.mulf %43, %47 : vector<4x16x16xf32>
    %49 = arith.truncf %48 : vector<4x16x16xf32> to vector<4x16x16xbf16>
    %cst_16 = arith.constant 0.000000e+00 : f32
    %50 = vector.broadcast %cst_16 : f32 to vector<16x128xf32>
    %51 = vector.extract_strided_slice %49 {offsets = [0, 0, 0], sizes = [1, 16, 16], strides = [1, 1, 1]} : vector<4x16x16xbf16> to vector<1x16x16xbf16>
    %52 = vector.shape_cast %51 : vector<1x16x16xbf16> to vector<16x16xbf16>
    %53 = vector.extract_strided_slice %15 {offsets = [0, 0], sizes = [16, 32], strides = [1, 1]} : vector<16x128xbf16> to vector<16x32xbf16>
    %cst_17 = arith.constant dense<0.000000e+00> : vector<16x32xf32>
    %54 = tpu.matmul %52, %53, %cst_17 {dimension_numbers = #tpu.dot_dimension_numbers<[1], [0], [0], [1], [0, 0, 1, 1], [], []>} : vector<16x16xbf16>, vector<16x32xbf16>, vector<16x32xf32> -> vector<16x32xf32>
    %55 = arith.truncf %54 : vector<16x32xf32> to vector<16x32xbf16>
    %c0_18 = arith.constant 0 : index
    %c0_19 = arith.constant 0 : index
    %c0_20 = arith.constant 0 : index
    %56 = vector.load %arg5[%c0_18, %c0_19, %c0_20] : memref<1x128x128xbf16, #tpu.memory_space<vmem>>, vector<1x32x128xbf16>
    %57 = vector.shape_cast %56 : vector<1x32x128xbf16> to vector<32x128xbf16>
    %cst_21 = arith.constant dense<0.000000e+00> : vector<16x128xf32>
    %58 = tpu.matmul %55, %57, %cst_21 {dimension_numbers = #tpu.dot_dimension_numbers<[1], [0], [0], [1], [0, 0, 1, 1], [], []>} : vector<16x32xbf16>, vector<32x128xbf16>, vector<16x128xf32> -> vector<16x128xf32>
    %59 = arith.addf %50, %58 : vector<16x128xf32>
    %60 = vector.extract_strided_slice %49 {offsets = [1, 0, 0], sizes = [1, 16, 16], strides = [1, 1, 1]} : vector<4x16x16xbf16> to vector<1x16x16xbf16>
    %61 = vector.shape_cast %60 : vector<1x16x16xbf16> to vector<16x16xbf16>
    %62 = vector.extract_strided_slice %15 {offsets = [0, 32], sizes = [16, 32], strides = [1, 1]} : vector<16x128xbf16> to vector<16x32xbf16>
    %cst_22 = arith.constant dense<0.000000e+00> : vector<16x32xf32>
    %63 = tpu.matmul %61, %62, %cst_22 {dimension_numbers = #tpu.dot_dimension_numbers<[1], [0], [0], [1], [0, 0, 1, 1], [], []>} : vector<16x16xbf16>, vector<16x32xbf16>, vector<16x32xf32> -> vector<16x32xf32>
    %64 = arith.truncf %63 : vector<16x32xf32> to vector<16x32xbf16>
    %c0_23 = arith.constant 0 : index
    %c32 = arith.constant 32 : index
    %c0_24 = arith.constant 0 : index
    %65 = vector.load %arg5[%c0_23, %c32, %c0_24] : memref<1x128x128xbf16, #tpu.memory_space<vmem>>, vector<1x32x128xbf16>
    %66 = vector.shape_cast %65 : vector<1x32x128xbf16> to vector<32x128xbf16>
    %cst_25 = arith.constant dense<0.000000e+00> : vector<16x128xf32>
    %67 = tpu.matmul %64, %66, %cst_25 {dimension_numbers = #tpu.dot_dimension_numbers<[1], [0], [0], [1], [0, 0, 1, 1], [], []>} : vector<16x32xbf16>, vector<32x128xbf16>, vector<16x128xf32> -> vector<16x128xf32>
    %68 = arith.addf %59, %67 : vector<16x128xf32>
    %69 = vector.extract_strided_slice %49 {offsets = [2, 0, 0], sizes = [1, 16, 16], strides = [1, 1, 1]} : vector<4x16x16xbf16> to vector<1x16x16xbf16>
    %70 = vector.shape_cast %69 : vector<1x16x16xbf16> to vector<16x16xbf16>
    %71 = vector.extract_strided_slice %15 {offsets = [0, 64], sizes = [16, 32], strides = [1, 1]} : vector<16x128xbf16> to vector<16x32xbf16>
    %cst_26 = arith.constant dense<0.000000e+00> : vector<16x32xf32>
    %72 = tpu.matmul %70, %71, %cst_26 {dimension_numbers = #tpu.dot_dimension_numbers<[1], [0], [0], [1], [0, 0, 1, 1], [], []>} : vector<16x16xbf16>, vector<16x32xbf16>, vector<16x32xf32> -> vector<16x32xf32>
    %73 = arith.truncf %72 : vector<16x32xf32> to vector<16x32xbf16>
    %c0_27 = arith.constant 0 : index
    %c64 = arith.constant 64 : index
    %c0_28 = arith.constant 0 : index
    %74 = vector.load %arg5[%c0_27, %c64, %c0_28] : memref<1x128x128xbf16, #tpu.memory_space<vmem>>, vector<1x32x128xbf16>
    %75 = vector.shape_cast %74 : vector<1x32x128xbf16> to vector<32x128xbf16>
    %cst_29 = arith.constant dense<0.000000e+00> : vector<16x128xf32>
    %76 = tpu.matmul %73, %75, %cst_29 {dimension_numbers = #tpu.dot_dimension_numbers<[1], [0], [0], [1], [0, 0, 1, 1], [], []>} : vector<16x32xbf16>, vector<32x128xbf16>, vector<16x128xf32> -> vector<16x128xf32>
    %77 = arith.addf %68, %76 : vector<16x128xf32>
    %78 = vector.extract_strided_slice %49 {offsets = [3, 0, 0], sizes = [1, 16, 16], strides = [1, 1, 1]} : vector<4x16x16xbf16> to vector<1x16x16xbf16>
    %79 = vector.shape_cast %78 : vector<1x16x16xbf16> to vector<16x16xbf16>
    %80 = vector.extract_strided_slice %15 {offsets = [0, 96], sizes = [16, 32], strides = [1, 1]} : vector<16x128xbf16> to vector<16x32xbf16>
    %cst_30 = arith.constant dense<0.000000e+00> : vector<16x32xf32>
    %81 = tpu.matmul %79, %80, %cst_30 {dimension_numbers = #tpu.dot_dimension_numbers<[1], [0], [0], [1], [0, 0, 1, 1], [], []>} : vector<16x16xbf16>, vector<16x32xbf16>, vector<16x32xf32> -> vector<16x32xf32>
    %82 = arith.truncf %81 : vector<16x32xf32> to vector<16x32xbf16>
    %c0_31 = arith.constant 0 : index
    %c96 = arith.constant 96 : index
    %c0_32 = arith.constant 0 : index
    %83 = vector.load %arg5[%c0_31, %c96, %c0_32] : memref<1x128x128xbf16, #tpu.memory_space<vmem>>, vector<1x32x128xbf16>
    %84 = vector.shape_cast %83 : vector<1x32x128xbf16> to vector<32x128xbf16>
    %cst_33 = arith.constant dense<0.000000e+00> : vector<16x128xf32>
    %85 = tpu.matmul %82, %84, %cst_33 {dimension_numbers = #tpu.dot_dimension_numbers<[1], [0], [0], [1], [0, 0, 1, 1], [], []>} : vector<16x32xbf16>, vector<32x128xbf16>, vector<16x128xf32> -> vector<16x128xf32>
    %86 = arith.addf %77, %85 : vector<16x128xf32>
    %c0_34 = arith.constant 0 : index
    %c0_35 = arith.constant 0 : index
    %c0_36 = arith.constant 0 : index
    %87 = vector.load %arg6[%c0_34, %c0_35, %c0_36] : memref<1x1x128xf32, #tpu.memory_space<vmem>>, vector<1x1x128xf32>
    %88 = vector.shape_cast %87 : vector<1x1x128xf32> to vector<1x128xf32>
    %89 = vector.broadcast %88 : vector<1x128xf32> to vector<16x128xf32>
    %90 = arith.addf %86, %89 : vector<16x128xf32>
    %91 = arith.addf %3, %90 : vector<16x128xf32>
    %c0_37 = arith.constant 0 : index
    %c0_38 = arith.constant 0 : index
    %c0_39 = arith.constant 0 : index
    %92 = vector.load %arg7[%c0_37, %c0_38, %c0_39] : memref<1x1x128xf32, #tpu.memory_space<vmem>>, vector<1x1x128xf32>
    %93 = vector.shape_cast %92 : vector<1x1x128xf32> to vector<1x128xf32>
    %c0_40 = arith.constant 0 : index
    %c0_41 = arith.constant 0 : index
    %c0_42 = arith.constant 0 : index
    %94 = vector.load %arg8[%c0_40, %c0_41, %c0_42] : memref<1x1x128xf32, #tpu.memory_space<vmem>>, vector<1x1x128xf32>
    %95 = vector.shape_cast %94 : vector<1x1x128xf32> to vector<1x128xf32>
    %cst_43 = arith.constant dense<0.000000e+00> : vector<16xf32>
    %96 = vector.multi_reduction <add>, %91, %cst_43 [1] : vector<16x128xf32> to vector<16xf32>
    %97 = vector.shape_cast %96 : vector<16xf32> to vector<16x1xf32>
    %cst_44 = arith.constant 1.280000e+02 : f32
    %98 = vector.broadcast %cst_44 : f32 to vector<16x1xf32>
    %99 = arith.divf %97, %98 : vector<16x1xf32>
    %100 = vector.broadcast %99 : vector<16x1xf32> to vector<16x128xf32>
    %101 = arith.subf %91, %100 : vector<16x128xf32>
    %102 = arith.mulf %101, %101 : vector<16x128xf32>
    %cst_45 = arith.constant dense<0.000000e+00> : vector<16xf32>
    %103 = vector.multi_reduction <add>, %102, %cst_45 [1] : vector<16x128xf32> to vector<16xf32>
    %104 = vector.shape_cast %103 : vector<16xf32> to vector<16x1xf32>
    %cst_46 = arith.constant 1.280000e+02 : f32
    %105 = vector.broadcast %cst_46 : f32 to vector<16x1xf32>
    %106 = arith.divf %104, %105 : vector<16x1xf32>
    %107 = vector.broadcast %99 : vector<16x1xf32> to vector<16x128xf32>
    %108 = arith.subf %91, %107 : vector<16x128xf32>
    %cst_47 = arith.constant 9.99999974E-6 : f32
    %109 = vector.broadcast %cst_47 : f32 to vector<16x1xf32>
    %110 = arith.addf %106, %109 : vector<16x1xf32>
    %111 = math.rsqrt %110 : vector<16x1xf32>
    %112 = vector.broadcast %111 : vector<16x1xf32> to vector<16x128xf32>
    %113 = arith.mulf %108, %112 : vector<16x128xf32>
    %114 = vector.broadcast %93 : vector<1x128xf32> to vector<16x128xf32>
    %115 = arith.mulf %113, %114 : vector<16x128xf32>
    %116 = vector.broadcast %95 : vector<1x128xf32> to vector<16x128xf32>
    %117 = arith.addf %115, %116 : vector<16x128xf32>
    %118 = arith.truncf %117 : vector<16x128xf32> to vector<16x128xbf16>
    %c0_48 = arith.constant 0 : index
    %c0_49 = arith.constant 0 : index
    %c0_50 = arith.constant 0 : index
    %119 = vector.load %arg9[%c0_48, %c0_49, %c0_50] : memref<1x128x256xbf16, #tpu.memory_space<vmem>>, vector<1x128x256xbf16>
    %120 = vector.shape_cast %119 : vector<1x128x256xbf16> to vector<128x256xbf16>
    %cst_51 = arith.constant dense<0.000000e+00> : vector<16x256xf32>
    %121 = tpu.matmul %118, %120, %cst_51 {dimension_numbers = #tpu.dot_dimension_numbers<[1], [0], [0], [1], [0, 0, 1, 1], [], []>} : vector<16x128xbf16>, vector<128x256xbf16>, vector<16x256xf32> -> vector<16x256xf32>
    %c0_52 = arith.constant 0 : index
    %c0_53 = arith.constant 0 : index
    %c0_54 = arith.constant 0 : index
    %122 = vector.load %arg10[%c0_52, %c0_53, %c0_54] : memref<1x1x256xf32, #tpu.memory_space<vmem>>, vector<1x1x256xf32>
    %123 = vector.shape_cast %122 : vector<1x1x256xf32> to vector<1x256xf32>
    %124 = vector.broadcast %123 : vector<1x256xf32> to vector<16x256xf32>
    %125 = arith.addf %121, %124 : vector<16x256xf32>
    %cst_55 = arith.constant 0.000000e+00 : f32
    %126 = vector.broadcast %cst_55 : f32 to vector<16x256xf32>
    %127 = arith.maximumf %125, %126 : vector<16x256xf32>
    %128 = arith.truncf %127 : vector<16x256xf32> to vector<16x256xbf16>
    %c0_56 = arith.constant 0 : index
    %c0_57 = arith.constant 0 : index
    %c0_58 = arith.constant 0 : index
    %129 = vector.load %arg11[%c0_56, %c0_57, %c0_58] : memref<1x256x128xbf16, #tpu.memory_space<vmem>>, vector<1x256x128xbf16>
    %130 = vector.shape_cast %129 : vector<1x256x128xbf16> to vector<256x128xbf16>
    %cst_59 = arith.constant dense<0.000000e+00> : vector<16x128xf32>
    %131 = tpu.matmul %128, %130, %cst_59 {dimension_numbers = #tpu.dot_dimension_numbers<[1], [0], [0], [1], [0, 0, 1, 1], [], []>} : vector<16x256xbf16>, vector<256x128xbf16>, vector<16x128xf32> -> vector<16x128xf32>
    %c0_60 = arith.constant 0 : index
    %c0_61 = arith.constant 0 : index
    %c0_62 = arith.constant 0 : index
    %132 = vector.load %arg12[%c0_60, %c0_61, %c0_62] : memref<1x1x128xf32, #tpu.memory_space<vmem>>, vector<1x1x128xf32>
    %133 = vector.shape_cast %132 : vector<1x1x128xf32> to vector<1x128xf32>
    %134 = vector.broadcast %133 : vector<1x128xf32> to vector<16x128xf32>
    %135 = arith.addf %131, %134 : vector<16x128xf32>
    %136 = arith.addf %117, %135 : vector<16x128xf32>
    %c0_63 = arith.constant 0 : index
    %c0_64 = arith.constant 0 : index
    %c0_65 = arith.constant 0 : index
    %137 = vector.load %arg13[%c0_63, %c0_64, %c0_65] : memref<1x1x128xf32, #tpu.memory_space<vmem>>, vector<1x1x128xf32>
    %138 = vector.shape_cast %137 : vector<1x1x128xf32> to vector<1x128xf32>
    %c0_66 = arith.constant 0 : index
    %c0_67 = arith.constant 0 : index
    %c0_68 = arith.constant 0 : index
    %139 = vector.load %arg14[%c0_66, %c0_67, %c0_68] : memref<1x1x128xf32, #tpu.memory_space<vmem>>, vector<1x1x128xf32>
    %140 = vector.shape_cast %139 : vector<1x1x128xf32> to vector<1x128xf32>
    %cst_69 = arith.constant dense<0.000000e+00> : vector<16xf32>
    %141 = vector.multi_reduction <add>, %136, %cst_69 [1] : vector<16x128xf32> to vector<16xf32>
    %142 = vector.shape_cast %141 : vector<16xf32> to vector<16x1xf32>
    %cst_70 = arith.constant 1.280000e+02 : f32
    %143 = vector.broadcast %cst_70 : f32 to vector<16x1xf32>
    %144 = arith.divf %142, %143 : vector<16x1xf32>
    %145 = vector.broadcast %144 : vector<16x1xf32> to vector<16x128xf32>
    %146 = arith.subf %136, %145 : vector<16x128xf32>
    %147 = arith.mulf %146, %146 : vector<16x128xf32>
    %cst_71 = arith.constant dense<0.000000e+00> : vector<16xf32>
    %148 = vector.multi_reduction <add>, %147, %cst_71 [1] : vector<16x128xf32> to vector<16xf32>
    %149 = vector.shape_cast %148 : vector<16xf32> to vector<16x1xf32>
    %cst_72 = arith.constant 1.280000e+02 : f32
    %150 = vector.broadcast %cst_72 : f32 to vector<16x1xf32>
    %151 = arith.divf %149, %150 : vector<16x1xf32>
    %152 = vector.broadcast %144 : vector<16x1xf32> to vector<16x128xf32>
    %153 = arith.subf %136, %152 : vector<16x128xf32>
    %cst_73 = arith.constant 9.99999974E-6 : f32
    %154 = vector.broadcast %cst_73 : f32 to vector<16x1xf32>
    %155 = arith.addf %151, %154 : vector<16x1xf32>
    %156 = math.rsqrt %155 : vector<16x1xf32>
    %157 = vector.broadcast %156 : vector<16x1xf32> to vector<16x128xf32>
    %158 = arith.mulf %153, %157 : vector<16x128xf32>
    %159 = vector.broadcast %138 : vector<1x128xf32> to vector<16x128xf32>
    %160 = arith.mulf %158, %159 : vector<16x128xf32>
    %161 = vector.broadcast %140 : vector<1x128xf32> to vector<16x128xf32>
    %162 = arith.addf %160, %161 : vector<16x128xf32>
    %c0_74 = arith.constant 0 : index
    %c0_75 = arith.constant 0 : index
    %163 = vector.load %arg20[%c0_74, %c0_75] : memref<16x128xf32, #tpu.memory_space<vmem>>, vector<16x128xf32>
    tpu.vector_store %arg20[%c0_74, %c0_75], %162 {strides = array<i32>} : memref<16x128xf32, #tpu.memory_space<vmem>>, vector<16x128xf32>,
    %c3_i32 = arith.constant 3 : i32
    %164 = arith.cmpi eq, %arg0, %c3_i32 : i32
    %165 = arith.extui %164 : i1 to i32
    %c0_i32_76 = arith.constant 0 : i32
    %166 = arith.cmpi ne, %165, %c0_i32_76 : i32
    scf.if %166 {
      %167 = vector.extract_strided_slice %162 {offsets = [0, 0], sizes = [2, 128], strides = [1, 1]} : vector<16x128xf32> to vector<2x128xf32>
      %c0_77 = arith.constant 0 : index
      %c0_78 = arith.constant 0 : index
      %168 = vector.load %arg15[%c0_77, %c0_78] : memref<1x128xf32, #tpu.memory_space<vmem>>, vector<1x128xf32>
      %c0_79 = arith.constant 0 : index
      %c0_80 = arith.constant 0 : index
      %169 = vector.load %arg16[%c0_79, %c0_80] : memref<1x128xf32, #tpu.memory_space<vmem>>, vector<1x128xf32>
      %cst_81 = arith.constant dense<0.000000e+00> : vector<2xf32>
      %170 = vector.multi_reduction <add>, %167, %cst_81 [1] : vector<2x128xf32> to vector<2xf32>
      %171 = vector.shape_cast %170 : vector<2xf32> to vector<2x1xf32>
      %cst_82 = arith.constant 1.280000e+02 : f32
      %172 = vector.broadcast %cst_82 : f32 to vector<2x1xf32>
      %173 = arith.divf %171, %172 : vector<2x1xf32>
      %174 = vector.broadcast %173 : vector<2x1xf32> to vector<2x128xf32>
      %175 = arith.subf %167, %174 : vector<2x128xf32>
      %176 = arith.mulf %175, %175 : vector<2x128xf32>
      %cst_83 = arith.constant dense<0.000000e+00> : vector<2xf32>
      %177 = vector.multi_reduction <add>, %176, %cst_83 [1] : vector<2x128xf32> to vector<2xf32>
      %178 = vector.shape_cast %177 : vector<2xf32> to vector<2x1xf32>
      %cst_84 = arith.constant 1.280000e+02 : f32
      %179 = vector.broadcast %cst_84 : f32 to vector<2x1xf32>
      %180 = arith.divf %178, %179 : vector<2x1xf32>
      %181 = vector.broadcast %173 : vector<2x1xf32> to vector<2x128xf32>
      %182 = arith.subf %167, %181 : vector<2x128xf32>
      %cst_85 = arith.constant 9.99999974E-6 : f32
      %183 = vector.broadcast %cst_85 : f32 to vector<2x1xf32>
      %184 = arith.addf %180, %183 : vector<2x1xf32>
      %185 = math.rsqrt %184 : vector<2x1xf32>
      %186 = vector.broadcast %185 : vector<2x1xf32> to vector<2x128xf32>
      %187 = arith.mulf %182, %186 : vector<2x128xf32>
      %188 = vector.broadcast %168 : vector<1x128xf32> to vector<2x128xf32>
      %189 = arith.mulf %187, %188 : vector<2x128xf32>
      %190 = vector.broadcast %169 : vector<1x128xf32> to vector<2x128xf32>
      %191 = arith.addf %189, %190 : vector<2x128xf32>
      %192 = arith.truncf %191 : vector<2x128xf32> to vector<2x128xbf16>
      %c0_86 = arith.constant 0 : index
      %c0_87 = arith.constant 0 : index
      %193 = vector.load %arg17[%c0_86, %c0_87] : memref<128x128xbf16, #tpu.memory_space<vmem>>, vector<128x128xbf16>
      %cst_88 = arith.constant dense<0.000000e+00> : vector<2x128xf32>
      %194 = tpu.matmul %192, %193, %cst_88 {dimension_numbers = #tpu.dot_dimension_numbers<[1], [0], [0], [1], [0, 0, 1, 1], [], []>} : vector<2x128xbf16>, vector<128x128xbf16>, vector<2x128xf32> -> vector<2x128xf32>
      %c0_89 = arith.constant 0 : index
      %c0_90 = arith.constant 0 : index
      %195 = vector.load %arg18[%c0_89, %c0_90] : memref<1x128xf32, #tpu.memory_space<vmem>>, vector<1x128xf32>
      %196 = vector.broadcast %195 : vector<1x128xf32> to vector<2x128xf32>
      %197 = arith.addf %194, %196 : vector<2x128xf32>
      %c0_91 = arith.constant 0 : index
      %c0_92 = arith.constant 0 : index
      %198 = vector.load %arg19[%c0_91, %c0_92] : memref<2x128xf32, #tpu.memory_space<vmem>>, vector<2x128xf32>
      tpu.vector_store %arg19[%c0_91, %c0_92], %197 {strides = array<i32>} : memref<2x128xf32, #tpu.memory_space<vmem>>, vector<2x128xf32>,
    } else {
    }
    return
  }
  func.func @transform_0(%arg0: i32) -> (i32, i32) {
    %c0_i32 = arith.constant 0 : i32
    %c0_i32_0 = arith.constant 0 : i32
    %c0_i32_1 = arith.constant 0 : i32
    return %c0_i32, %c0_i32_0 : i32, i32
  }
  func.func @transform_1(%arg0: i32) -> (i32, i32) {
    %c0_i32 = arith.constant 0 : i32
    %c0_i32_0 = arith.constant 0 : i32
    %c0_i32_1 = arith.constant 0 : i32
    return %c0_i32, %c0_i32_0 : i32, i32
  }
  func.func @transform_2(%arg0: i32) -> (i32, i32, i32) {
    %c0_i32 = arith.constant 0 : i32
    %c0_i32_0 = arith.constant 0 : i32
    %c0_i32_1 = arith.constant 0 : i32
    return %arg0, %c0_i32, %c0_i32_0 : i32, i32, i32
  }
  func.func @transform_3(%arg0: i32) -> (i32, i32, i32) {
    %c0_i32 = arith.constant 0 : i32
    %c0_i32_0 = arith.constant 0 : i32
    %c0_i32_1 = arith.constant 0 : i32
    return %arg0, %c0_i32, %c0_i32_0 : i32, i32, i32
  }
  func.func @transform_4(%arg0: i32) -> (i32, i32, i32) {
    %c0_i32 = arith.constant 0 : i32
    %c0_i32_0 = arith.constant 0 : i32
    %c0_i32_1 = arith.constant 0 : i32
    return %arg0, %c0_i32, %c0_i32_0 : i32, i32, i32
  }
  func.func @transform_5(%arg0: i32) -> (i32, i32, i32) {
    %c0_i32 = arith.constant 0 : i32
    %c0_i32_0 = arith.constant 0 : i32
    %c0_i32_1 = arith.constant 0 : i32
    return %arg0, %c0_i32, %c0_i32_0 : i32, i32, i32
  }
  func.func @transform_6(%arg0: i32) -> (i32, i32, i32) {
    %c0_i32 = arith.constant 0 : i32
    %c0_i32_0 = arith.constant 0 : i32
    %c0_i32_1 = arith.constant 0 : i32
    return %arg0, %c0_i32, %c0_i32_0 : i32, i32, i32
  }
  func.func @transform_7(%arg0: i32) -> (i32, i32, i32) {
    %c0_i32 = arith.constant 0 : i32
    %c0_i32_0 = arith.constant 0 : i32
    %c0_i32_1 = arith.constant 0 : i32
    return %arg0, %c0_i32, %c0_i32_0 : i32, i32, i32
  }
  func.func @transform_8(%arg0: i32) -> (i32, i32, i32) {
    %c0_i32 = arith.constant 0 : i32
    %c0_i32_0 = arith.constant 0 : i32
    %c0_i32_1 = arith.constant 0 : i32
    return %arg0, %c0_i32, %c0_i32_0 : i32, i32, i32
  }
  func.func @transform_9(%arg0: i32) -> (i32, i32, i32) {
    %c0_i32 = arith.constant 0 : i32
    %c0_i32_0 = arith.constant 0 : i32
    %c0_i32_1 = arith.constant 0 : i32
    return %arg0, %c0_i32, %c0_i32_0 : i32, i32, i32
  }
  func.func @transform_10(%arg0: i32) -> (i32, i32, i32) {
    %c0_i32 = arith.constant 0 : i32
    %c0_i32_0 = arith.constant 0 : i32
    %c0_i32_1 = arith.constant 0 : i32
    return %arg0, %c0_i32, %c0_i32_0 : i32, i32, i32
  }
  func.func @transform_11(%arg0: i32) -> (i32, i32, i32) {
    %c0_i32 = arith.constant 0 : i32
    %c0_i32_0 = arith.constant 0 : i32
    %c0_i32_1 = arith.constant 0 : i32
    return %arg0, %c0_i32, %c0_i32_0 : i32, i32, i32
  }
  func.func @transform_12(%arg0: i32) -> (i32, i32, i32) {
    %c0_i32 = arith.constant 0 : i32
    %c0_i32_0 = arith.constant 0 : i32
    %c0_i32_1 = arith.constant 0 : i32
    return %arg0, %c0_i32, %c0_i32_0 : i32, i32, i32
  }
  func.func @transform_13(%arg0: i32) -> (i32, i32, i32) {
    %c0_i32 = arith.constant 0 : i32
    %c0_i32_0 = arith.constant 0 : i32
    %c0_i32_1 = arith.constant 0 : i32
    return %arg0, %c0_i32, %c0_i32_0 : i32, i32, i32
  }
  func.func @transform_14(%arg0: i32) -> (i32, i32) {
    %c0_i32 = arith.constant 0 : i32
    %c0_i32_0 = arith.constant 0 : i32
    %c0_i32_1 = arith.constant 0 : i32
    return %c0_i32, %c0_i32_0 : i32, i32
  }
  func.func @transform_15(%arg0: i32) -> (i32, i32) {
    %c0_i32 = arith.constant 0 : i32
    %c0_i32_0 = arith.constant 0 : i32
    %c0_i32_1 = arith.constant 0 : i32
    return %c0_i32, %c0_i32_0 : i32, i32
  }
  func.func @transform_16(%arg0: i32) -> (i32, i32) {
    %c0_i32 = arith.constant 0 : i32
    %c0_i32_0 = arith.constant 0 : i32
    %c0_i32_1 = arith.constant 0 : i32
    return %c0_i32, %c0_i32_0 : i32, i32
  }
  func.func @transform_17(%arg0: i32) -> (i32, i32) {
    %c0_i32 = arith.constant 0 : i32
    %c0_i32_0 = arith.constant 0 : i32
    %c0_i32_1 = arith.constant 0 : i32
    return %c0_i32, %c0_i32_0 : i32, i32
  }
  func.func @transform_18(%arg0: i32) -> (i32, i32) {
    %c0_i32 = arith.constant 0 : i32
    %c0_i32_0 = arith.constant 0 : i32
    %c0_i32_1 = arith.constant 0 : i32
    return %c0_i32, %c0_i32_0 : i32, i32
  }
}

</mosaic_0001>

<llo_original>
// kernel: vit_forward.1
$region0: #{vit_forward.1}
  #allocation0 [shape = 'u32[]', space=smem, size = 0x4, offset = 0x4, fixed_abs, tag = 'smem constant byte address 0x4 - core index']
  #allocation1 [shape = 'u32[144,128]{1,0:T(1,128)}', space=vmem, size = 0x12000, scoped, tag = 'internal scratch']
  #allocation2 [shape = 'f32[16,128]{1,0:T(8,128)}', space=vmem, size = 0x2000, scoped, tag = 'scratch operand']
  %s0 = inlined_call_operand.vmem [shape: f32[16,16], index: 0, kind: input, shape index: {}]
  %s1 = inlined_call_operand.vmem [shape: f32[16,128], index: 1, kind: input, shape index: {}]
  %s2 = inlined_call_operand.hbm [shape: bf16[4,128,384], index: 2, kind: input, shape index: {}]
  %s3 = inlined_call_operand.vmem [shape: f32[4,1,384], index: 3, kind: input, shape index: {}]
  %s4 = inlined_call_operand.vmem [shape: bf16[4,128,128], index: 4, kind: input, shape index: {}]
  %s5 = inlined_call_operand.vmem [shape: f32[4,1,128], index: 5, kind: input, shape index: {}]
  %s6 = inlined_call_operand.hbm [shape: f32[4,1,128], index: 6, kind: input, shape index: {}]
  %s7 = inlined_call_operand.hbm [shape: f32[4,1,128], index: 7, kind: input, shape index: {}]
  %s8 = inlined_call_operand.hbm [shape: bf16[4,128,256], index: 8, kind: input, shape index: {}]
  %s9 = inlined_call_operand.hbm [shape: f32[4,1,256], index: 9, kind: input, shape index: {}]
  %s10 = inlined_call_operand.hbm [shape: bf16[4,256,128], index: 10, kind: input, shape index: {}]
  %s11 = inlined_call_operand.hbm [shape: f32[4,1,128], index: 11, kind: input, shape index: {}]
  %s12 = inlined_call_operand.hbm [shape: f32[4,1,128], index: 12, kind: input, shape index: {}]
  %s13 = inlined_call_operand.hbm [shape: f32[4,1,128], index: 13, kind: input, shape index: {}]
  %s14 = inlined_call_operand.vmem [shape: f32[1,128], index: 14, kind: input, shape index: {}]
  %s15 = inlined_call_operand.hbm [shape: f32[1,128], index: 15, kind: input, shape index: {}]
  %s16 = inlined_call_operand.hbm [shape: bf16[128,128], index: 16, kind: input, shape index: {}]
  %s17 = inlined_call_operand.hbm [shape: f32[1,128], index: 17, kind: input, shape index: {}]
  %s18 = inlined_call_operand.hbm [shape: f32[2,128], index: 18, kind: output, shape index: {}]
  %s19 = sld [smem:[#allocation0]]
  $region161: #{vit_forward.1} parent=0
    _
  %s21 = ssub.s32 1, %s19
  %s22 = scalar_select 0, %s21, %s19
  $region1: #{vit_forward.1} parent=0
    #allocation3 [shape = 'u8[196608]{0}', space=vmem, size = 0x30000, scoped, tag = 'input window, operand 2']
    #allocation4 [shape = 's32[2]{0}', space=sflag, size = 0x8, scoped, tag = 'scoped memory for vit_forward.1']
    #allocation5 [shape = 's32[2]{0}', space=sflag, size = 0x8, scoped, tag = 'scoped memory for vit_forward.1']
    #allocation6 [shape = 'u8[1024]{0}', space=vmem, size = 0x400, scoped, tag = 'input window, operand 6']
    #allocation7 [shape = 's32[2]{0}', space=sflag, size = 0x8, scoped, tag = 'scoped memory for vit_forward.1']
    #allocation8 [shape = 'u8[1024]{0}', space=vmem, size = 0x400, scoped, tag = 'input window, operand 7']
    #allocation9 [shape = 'u8[131072]{0}', space=vmem, size = 0x20000, scoped, tag = 'input window, operand 8']
    #allocation10 [shape = 's32[2]{0}', space=sflag, size = 0x8, scoped, tag = 'scoped memory for vit_forward.1']
    #allocation11 [shape = 'u8[2048]{0}', space=vmem, size = 0x800, scoped, tag = 'input window, operand 9']
    #allocation12 [shape = 'u8[131072]{0}', space=vmem, size = 0x20000, scoped, tag = 'input window, operand 10']
    #allocation13 [shape = 's32[2]{0}', space=sflag, size = 0x8, scoped, tag = 'scoped memory for vit_forward.1']
    #allocation14 [shape = 'u8[1024]{0}', space=vmem, size = 0x400, scoped, tag = 'input window, operand 11']
    #allocation15 [shape = 'u8[1024]{0}', space=vmem, size = 0x400, scoped, tag = 'input window, operand 12']
    #allocation16 [shape = 's32[2]{0}', space=sflag, size = 0x8, scoped, tag = 'scoped memory for vit_forward.1']
    #allocation17 [shape = 'u8[1024]{0}', space=vmem, size = 0x400, scoped, tag = 'input window, operand 13']
    #allocation18 [shape = 'u8[512]{0}', space=vmem, size = 0x400, scoped, tag = 'input window, operand 15, single buffered']
    #allocation19 [shape = 's32[1]{0}', space=sflag, size = 0x4, scoped, tag = 'scoped memory for vit_forward.1']
    #allocation20 [shape = 'u8[32768]{0}', space=vmem, size = 0x8000, scoped, tag = 'input window, operand 16, single buffered']
    #allocation21 [shape = 'u8[512]{0}', space=vmem, size = 0x400, scoped, tag = 'input window, operand 17, single buffered']
    #allocation22 [shape = 's32[1]{0}', space=sflag, size = 0x4, scoped, tag = 'scoped memory for vit_forward.1']
    #allocation23 [shape = 'u8[1024]{0}', space=vmem, size = 0x400, scoped, tag = 'output window, operand 0, single buffered']
    %23 = vsyncpa [#allocation4], 0
    %s24 = scalar_lea.sflag [#allocation4], 1
    %25 = vsyncpa %s24, 0
    %26 = vsyncpa [#allocation7], 0
    %s27 = scalar_lea.sflag [#allocation7], 1
    %28 = vsyncpa %s27, 0
    %29 = vsyncpa [#allocation10], 0
    %s30 = scalar_lea.sflag [#allocation10], 1
    %31 = vsyncpa %s30, 0
    %32 = vsyncpa [#allocation13], 0
    %s33 = scalar_lea.sflag [#allocation13], 1
    %34 = vsyncpa %s33, 0
    %35 = vsyncpa [#allocation16], 0
    %s36 = scalar_lea.sflag [#allocation16], 1
    %37 = vsyncpa %s36, 0
    %38 = vsyncpa [#allocation19], 0
    %39 = vsyncpa [#allocation22], 0
    %40 = vsyncpa [#allocation5], 0
    loop: start=0, step=1, limit=6
    $region2: #{vit_forward.1} parent=1 // loop_pre_header
      _
    $region3: #{vit_forward.1} parent=1 // loop_header
      %s42 = sphi 0, %s46
      %p43 = scmp.ge.s32.totalorder %s42, 6
      %s50 = sphi 0, %s50
      %s52 = sphi 0, %s50
      %s53 = sphi 0, %s52
      %s67 = sphi 0, %s53
      %s71 = sphi 0, %s71
      %s73 = sphi 0, %s71
      %s74 = sphi 0, %s73
      %s88 = sphi 0, %s74
      %s94 = sphi 0, %s96
      %s97 = sphi 0, %s94
      %s98 = sphi 0, %s97
      %s114 = sphi 0, %s98
      %s120 = sphi 0, %s122
      %s123 = sphi 0, %s120
      %s124 = sphi 0, %s123
      %s140 = sphi 0, %s124
      %s146 = sphi 0, %s148
      %s149 = sphi 0, %s146
      %s150 = sphi 0, %s149
      %s166 = sphi 0, %s150
      %s172 = sphi 0, %s174
      %s175 = sphi 0, %s172
      %s176 = sphi 0, %s175
      %s192 = sphi 0, %s176
      %s198 = sphi 0, %s200
      %s201 = sphi 0, %s198
      %s202 = sphi 0, %s201
      %s218 = sphi 0, %s202
      %s224 = sphi 0, %s226
      %s227 = sphi 0, %s224
      %s228 = sphi 0, %s227
      %s244 = sphi 0, %s228
      %s250 = sphi 0, %s252
      %s253 = sphi 0, %s250
      %s254 = sphi 0, %s253
      %s270 = sphi 0, %s254
      %s276 = sphi 0, %s278
      %s279 = sphi 0, %s276
      %s280 = sphi 0, %s279
      %s296 = sphi 0, %s280
      %s302 = sphi 0, %s304
      %s305 = sphi 0, %s302
      %s306 = sphi 0, %s305
      %s322 = sphi 0, %s306
      %s328 = sphi 0, %s330
      %s331 = sphi 0, %s328
      %s332 = sphi 0, %s331
      %s348 = sphi 0, %s332
      %s354 = sphi 0, %s356
      %s357 = sphi 0, %s354
      %s358 = sphi 0, %s357
      %s374 = sphi 0, %s358
      %s380 = sphi 0, %s382
      %s383 = sphi 0, %s380
      %s384 = sphi 0, %s383
      %s400 = sphi 0, %s384
      %s404 = sphi 0, %s404
      %s406 = sphi 0, %s404
      %s407 = sphi 0, %s406
      %s421 = sphi 0, %s407
      %s425 = sphi 0, %s425
      %s427 = sphi 0, %s425
      %s428 = sphi 0, %s427
      %s442 = sphi 0, %s428
      %s446 = sphi 0, %s446
      %s448 = sphi 0, %s446
      %s449 = sphi 0, %s448
      %s463 = sphi 0, %s449
      %s467 = sphi 0, %s467
      %s469 = sphi 0, %s467
      %s470 = sphi 0, %s469
      %s484 = sphi 0, %s470
      %s488 = sphi 0, %s488
      %s490 = sphi 0, %s488
      %s491 = sphi 0, %s490
      %s505 = sphi 0, %s491
    $region4: #{vit_forward.1} parent=1 // loop_header_branch
      %45 = sbr.rel (%p43) target = $region8
    $region5: #{vit_forward.1} parent=1 // loop_body
      %s47 = ssub.s32 %s42, 1
      %s48 = ssub.s32 %s42, 2
      %s49 = sadd.s32 %s42, 1
      %s51 = sadd.s32 %s50, 1
      %p54 = scmp.eq.s32.totalorder %s42, 3
      %p55 = scmp.ne.s32.totalorder %s50, %s52
      %p56 = scmp.eq.s32.totalorder %s42, 0
      %p57 = por %p55, %p56
      %p58 = scmp.ne.s32.totalorder %s50, %s52
      %p59 = scmp.eq.s32.totalorder %s47, 3
      %p60 = por %p58, %p59
      %p61 = scmp.ne.s32.totalorder %s52, %s53
      %p62 = scmp.eq.s32.totalorder %s47, 0
      %p63 = por %p61, %p62
      %p64 = scmp.ne.s32.totalorder %s52, %s53
      %p65 = scmp.eq.s32.totalorder %s48, 3
      %p66 = por %p64, %p65
      %p68 = scmp.ne.s32.totalorder %s53, %s67
      %p69 = scmp.eq.s32.totalorder %s48, 0
      %p70 = por %p68, %p69
      %s72 = sadd.s32 %s71, 1
      %p75 = scmp.eq.s32.totalorder %s42, 3
      %p76 = scmp.ne.s32.totalorder %s71, %s73
      %p77 = scmp.eq.s32.totalorder %s42, 0
      %p78 = por %p76, %p77
      %p79 = scmp.ne.s32.totalorder %s71, %s73
      %p80 = scmp.eq.s32.totalorder %s47, 3
      %p81 = por %p79, %p80
      %p82 = scmp.ne.s32.totalorder %s73, %s74
      %p83 = scmp.eq.s32.totalorder %s47, 0
      %p84 = por %p82, %p83
      %p85 = scmp.ne.s32.totalorder %s73, %s74
      %p86 = scmp.eq.s32.totalorder %s48, 3
      %p87 = por %p85, %p86
      %p89 = scmp.ne.s32.totalorder %s74, %s88
      %p90 = scmp.eq.s32.totalorder %s48, 0
      %p91 = por %p89, %p90
      %s92 = ssub.s32 %s42, %s49
      %p93 = scmp.eq.s32.totalorder %s92, 0
      %s95 = sadd.s32 %s94, 1
      %s96 = scalar_select %p93, %s94, %s95
      %p99 = pneg %p93
      %p100 = scmp.eq.s32.totalorder %s42, 3
      %p101 = por %p99, %p100
      %p102 = scmp.ne.s32.totalorder %s94, %s97
      %p103 = scmp.eq.s32.totalorder %s42, 0
      %p104 = por %p102, %p103
      %p105 = scmp.ne.s32.totalorder %s94, %s97
      %p106 = scmp.eq.s32.totalorder %s47, 3
      %p107 = por %p105, %p106
      %p108 = scmp.ne.s32.totalorder %s97, %s98
      %p109 = scmp.eq.s32.totalorder %s47, 0
      %p110 = por %p108, %p109
      %p111 = scmp.ne.s32.totalorder %s97, %s98
      %p112 = scmp.eq.s32.totalorder %s48, 3
      %p113 = por %p111, %p112
      %p115 = scmp.ne.s32.totalorder %s98, %s114
      %p116 = scmp.eq.s32.totalorder %s48, 0
      %p117 = por %p115, %p116
      %s118 = ssub.s32 %s42, %s49
      %p119 = scmp.eq.s32.totalorder %s118, 0
      %s121 = sadd.s32 %s120, 1
      %s122 = scalar_select %p119, %s120, %s121
      %p125 = pneg %p119
      %p126 = scmp.eq.s32.totalorder %s42, 3
      %p127 = por %p125, %p126
      %p128 = scmp.ne.s32.totalorder %s120, %s123
      %p129 = scmp.eq.s32.totalorder %s42, 0
      %p130 = por %p128, %p129
      %p131 = scmp.ne.s32.totalorder %s120, %s123
      %p132 = scmp.eq.s32.totalorder %s47, 3
      %p133 = por %p131, %p132
      %p134 = scmp.ne.s32.totalorder %s123, %s124
      %p135 = scmp.eq.s32.totalorder %s47, 0
      %p136 = por %p134, %p135
      %p137 = scmp.ne.s32.totalorder %s123, %s124
      %p138 = scmp.eq.s32.totalorder %s48, 3
      %p139 = por %p137, %p138
      %p141 = scmp.ne.s32.totalorder %s124, %s140
      %p142 = scmp.eq.s32.totalorder %s48, 0
      %p143 = por %p141, %p142
      %s144 = ssub.s32 %s42, %s49
      %p145 = scmp.eq.s32.totalorder %s144, 0
      %s147 = sadd.s32 %s146, 1
      %s148 = scalar_select %p145, %s146, %s147
      %p151 = pneg %p145
      %p152 = scmp.eq.s32.totalorder %s42, 3
      %p153 = por %p151, %p152
      %p154 = scmp.ne.s32.totalorder %s146, %s149
      %p155 = scmp.eq.s32.totalorder %s42, 0
      %p156 = por %p154, %p155
      %p157 = scmp.ne.s32.totalorder %s146, %s149
      %p158 = scmp.eq.s32.totalorder %s47, 3
      %p159 = por %p157, %p158
      %p160 = scmp.ne.s32.totalorder %s149, %s150
      %p161 = scmp.eq.s32.totalorder %s47, 0
      %p162 = por %p160, %p161
      %p163 = scmp.ne.s32.totalorder %s149, %s150
      %p164 = scmp.eq.s32.totalorder %s48, 3
      %p165 = por %p163, %p164
      %p167 = scmp.ne.s32.totalorder %s150, %s166
      %p168 = scmp.eq.s32.totalorder %s48, 0
      %p169 = por %p167, %p168
      %s170 = ssub.s32 %s42, %s49
      %p171 = scmp.eq.s32.totalorder %s170, 0
      %s173 = sadd.s32 %s172, 1
      %s174 = scalar_select %p171, %s172, %s173
      %p177 = pneg %p171
      %p178 = scmp.eq.s32.totalorder %s42, 3
      %p179 = por %p177, %p178
      %p180 = scmp.ne.s32.totalorder %s172, %s175
      %p181 = scmp.eq.s32.totalorder %s42, 0
      %p182 = por %p180, %p181
      %p183 = scmp.ne.s32.totalorder %s172, %s175
      %p184 = scmp.eq.s32.totalorder %s47, 3
      %p185 = por %p183, %p184
      %p186 = scmp.ne.s32.totalorder %s175, %s176
      %p187 = scmp.eq.s32.totalorder %s47, 0
      %p188 = por %p186, %p187
      %p189 = scmp.ne.s32.totalorder %s175, %s176
      %p190 = scmp.eq.s32.totalorder %s48, 3
      %p191 = por %p189, %p190
      %p193 = scmp.ne.s32.totalorder %s176, %s192
      %p194 = scmp.eq.s32.totalorder %s48, 0
      %p195 = por %p193, %p194
      %s196 = ssub.s32 %s42, %s49
      %p197 = scmp.eq.s32.totalorder %s196, 0
      %s199 = sadd.s32 %s198, 1
      %s200 = scalar_select %p197, %s198, %s199
      %p203 = pneg %p197
      %p204 = scmp.eq.s32.totalorder %s42, 3
      %p205 = por %p203, %p204
      %p206 = scmp.ne.s32.totalorder %s198, %s201
      %p207 = scmp.eq.s32.totalorder %s42, 0
      %p208 = por %p206, %p207
      %p209 = scmp.ne.s32.totalorder %s198, %s201
      %p210 = scmp.eq.s32.totalorder %s47, 3
      %p211 = por %p209, %p210
      %p212 = scmp.ne.s32.totalorder %s201, %s202
      %p213 = scmp.eq.s32.totalorder %s47, 0
      %p214 = por %p212, %p213
      %p215 = scmp.ne.s32.totalorder %s201, %s202
      %p216 = scmp.eq.s32.totalorder %s48, 3
      %p217 = por %p215, %p216
      %p219 = scmp.ne.s32.totalorder %s202, %s218
      %p220 = scmp.eq.s32.totalorder %s48, 0
      %p221 = por %p219, %p220
      %s222 = ssub.s32 %s42, %s49
      %p223 = scmp.eq.s32.totalorder %s222, 0
      %s225 = sadd.s32 %s224, 1
      %s226 = scalar_select %p223, %s224, %s225
      %p229 = pneg %p223
      %p230 = scmp.eq.s32.totalorder %s42, 3
      %p231 = por %p229, %p230
      %p232 = scmp.ne.s32.totalorder %s224, %s227
      %p233 = scmp.eq.s32.totalorder %s42, 0
      %p234 = por %p232, %p233
      %p235 = scmp.ne.s32.totalorder %s224, %s227
      %p236 = scmp.eq.s32.totalorder %s47, 3
      %p237 = por %p235, %p236
      %p238 = scmp.ne.s32.totalorder %s227, %s228
      %p239 = scmp.eq.s32.totalorder %s47, 0
      %p240 = por %p238, %p239
      %p241 = scmp.ne.s32.totalorder %s227, %s228
      %p242 = scmp.eq.s32.totalorder %s48, 3
      %p243 = por %p241, %p242
      %p245 = scmp.ne.s32.totalorder %s228, %s244
      %p246 = scmp.eq.s32.totalorder %s48, 0
      %p247 = por %p245, %p246
      %s248 = ssub.s32 %s42, %s49
      %p249 = scmp.eq.s32.totalorder %s248, 0
      %s251 = sadd.s32 %s250, 1
      %s252 = scalar_select %p249, %s250, %s251
      %p255 = pneg %p249
      %p256 = scmp.eq.s32.totalorder %s42, 3
      %p257 = por %p255, %p256
      %p258 = scmp.ne.s32.totalorder %s250, %s253
      %p259 = scmp.eq.s32.totalorder %s42, 0
      %p260 = por %p258, %p259
      %p261 = scmp.ne.s32.totalorder %s250, %s253
      %p262 = scmp.eq.s32.totalorder %s47, 3
      %p263 = por %p261, %p262
      %p264 = scmp.ne.s32.totalorder %s253, %s254
      %p265 = scmp.eq.s32.totalorder %s47, 0
      %p266 = por %p264, %p265
      %p267 = scmp.ne.s32.totalorder %s253, %s254
      %p268 = scmp.eq.s32.totalorder %s48, 3
      %p269 = por %p267, %p268
      %p271 = scmp.ne.s32.totalorder %s254, %s270
      %p272 = scmp.eq.s32.totalorder %s48, 0
      %p273 = por %p271, %p272
      %s274 = ssub.s32 %s42, %s49
      %p275 = scmp.eq.s32.totalorder %s274, 0
      %s277 = sadd.s32 %s276, 1
      %s278 = scalar_select %p275, %s276, %s277
      %p281 = pneg %p275
      %p282 = scmp.eq.s32.totalorder %s42, 3
      %p283 = por %p281, %p282
      %p284 = scmp.ne.s32.totalorder %s276, %s279
      %p285 = scmp.eq.s32.totalorder %s42, 0
      %p286 = por %p284, %p285
      %p287 = scmp.ne.s32.totalorder %s276, %s279
      %p288 = scmp.eq.s32.totalorder %s47, 3
      %p289 = por %p287, %p288
      %p290 = scmp.ne.s32.totalorder %s279, %s280
      %p291 = scmp.eq.s32.totalorder %s47, 0
      %p292 = por %p290, %p291
      %p293 = scmp.ne.s32.totalorder %s279, %s280
      %p294 = scmp.eq.s32.totalorder %s48, 3
      %p295 = por %p293, %p294
      %p297 = scmp.ne.s32.totalorder %s280, %s296
      %p298 = scmp.eq.s32.totalorder %s48, 0
      %p299 = por %p297, %p298
      %s300 = ssub.s32 %s42, %s49
      %p301 = scmp.eq.s32.totalorder %s300, 0
      %s303 = sadd.s32 %s302, 1
      %s304 = scalar_select %p301, %s302, %s303
      %p307 = pneg %p301
      %p308 = scmp.eq.s32.totalorder %s42, 3
      %p309 = por %p307, %p308
      %p310 = scmp.ne.s32.totalorder %s302, %s305
      %p311 = scmp.eq.s32.totalorder %s42, 0
      %p312 = por %p310, %p311
      %p313 = scmp.ne.s32.totalorder %s302, %s305
      %p314 = scmp.eq.s32.totalorder %s47, 3
      %p315 = por %p313, %p314
      %p316 = scmp.ne.s32.totalorder %s305, %s306
      %p317 = scmp.eq.s32.totalorder %s47, 0
      %p318 = por %p316, %p317
      %p319 = scmp.ne.s32.totalorder %s305, %s306
      %p320 = scmp.eq.s32.totalorder %s48, 3
      %p321 = por %p319, %p320
      %p323 = scmp.ne.s32.totalorder %s306, %s322
      %p324 = scmp.eq.s32.totalorder %s48, 0
      %p325 = por %p323, %p324
      %s326 = ssub.s32 %s42, %s49
      %p327 = scmp.eq.s32.totalorder %s326, 0
      %s329 = sadd.s32 %s328, 1
      %s330 = scalar_select %p327, %s328, %s329
      %p333 = pneg %p327
      %p334 = scmp.eq.s32.totalorder %s42, 3
      %p335 = por %p333, %p334
      %p336 = scmp.ne.s32.totalorder %s328, %s331
      %p337 = scmp.eq.s32.totalorder %s42, 0
      %p338 = por %p336, %p337
      %p339 = scmp.ne.s32.totalorder %s328, %s331
      %p340 = scmp.eq.s32.totalorder %s47, 3
      %p341 = por %p339, %p340
      %p342 = scmp.ne.s32.totalorder %s331, %s332
      %p343 = scmp.eq.s32.totalorder %s47, 0
      %p344 = por %p342, %p343
      %p345 = scmp.ne.s32.totalorder %s331, %s332
      %p346 = scmp.eq.s32.totalorder %s48, 3
      %p347 = por %p345, %p346
      %p349 = scmp.ne.s32.totalorder %s332, %s348
      %p350 = scmp.eq.s32.totalorder %s48, 0
      %p351 = por %p349, %p350
      %s352 = ssub.s32 %s42, %s49
      %p353 = scmp.eq.s32.totalorder %s352, 0
      %s355 = sadd.s32 %s354, 1
      %s356 = scalar_select %p353, %s354, %s355
      %p359 = pneg %p353
      %p360 = scmp.eq.s32.totalorder %s42, 3
      %p361 = por %p359, %p360
      %p362 = scmp.ne.s32.totalorder %s354, %s357
      %p363 = scmp.eq.s32.totalorder %s42, 0
      %p364 = por %p362, %p363
      %p365 = scmp.ne.s32.totalorder %s354, %s357
      %p366 = scmp.eq.s32.totalorder %s47, 3
      %p367 = por %p365, %p366
      %p368 = scmp.ne.s32.totalorder %s357, %s358
      %p369 = scmp.eq.s32.totalorder %s47, 0
      %p370 = por %p368, %p369
      %p371 = scmp.ne.s32.totalorder %s357, %s358
      %p372 = scmp.eq.s32.totalorder %s48, 3
      %p373 = por %p371, %p372
      %p375 = scmp.ne.s32.totalorder %s358, %s374
      %p376 = scmp.eq.s32.totalorder %s48, 0
      %p377 = por %p375, %p376
      %s378 = ssub.s32 %s42, %s49
      %p379 = scmp.eq.s32.totalorder %s378, 0
      %s381 = sadd.s32 %s380, 1
      %s382 = scalar_select %p379, %s380, %s381
      %p385 = pneg %p379
      %p386 = scmp.eq.s32.totalorder %s42, 3
      %p387 = por %p385, %p386
      %p388 = scmp.ne.s32.totalorder %s380, %s383
      %p389 = scmp.eq.s32.totalorder %s42, 0
      %p390 = por %p388, %p389
      %p391 = scmp.ne.s32.totalorder %s380, %s383
      %p392 = scmp.eq.s32.totalorder %s47, 3
      %p393 = por %p391, %p392
      %p394 = scmp.ne.s32.totalorder %s383, %s384
      %p395 = scmp.eq.s32.totalorder %s47, 0
      %p396 = por %p394, %p395
      %p397 = scmp.ne.s32.totalorder %s383, %s384
      %p398 = scmp.eq.s32.totalorder %s48, 3
      %p399 = por %p397, %p398
      %p401 = scmp.ne.s32.totalorder %s384, %s400
      %p402 = scmp.eq.s32.totalorder %s48, 0
      %p403 = por %p401, %p402
      %s405 = sadd.s32 %s404, 1
      %p408 = scmp.eq.s32.totalorder %s42, 3
      %p409 = scmp.ne.s32.totalorder %s404, %s406
      %p410 = scmp.eq.s32.totalorder %s42, 0
      %p411 = por %p409, %p410
      %p412 = scmp.ne.s32.totalorder %s404, %s406
      %p413 = scmp.eq.s32.totalorder %s47, 3
      %p414 = por %p412, %p413
      %p415 = scmp.ne.s32.totalorder %s406, %s407
      %p416 = scmp.eq.s32.totalorder %s47, 0
      %p417 = por %p415, %p416
      %p418 = scmp.ne.s32.totalorder %s406, %s407
      %p419 = scmp.eq.s32.totalorder %s48, 3
      %p420 = por %p418, %p419
      %p422 = scmp.ne.s32.totalorder %s407, %s421
      %p423 = scmp.eq.s32.totalorder %s48, 0
      %p424 = por %p422, %p423
      %s426 = sadd.s32 %s425, 1
      %p429 = scmp.eq.s32.totalorder %s42, 3
      %p430 = scmp.ne.s32.totalorder %s425, %s427
      %p431 = scmp.eq.s32.totalorder %s42, 0
      %p432 = por %p430, %p431
      %p433 = scmp.ne.s32.totalorder %s425, %s427
      %p434 = scmp.eq.s32.totalorder %s47, 3
      %p435 = por %p433, %p434
      %p436 = scmp.ne.s32.totalorder %s427, %s428
      %p437 = scmp.eq.s32.totalorder %s47, 0
      %p438 = por %p436, %p437
      %p439 = scmp.ne.s32.totalorder %s427, %s428
      %p440 = scmp.eq.s32.totalorder %s48, 3
      %p441 = por %p439, %p440
      %p443 = scmp.ne.s32.totalorder %s428, %s442
      %p444 = scmp.eq.s32.totalorder %s48, 0
      %p445 = por %p443, %p444
      %s447 = sadd.s32 %s446, 1
      %p450 = scmp.eq.s32.totalorder %s42, 3
      %p451 = scmp.ne.s32.totalorder %s446, %s448
      %p452 = scmp.eq.s32.totalorder %s42, 0
      %p453 = por %p451, %p452
      %p454 = scmp.ne.s32.totalorder %s446, %s448
      %p455 = scmp.eq.s32.totalorder %s47, 3
      %p456 = por %p454, %p455
      %p457 = scmp.ne.s32.totalorder %s448, %s449
      %p458 = scmp.eq.s32.totalorder %s47, 0
      %p459 = por %p457, %p458
      %p460 = scmp.ne.s32.totalorder %s448, %s449
      %p461 = scmp.eq.s32.totalorder %s48, 3
      %p462 = por %p460, %p461
      %p464 = scmp.ne.s32.totalorder %s449, %s463
      %p465 = scmp.eq.s32.totalorder %s48, 0
      %p466 = por %p464, %p465
      %s468 = sadd.s32 %s467, 1
      %p471 = scmp.eq.s32.totalorder %s42, 3
      %p472 = scmp.ne.s32.totalorder %s467, %s469
      %p473 = scmp.eq.s32.totalorder %s42, 0
      %p474 = por %p472, %p473
      %p475 = scmp.ne.s32.totalorder %s467, %s469
      %p476 = scmp.eq.s32.totalorder %s47, 3
      %p477 = por %p475, %p476
      %p478 = scmp.ne.s32.totalorder %s469, %s470
      %p479 = scmp.eq.s32.totalorder %s47, 0
      %p480 = por %p478, %p479
      %p481 = scmp.ne.s32.totalorder %s469, %s470
      %p482 = scmp.eq.s32.totalorder %s48, 3
      %p483 = por %p481, %p482
      %p485 = scmp.ne.s32.totalorder %s470, %s484
      %p486 = scmp.eq.s32.totalorder %s48, 0
      %p487 = por %p485, %p486
      %s489 = sadd.s32 %s488, 1
      %p492 = scmp.eq.s32.totalorder %s42, 3
      %p493 = scmp.ne.s32.totalorder %s488, %s490
      %p494 = scmp.eq.s32.totalorder %s42, 0
      %p495 = por %p493, %p494
      %p496 = scmp.ne.s32.totalorder %s488, %s490
      %p497 = scmp.eq.s32.totalorder %s47, 3
      %p498 = por %p496, %p497
      %p499 = scmp.ne.s32.totalorder %s490, %s491
      %p500 = scmp.eq.s32.totalorder %s47, 0
      %p501 = por %p499, %p500
      %p502 = scmp.ne.s32.totalorder %s490, %s491
      %p503 = scmp.eq.s32.totalorder %s48, 3
      %p504 = por %p502, %p503
      %p506 = scmp.ne.s32.totalorder %s491, %s505
      %p507 = scmp.eq.s32.totalorder %s48, 0
      %p508 = por %p506, %p507
      %p509 = scmp.le.s32.totalorder 1, %s42
      %p510 = scmp.lt.s32.totalorder %s42, 5
      %p511 = pnand %p509, %p510
      %p512 = pneg %p511
      // Predicated region
      $region9: #{vit_forward.1} parent=5 // pred_check
        _
      $region10: #{vit_forward.1} parent=5 // pred_check_branch
        %514 = sbr.rel (%p511) target = $region12
      $region11: #{vit_forward.1} parent=5 // pred_region
        %s515 = ssub.s32 %s42, 1
        // Predicated region
        $region13: #{vit_forward.1} parent=11 // pred_check
          %p516 = pneg %p63
        $region14: #{vit_forward.1} parent=11 // pred_check_branch
          %518 = sbr.rel (%p516) target = $region16
        $region15: #{vit_forward.1} parent=11 // pred_region
          _
        $region16: #{vit_forward.1} parent=11 // pred_fallthru
          _
        // Predicated region
        $region17: #{vit_forward.1} parent=11 // pred_check
          %p519 = pneg %p84
        $region18: #{vit_forward.1} parent=11 // pred_check_branch
          %521 = sbr.rel (%p519) target = $region20
        $region19: #{vit_forward.1} parent=11 // pred_region
          _
        $region20: #{vit_forward.1} parent=11 // pred_fallthru
          _
        // Predicated region
        $region21: #{vit_forward.1} parent=11 // pred_check
          %p522 = pneg %p417
        $region22: #{vit_forward.1} parent=11 // pred_check_branch
          %524 = sbr.rel (%p522) target = $region24
        $region23: #{vit_forward.1} parent=11 // pred_region
          _
        $region24: #{vit_forward.1} parent=11 // pred_fallthru
          _
        // Predicated region
        $region25: #{vit_forward.1} parent=11 // pred_check
          %p525 = pneg %p438
        $region26: #{vit_forward.1} parent=11 // pred_check_branch
          %527 = sbr.rel (%p525) target = $region28
        $region27: #{vit_forward.1} parent=11 // pred_region
          %s529 = ssub.s32 16, 16
          %530 = vsyncadd [#allocation19], %s529
          %s532 = sshll.u32 [#allocation18], 4
          %s533 = int_to_ptr.vmem [resolvable:$true] %s532
          %535 = dma.hbm_to_vmem [thread:$0]  %s15, 16, %s533, [#allocation19]
        $region28: #{vit_forward.1} parent=11 // pred_fallthru
          _
        // Predicated region
        $region29: #{vit_forward.1} parent=11 // pred_check
          %p536 = pneg %p459
        $region30: #{vit_forward.1} parent=11 // pred_check_branch
          %538 = sbr.rel (%p536) target = $region32
        $region31: #{vit_forward.1} parent=11 // pred_region
          %s540 = ssub.s32 1024, 1024
          %541 = vsyncadd [#allocation19], %s540
          %s542 = sshll.u32 [#allocation20], 4
          %s543 = int_to_ptr.vmem [resolvable:$true] %s542
          %548 = dma.hbm_to_vmem [thread:$0]  %s16, 1024, %s543, [#allocation19], 64, 64, 4
        $region32: #{vit_forward.1} parent=11 // pred_fallthru
          _
        // Predicated region
        $region33: #{vit_forward.1} parent=11 // pred_check
          %p549 = pneg %p480
        $region34: #{vit_forward.1} parent=11 // pred_check_branch
          %551 = sbr.rel (%p549) target = $region36
        $region35: #{vit_forward.1} parent=11 // pred_region
          %s553 = ssub.s32 16, 16
          %554 = vsyncadd [#allocation22], %s553
          %s556 = sshll.u32 [#allocation21], 4
          %s557 = int_to_ptr.vmem [resolvable:$true] %s556
          %559 = dma.hbm_to_vmem [thread:$0]  %s17, 16, %s557, [#allocation22]
        $region36: #{vit_forward.1} parent=11 // pred_fallthru
          _
      $region12: #{vit_forward.1} parent=5 // pred_fallthru
        _
      %p560 = scmp.lt.s32.totalorder %s42, 4
      // Predicated region
      $region37: #{vit_forward.1} parent=5 // pred_check
        %p561 = pneg %p560
      $region38: #{vit_forward.1} parent=5 // pred_check_branch
        %563 = sbr.rel (%p561) target = $region40
      $region39: #{vit_forward.1} parent=5 // pred_region
        // Predicated region
        $region41: #{vit_forward.1} parent=39 // pred_check
          %p564 = pneg %p104
        $region42: #{vit_forward.1} parent=39 // pred_check_branch
          %566 = sbr.rel (%p564) target = $region44
        $region43: #{vit_forward.1} parent=39 // pred_region
          %s567 = sand.u32 %s94, 1
          %s568 = scalar_lea.sflag [#allocation4], %s567
          %s569 = sand.u32 %s94, 1
          %s570 = smul.addr %s569, 192
          %s571 = scalar_lea.vmem [#allocation3], %s570
          %s573 = ssub.s32 3072, 3072
          %574 = vsyncadd %s568, %s573
          %s575 = smul.addr %s42, 48
          %s576 = smul.addr %s575, 64
          %s577 = scalar_lea.hbm %s2, %s576
          %s578 = sshll.u32 %s571, 4
          %s579 = int_to_ptr.vmem [resolvable:$true] %s578
          %584 = dma.hbm_to_vmem [thread:$0]  %s577, 3072, %s579, %s568, 192, 192, 12
        $region44: #{vit_forward.1} parent=39 // pred_fallthru
          _
        // Predicated region
        $region45: #{vit_forward.1} parent=39 // pred_check
          %p585 = pneg %p130
        $region46: #{vit_forward.1} parent=39 // pred_check_branch
          %587 = sbr.rel (%p585) target = $region48
        $region47: #{vit_forward.1} parent=39 // pred_region
          %p588 = scmp.lt.s32.totalorder %s42, 3
          %s589 = scalar_select %p588, %s42, 3
          %s590 = smul.addr %s589, 3
          %s591 = scalar_lea.vmem %s3, %s590
        $region48: #{vit_forward.1} parent=39 // pred_fallthru
          _
        // Predicated region
        $region49: #{vit_forward.1} parent=39 // pred_check
          %p592 = pneg %p156
        $region50: #{vit_forward.1} parent=39 // pred_check_branch
          %594 = sbr.rel (%p592) target = $region52
        $region51: #{vit_forward.1} parent=39 // pred_region
          %p595 = scmp.lt.s32.totalorder %s42, 3
          %s596 = scalar_select %p595, %s42, 3
          %s597 = smul.addr %s596, 16
          %s598 = smul.addr %s597, 4
          %s599 = scalar_lea.vmem %s4, %s598
        $region52: #{vit_forward.1} parent=39 // pred_fallthru
          _
        // Predicated region
        $region53: #{vit_forward.1} parent=39 // pred_check
          %p600 = pneg %p182
        $region54: #{vit_forward.1} parent=39 // pred_check_branch
          %602 = sbr.rel (%p600) target = $region56
        $region55: #{vit_forward.1} parent=39 // pred_region
          %p603 = scmp.lt.s32.totalorder %s42, 3
          %s604 = scalar_select %p603, %s42, 3
          %s605 = scalar_lea.vmem %s5, %s604
        $region56: #{vit_forward.1} parent=39 // pred_fallthru
          _
        // Predicated region
        $region57: #{vit_forward.1} parent=39 // pred_check
          %p606 = pneg %p208
        $region58: #{vit_forward.1} parent=39 // pred_check_branch
          %608 = sbr.rel (%p606) target = $region60
        $region59: #{vit_forward.1} parent=39 // pred_region
          %s609 = sand.u32 %s42, 1
          %s610 = scalar_lea.sflag [#allocation7], %s609
          %s611 = sand.u32 %s198, 1
          %s612 = scalar_lea.vmem [#allocation6], %s611
          %s614 = ssub.s32 16, 16
          %615 = vsyncadd %s610, %s614
          %s616 = smul.addr %s42, 16
          %s617 = scalar_lea.hbm %s6, %s616
          %s619 = sshll.u32 %s612, 4
          %s620 = int_to_ptr.vmem [resolvable:$true] %s619
          %622 = dma.hbm_to_vmem [thread:$0]  %s617, 16, %s620, %s610
        $region60: #{vit_forward.1} parent=39 // pred_fallthru
          _
        // Predicated region
        $region61: #{vit_forward.1} parent=39 // pred_check
          %p623 = pneg %p234
        $region62: #{vit_forward.1} parent=39 // pred_check_branch
          %625 = sbr.rel (%p623) target = $region64
        $region63: #{vit_forward.1} parent=39 // pred_region
          %s626 = sand.u32 %s42, 1
          %s627 = scalar_lea.sflag [#allocation7], %s626
          %s628 = sand.u32 %s224, 1
          %s629 = scalar_lea.vmem [#allocation8], %s628
          %s631 = ssub.s32 16, 16
          %632 = vsyncadd %s627, %s631
          %s633 = smul.addr %s42, 16
          %s634 = scalar_lea.hbm %s7, %s633
          %s636 = sshll.u32 %s629, 4
          %s637 = int_to_ptr.vmem [resolvable:$true] %s636
          %639 = dma.hbm_to_vmem [thread:$0]  %s634, 16, %s637, %s627
        $region64: #{vit_forward.1} parent=39 // pred_fallthru
          _
        // Predicated region
        $region65: #{vit_forward.1} parent=39 // pred_check
          %p640 = pneg %p260
        $region66: #{vit_forward.1} parent=39 // pred_check_branch
          %642 = sbr.rel (%p640) target = $region68
        $region67: #{vit_forward.1} parent=39 // pred_region
          %s643 = sand.u32 %s42, 1
          %s644 = scalar_lea.sflag [#allocation10], %s643
          %s645 = sand.u32 %s250, 1
          %s646 = smul.addr %s645, 128
          %s647 = scalar_lea.vmem [#allocation9], %s646
          %s649 = ssub.s32 2048, 2048
          %650 = vsyncadd %s644, %s649
          %s651 = smul.addr %s42, 32
          %s652 = smul.addr %s651, 64
          %s653 = scalar_lea.hbm %s8, %s652
          %s654 = sshll.u32 %s647, 4
          %s655 = int_to_ptr.vmem [resolvable:$true] %s654
          %660 = dma.hbm_to_vmem [thread:$0]  %s653, 2048, %s655, %s644, 128, 128, 8
        $region68: #{vit_forward.1} parent=39 // pred_fallthru
          _
        // Predicated region
        $region69: #{vit_forward.1} parent=39 // pred_check
          %p661 = pneg %p286
        $region70: #{vit_forward.1} parent=39 // pred_check_branch
          %663 = sbr.rel (%p661) target = $region72
        $region71: #{vit_forward.1} parent=39 // pred_region
          %s664 = sand.u32 %s42, 1
          %s665 = scalar_lea.sflag [#allocation10], %s664
          %s666 = sand.u32 %s276, 1
          %s667 = smul.addr %s666, 2
          %s668 = scalar_lea.vmem [#allocation11], %s667
          %s670 = ssub.s32 32, 32
          %671 = vsyncadd %s665, %s670
          %s672 = smul.addr %s42, 2
          %s673 = smul.addr %s672, 16
          %s674 = scalar_lea.hbm %s9, %s673
          %s676 = sshll.u32 %s668, 4
          %s677 = int_to_ptr.vmem [resolvable:$true] %s676
          %679 = dma.hbm_to_vmem [thread:$0]  %s674, 32, %s677, %s665
        $region72: #{vit_forward.1} parent=39 // pred_fallthru
          _
        // Predicated region
        $region73: #{vit_forward.1} parent=39 // pred_check
          %p680 = pneg %p312
        $region74: #{vit_forward.1} parent=39 // pred_check_branch
          %682 = sbr.rel (%p680) target = $region76
        $region75: #{vit_forward.1} parent=39 // pred_region
          %s683 = sand.u32 %s42, 1
          %s684 = scalar_lea.sflag [#allocation13], %s683
          %s685 = sand.u32 %s302, 1
          %s686 = smul.addr %s685, 128
          %s687 = scalar_lea.vmem [#allocation12], %s686
          %s689 = ssub.s32 2048, 2048
          %690 = vsyncadd %s684, %s689
          %s691 = smul.addr %s42, 32
          %s692 = smul.addr %s691, 64
          %s693 = scalar_lea.hbm %s10, %s692
          %s694 = sshll.u32 %s687, 4
          %s695 = int_to_ptr.vmem [resolvable:$true] %s694
          %700 = dma.hbm_to_vmem [thread:$0]  %s693, 2048, %s695, %s684, 64, 64, 4
        $region76: #{vit_forward.1} parent=39 // pred_fallthru
          _
        // Predicated region
        $region77: #{vit_forward.1} parent=39 // pred_check
          %p701 = pneg %p338
        $region78: #{vit_forward.1} parent=39 // pred_check_branch
          %703 = sbr.rel (%p701) target = $region80
        $region79: #{vit_forward.1} parent=39 // pred_region
          %s704 = sand.u32 %s42, 1
          %s705 = scalar_lea.sflag [#allocation13], %s704
          %s706 = sand.u32 %s328, 1
          %s707 = scalar_lea.vmem [#allocation14], %s706
          %s709 = ssub.s32 16, 16
          %710 = vsyncadd %s705, %s709
          %s711 = smul.addr %s42, 16
          %s712 = scalar_lea.hbm %s11, %s711
          %s714 = sshll.u32 %s707, 4
          %s715 = int_to_ptr.vmem [resolvable:$true] %s714
          %717 = dma.hbm_to_vmem [thread:$0]  %s712, 16, %s715, %s705
        $region80: #{vit_forward.1} parent=39 // pred_fallthru
          _
        // Predicated region
        $region81: #{vit_forward.1} parent=39 // pred_check
          %p718 = pneg %p364
        $region82: #{vit_forward.1} parent=39 // pred_check_branch
          %720 = sbr.rel (%p718) target = $region84
        $region83: #{vit_forward.1} parent=39 // pred_region
          %s721 = sand.u32 %s42, 1
          %s722 = scalar_lea.sflag [#allocation16], %s721
          %s723 = sand.u32 %s354, 1
          %s724 = scalar_lea.vmem [#allocation15], %s723
          %s726 = ssub.s32 16, 16
          %727 = vsyncadd %s722, %s726
          %s728 = smul.addr %s42, 16
          %s729 = scalar_lea.hbm %s12, %s728
          %s731 = sshll.u32 %s724, 4
          %s732 = int_to_ptr.vmem [resolvable:$true] %s731
          %734 = dma.hbm_to_vmem [thread:$0]  %s729, 16, %s732, %s722
        $region84: #{vit_forward.1} parent=39 // pred_fallthru
          _
        // Predicated region
        $region85: #{vit_forward.1} parent=39 // pred_check
          %p735 = pneg %p390
        $region86: #{vit_forward.1} parent=39 // pred_check_branch
          %737 = sbr.rel (%p735) target = $region88
        $region87: #{vit_forward.1} parent=39 // pred_region
          %s738 = sand.u32 %s42, 1
          %s739 = scalar_lea.sflag [#allocation16], %s738
          %s740 = sand.u32 %s380, 1
          %s741 = scalar_lea.vmem [#allocation17], %s740
          %s743 = ssub.s32 16, 16
          %744 = vsyncadd %s739, %s743
          %s745 = smul.addr %s42, 16
          %s746 = scalar_lea.hbm %s13, %s745
          %s748 = sshll.u32 %s741, 4
          %s749 = int_to_ptr.vmem [resolvable:$true] %s748
          %751 = dma.hbm_to_vmem [thread:$0]  %s746, 16, %s749, %s739
        $region88: #{vit_forward.1} parent=39 // pred_fallthru
          _
      $region40: #{vit_forward.1} parent=5 // pred_fallthru
        _
      %p752 = scmp.le.s32.totalorder 1, %s42
      %p753 = scmp.lt.s32.totalorder %s42, 5
      %p754 = pnand %p752, %p753
      %p755 = pneg %p754
      // Predicated region
      $region89: #{vit_forward.1} parent=5 // pred_check
        _
      $region90: #{vit_forward.1} parent=5 // pred_check_branch
        %757 = sbr.rel (%p754) target = $region92
      $region91: #{vit_forward.1} parent=5 // pred_region
        %s758 = ssub.s32 %s42, 1
        %s759 = sand.u32 %s97, 1
        %s760 = scalar_lea.sflag [#allocation4], %s759
        %s761 = sand.u32 %s97, 1
        %s762 = smul.addr %s761, 192
        %s763 = scalar_lea.vmem [#allocation3], %s762
        // Predicated region
        $region93: #{vit_forward.1} parent=91 // pred_check
          %p764 = pneg %p110
        $region94: #{vit_forward.1} parent=91 // pred_check_branch
          %766 = sbr.rel (%p764) target = $region96
        $region95: #{vit_forward.1} parent=91 // pred_region
          %767 = dma.done %s760, 3072
        $region96: #{vit_forward.1} parent=91 // pred_fallthru
          _
        %s768 = sand.u32 %s47, 1
        %s769 = scalar_lea.sflag [#allocation7], %s768
        %s770 = sand.u32 %s201, 1
        %s771 = scalar_lea.vmem [#allocation6], %s770
        // Predicated region
        $region97: #{vit_forward.1} parent=91 // pred_check
          %p772 = pneg %p214
        $region98: #{vit_forward.1} parent=91 // pred_check_branch
          %774 = sbr.rel (%p772) target = $region100
        $region99: #{vit_forward.1} parent=91 // pred_region
          %775 = dma.done %s769, 16
        $region100: #{vit_forward.1} parent=91 // pred_fallthru
          _
        %s776 = sand.u32 %s47, 1
        %s777 = scalar_lea.sflag [#allocation7], %s776
        %s778 = sand.u32 %s227, 1
        %s779 = scalar_lea.vmem [#allocation8], %s778
        // Predicated region
        $region101: #{vit_forward.1} parent=91 // pred_check
          %p780 = pneg %p240
        $region102: #{vit_forward.1} parent=91 // pred_check_branch
          %782 = sbr.rel (%p780) target = $region104
        $region103: #{vit_forward.1} parent=91 // pred_region
          %783 = dma.done %s777, 16
        $region104: #{vit_forward.1} parent=91 // pred_fallthru
          _
        %s784 = sand.u32 %s47, 1
        %s785 = scalar_lea.sflag [#allocation10], %s784
        %s786 = sand.u32 %s253, 1
        %s787 = smul.addr %s786, 128
        %s788 = scalar_lea.vmem [#allocation9], %s787
        // Predicated region
        $region105: #{vit_forward.1} parent=91 // pred_check
          %p789 = pneg %p266
        $region106: #{vit_forward.1} parent=91 // pred_check_branch
          %791 = sbr.rel (%p789) target = $region108
        $region107: #{vit_forward.1} parent=91 // pred_region
          %792 = dma.done %s785, 2048
        $region108: #{vit_forward.1} parent=91 // pred_fallthru
          _
        %s793 = sand.u32 %s47, 1
        %s794 = scalar_lea.sflag [#allocation10], %s793
        %s795 = sand.u32 %s279, 1
        %s796 = smul.addr %s795, 2
        %s797 = scalar_lea.vmem [#allocation11], %s796
        // Predicated region
        $region109: #{vit_forward.1} parent=91 // pred_check
          %p798 = pneg %p292
        $region110: #{vit_forward.1} parent=91 // pred_check_branch
          %800 = sbr.rel (%p798) target = $region112
        $region111: #{vit_forward.1} parent=91 // pred_region
          %801 = dma.done %s794, 32
        $region112: #{vit_forward.1} parent=91 // pred_fallthru
          _
        %s802 = sand.u32 %s47, 1
        %s803 = scalar_lea.sflag [#allocation13], %s802
        %s804 = sand.u32 %s305, 1
        %s805 = smul.addr %s804, 128
        %s806 = scalar_lea.vmem [#allocation12], %s805
        // Predicated region
        $region113: #{vit_forward.1} parent=91 // pred_check
          %p807 = pneg %p318
        $region114: #{vit_forward.1} parent=91 // pred_check_branch
          %809 = sbr.rel (%p807) target = $region116
        $region115: #{vit_forward.1} parent=91 // pred_region
          %810 = dma.done %s803, 2048
        $region116: #{vit_forward.1} parent=91 // pred_fallthru
          _
        %s811 = sand.u32 %s47, 1
        %s812 = scalar_lea.sflag [#allocation13], %s811
        %s813 = sand.u32 %s331, 1
        %s814 = scalar_lea.vmem [#allocation14], %s813
        // Predicated region
        $region117: #{vit_forward.1} parent=91 // pred_check
          %p815 = pneg %p344
        $region118: #{vit_forward.1} parent=91 // pred_check_branch
          %817 = sbr.rel (%p815) target = $region120
        $region119: #{vit_forward.1} parent=91 // pred_region
          %818 = dma.done %s812, 16
        $region120: #{vit_forward.1} parent=91 // pred_fallthru
          _
        %s819 = sand.u32 %s47, 1
        %s820 = scalar_lea.sflag [#allocation16], %s819
        %s821 = sand.u32 %s357, 1
        %s822 = scalar_lea.vmem [#allocation15], %s821
        // Predicated region
        $region121: #{vit_forward.1} parent=91 // pred_check
          %p823 = pneg %p370
        $region122: #{vit_forward.1} parent=91 // pred_check_branch
          %825 = sbr.rel (%p823) target = $region124
        $region123: #{vit_forward.1} parent=91 // pred_region
          %826 = dma.done %s820, 16
        $region124: #{vit_forward.1} parent=91 // pred_fallthru
          _
        %s827 = sand.u32 %s47, 1
        %s828 = scalar_lea.sflag [#allocation16], %s827
        %s829 = sand.u32 %s383, 1
        %s830 = scalar_lea.vmem [#allocation17], %s829
        // Predicated region
        $region125: #{vit_forward.1} parent=91 // pred_check
          %p831 = pneg %p396
        $region126: #{vit_forward.1} parent=91 // pred_check_branch
          %833 = sbr.rel (%p831) target = $region128
        $region127: #{vit_forward.1} parent=91 // pred_region
          %834 = dma.done %s828, 16
        $region128: #{vit_forward.1} parent=91 // pred_fallthru
          _
        // Predicated region
        $region129: #{vit_forward.1} parent=91 // pred_check
          %p835 = pneg %p438
        $region130: #{vit_forward.1} parent=91 // pred_check_branch
          %837 = sbr.rel (%p835) target = $region132
        $region131: #{vit_forward.1} parent=91 // pred_region
          %838 = dma.done [#allocation19], 16
        $region132: #{vit_forward.1} parent=91 // pred_fallthru
          _
        // Predicated region
        $region133: #{vit_forward.1} parent=91 // pred_check
          %p839 = pneg %p459
        $region134: #{vit_forward.1} parent=91 // pred_check_branch
          %841 = sbr.rel (%p839) target = $region136
        $region135: #{vit_forward.1} parent=91 // pred_region
          %842 = dma.done [#allocation19], 1024
        $region136: #{vit_forward.1} parent=91 // pred_fallthru
          _
        // Predicated region
        $region137: #{vit_forward.1} parent=91 // pred_check
          %p843 = pneg %p480
        $region138: #{vit_forward.1} parent=91 // pred_check_branch
          %845 = sbr.rel (%p843) target = $region140
        $region139: #{vit_forward.1} parent=91 // pred_region
          %846 = dma.done [#allocation22], 16
        $region140: #{vit_forward.1} parent=91 // pred_fallthru
          _
        %p847 = pneg %p63
        %p848 = pneg %p60
        %p849 = pneg %p84
        %p850 = pneg %p81
        %s851 = sand.u32 %s97, 1
        %s852 = scalar_lea.sflag [#allocation4], %s851
        %s853 = sand.u32 %s97, 1
        %s854 = smul.addr %s853, 192
        %s855 = scalar_lea.vmem [#allocation3], %s854
        %p856 = pneg %p110
        %p857 = pneg %p107
        %p858 = scmp.lt.s32.totalorder %s47, 3
        %s859 = scalar_select %p858, %s47, 3
        %s860 = smul.addr %s859, 3
        %s861 = scalar_lea.vmem %s3, %s860
        %p862 = pneg %p136
        %p863 = pneg %p133
        %p864 = scmp.lt.s32.totalorder %s47, 3
        %s865 = scalar_select %p864, %s47, 3
        %s866 = smul.addr %s865, 16
        %s867 = smul.addr %s866, 4
        %s868 = scalar_lea.vmem %s4, %s867
        %p869 = pneg %p162
        %p870 = pneg %p159
        %p871 = scmp.lt.s32.totalorder %s47, 3
        %s872 = scalar_select %p871, %s47, 3
        %s873 = scalar_lea.vmem %s5, %s872
        %p874 = pneg %p188
        %p875 = pneg %p185
        %s876 = sand.u32 %s47, 1
        %s877 = scalar_lea.sflag [#allocation7], %s876
        %s878 = sand.u32 %s201, 1
        %s879 = scalar_lea.vmem [#allocation6], %s878
        %p880 = pneg %p214
        %p881 = pneg %p211
        %s882 = sand.u32 %s47, 1
        %s883 = scalar_lea.sflag [#allocation7], %s882
        %s884 = sand.u32 %s227, 1
        %s885 = scalar_lea.vmem [#allocation8], %s884
        %p886 = pneg %p240
        %p887 = pneg %p237
        %s888 = sand.u32 %s47, 1
        %s889 = scalar_lea.sflag [#allocation10], %s888
        %s890 = sand.u32 %s253, 1
        %s891 = smul.addr %s890, 128
        %s892 = scalar_lea.vmem [#allocation9], %s891
        %p893 = pneg %p266
        %p894 = pneg %p263
        %s895 = sand.u32 %s47, 1
        %s896 = scalar_lea.sflag [#allocation10], %s895
        %s897 = sand.u32 %s279, 1
        %s898 = smul.addr %s897, 2
        %s899 = scalar_lea.vmem [#allocation11], %s898
        %p900 = pneg %p292
        %p901 = pneg %p289
        %s902 = sand.u32 %s47, 1
        %s903 = scalar_lea.sflag [#allocation13], %s902
        %s904 = sand.u32 %s305, 1
        %s905 = smul.addr %s904, 128
        %s906 = scalar_lea.vmem [#allocation12], %s905
        %p907 = pneg %p318
        %p908 = pneg %p315
        %s909 = sand.u32 %s47, 1
        %s910 = scalar_lea.sflag [#allocation13], %s909
        %s911 = sand.u32 %s331, 1
        %s912 = scalar_lea.vmem [#allocation14], %s911
        %p913 = pneg %p344
        %p914 = pneg %p341
        %s915 = sand.u32 %s47, 1
        %s916 = scalar_lea.sflag [#allocation16], %s915
        %s917 = sand.u32 %s357, 1
        %s918 = scalar_lea.vmem [#allocation15], %s917
        %p919 = pneg %p370
        %p920 = pneg %p367
        %s921 = sand.u32 %s47, 1
        %s922 = scalar_lea.sflag [#allocation16], %s921
        %s923 = sand.u32 %s383, 1
        %s924 = scalar_lea.vmem [#allocation17], %s923
        %p925 = pneg %p396
        %p926 = pneg %p393
        %p927 = pneg %p417
        %p928 = pneg %p414
        %p929 = pneg %p438
        %p930 = pneg %p435
        %p931 = pneg %p459
        %p932 = pneg %p456
        %p933 = pneg %p480
        %p934 = pneg %p477
        %p935 = pneg %p501
        %p936 = pneg %p498
        %p937 = scmp.lt.s32.totalorder %s47, 3
        %s938 = scalar_select %p937, %s47, 3
        %s939 = smul.addr %s938, 3
        %s940 = scalar_lea.vmem %s3, %s939
        %p941 = scmp.lt.s32.totalorder %s47, 3
        %s942 = scalar_select %p941, %s47, 3
        %s943 = smul.addr %s942, 16
        %s944 = smul.addr %s943, 4
        %s945 = scalar_lea.vmem %s4, %s944
        %p946 = scmp.lt.s32.totalorder %s47, 3
        %s947 = scalar_select %p946, %s47, 3
        %s948 = scalar_lea.vmem %s5, %s947
        %p950 = scmp.eq.s32.totalorder %s47, 0
        // Predicated region
        $region141: #{vit_forward.1} parent=91 // pred_check
          %p951 = pneg %p950
        $region142: #{vit_forward.1} parent=91 // pred_check_branch
          %953 = sbr.rel (%p951) target = $region144
        $region143: #{vit_forward.1} parent=91 // pred_region
          %v954 = vld [vmem:[%s1] sm:$0xff]
          %v955 = vld [vmem:[%s1 + $0x8] sm:$0xff]
          %956 = vst [vmem:[#allocation2] sm:$0xff] %v954
          %957 = vst [vmem:[#allocation2 + $0x8] sm:$0xff] %v955
        $region144: #{vit_forward.1} parent=91 // pred_fallthru
          _
        %v958 = vld [vmem:[#allocation2] sm:$0xff]
        %v959 = vld [vmem:[#allocation2 + $0x8] sm:$0xff]
        %v960 = vld [vmem:[%s0] sm:$0xff]
        %v961 = vld [vmem:[%s0 + $0x8] sm:$0xff]
        %v962 = vpack.c.bf16 %v959, %v958
        %v963 = vld [vmem:[%s763] sm:$0xff]
        %v964 = vld [vmem:[%s763 + $0x8] sm:$0xf]
        %v965 = vld [vmem:[%s763 + $0xc] sm:$0xff]
        %v966 = vld [vmem:[%s763 + $0x14] sm:$0xf]
        %v967 = vld [vmem:[%s763 + $0x18] sm:$0xff]
        %v968 = vld [vmem:[%s763 + $0x20] sm:$0xf]
        %v969 = vld [vmem:[%s763 + $0x24] sm:$0xff]
        %v970 = vld [vmem:[%s763 + $0x2c] sm:$0xf]
        %v971 = vld [vmem:[%s763 + $0x30] sm:$0xff]
        %v972 = vld [vmem:[%s763 + $0x38] sm:$0xf]
        %v973 = vld [vmem:[%s763 + $0x3c] sm:$0xff]
        %v974 = vld [vmem:[%s763 + $0x44] sm:$0xf]
        %v975 = vld [vmem:[%s763 + $0x48] sm:$0xff]
        %v976 = vld [vmem:[%s763 + $0x50] sm:$0xf]
        %v977 = vld [vmem:[%s763 + $0x54] sm:$0xff]
        %v978 = vld [vmem:[%s763 + $0x5c] sm:$0xf]
        %v979 = vld [vmem:[%s763 + $0x60] sm:$0xff]
        %v980 = vld [vmem:[%s763 + $0x68] sm:$0xf]
        %v981 = vld [vmem:[%s763 + $0x6c] sm:$0xff]
        %v982 = vld [vmem:[%s763 + $0x74] sm:$0xf]
        %v983 = vld [vmem:[%s763 + $0x78] sm:$0xff]
        %v984 = vld [vmem:[%s763 + $0x80] sm:$0xf]
        %v985 = vld [vmem:[%s763 + $0x84] sm:$0xff]
        %v986 = vld [vmem:[%s763 + $0x8c] sm:$0xf]
        %v987 = vld [vmem:[%s763 + $0x90] sm:$0xff]
        %v988 = vld [vmem:[%s763 + $0x98] sm:$0xf]
        %v989 = vld [vmem:[%s763 + $0x9c] sm:$0xff]
        %v990 = vld [vmem:[%s763 + $0xa4] sm:$0xf]
        %v991 = vld [vmem:[%s763 + $0xa8] sm:$0xff]
        %v992 = vld [vmem:[%s763 + $0xb0] sm:$0xf]
        %v993 = vld [vmem:[%s763 + $0xb4] sm:$0xff]
        %v994 = vld [vmem:[%s763 + $0xbc] sm:$0xf]
        %v995 = vld [vmem:[%s940] sm:$0x7]
        %v997 = vlaneseq
        %v998 = vshrl.u32 %v997, 7
        %v999 = vsub.s32 0, %v998
        %v1000 = vrot.slane %v995, %v999
        %v1001 = vlaneseq
        %v1002 = vshrl.u32 %v1001, 7
        %v1003 = vsub.s32 1, %v1002
        %v1004 = vrot.slane %v995, %v1003
        %v1005 = vlaneseq
        %v1006 = vshrl.u32 %v1005, 7
        %v1007 = vsub.s32 2, %v1006
        %v1008 = vrot.slane %v995, %v1007
        %v1044 = vunpack.c.l.b16 %v963
        %v1045 = vunpack.c.h.b16 %v963
        %v1046 = vunpack.c.l.b16 %v964
        %v1047 = vunpack.c.l.b16 %v965
        %v1048 = vunpack.c.h.b16 %v965
        %v1049 = vunpack.c.l.b16 %v966
        %v1050 = vunpack.c.l.b16 %v967
        %v1051 = vunpack.c.h.b16 %v967
        %v1052 = vunpack.c.l.b16 %v968
        %v1053 = vunpack.c.l.b16 %v969
        %v1054 = vunpack.c.h.b16 %v969
        %v1055 = vunpack.c.l.b16 %v970
        %v1056 = vunpack.c.l.b16 %v971
        %v1057 = vunpack.c.h.b16 %v971
        %v1058 = vunpack.c.l.b16 %v972
        %v1059 = vunpack.c.l.b16 %v973
        %v1060 = vunpack.c.h.b16 %v973
        %v1061 = vunpack.c.l.b16 %v974
        %v1062 = vunpack.c.l.b16 %v975
        %v1063 = vunpack.c.h.b16 %v975
        %v1064 = vunpack.c.l.b16 %v976
        %v1065 = vunpack.c.l.b16 %v977
        %v1066 = vunpack.c.h.b16 %v977
        %v1067 = vunpack.c.l.b16 %v978
        %v1068 = vunpack.c.l.b16 %v979
        %v1069 = vunpack.c.h.b16 %v979
        %v1070 = vunpack.c.l.b16 %v980
        %v1071 = vunpack.c.l.b16 %v981
        %v1072 = vunpack.c.h.b16 %v981
        %v1073 = vunpack.c.l.b16 %v982
        %v1074 = vunpack.c.l.b16 %v983
        %v1075 = vunpack.c.h.b16 %v983
        %v1076 = vunpack.c.l.b16 %v984
        %v1077 = vunpack.c.l.b16 %v985
        %v1078 = vunpack.c.h.b16 %v985
        %v1079 = vunpack.c.l.b16 %v986
        %v1080 = vunpack.c.l.b16 %v987
        %v1081 = vunpack.c.h.b16 %v987
        %v1082 = vunpack.c.l.b16 %v988
        %v1083 = vunpack.c.l.b16 %v989
        %v1084 = vunpack.c.h.b16 %v989
        %v1085 = vunpack.c.l.b16 %v990
        %v1086 = vunpack.c.l.b16 %v991
        %v1087 = vunpack.c.h.b16 %v991
        %v1088 = vunpack.c.l.b16 %v992
        %v1089 = vunpack.c.l.b16 %v993
        %v1090 = vunpack.c.h.b16 %v993
        %v1091 = vunpack.c.l.b16 %v994
        %v1092 = vpack.c.b16 %v1047, %v1044
        %v1093 = vpack.c.b16 %v1048, %v1045
        %v1094 = vpack.c.b16 %v1049, %v1046
        %v1095 = vpack.c.b16 %v1053, %v1050
        %v1096 = vpack.c.b16 %v1054, %v1051
        %v1097 = vpack.c.b16 %v1055, %v1052
        %v1098 = vpack.c.b16 %v1059, %v1056
        %v1099 = vpack.c.b16 %v1060, %v1057
        %v1100 = vpack.c.b16 %v1061, %v1058
        %v1101 = vpack.c.b16 %v1065, %v1062
        %v1102 = vpack.c.b16 %v1066, %v1063
        %v1103 = vpack.c.b16 %v1067, %v1064
        %v1104 = vpack.c.b16 %v1071, %v1068
        %v1105 = vpack.c.b16 %v1072, %v1069
        %v1106 = vpack.c.b16 %v1073, %v1070
        %v1107 = vpack.c.b16 %v1077, %v1074
        %v1108 = vpack.c.b16 %v1078, %v1075
        %v1109 = vpack.c.b16 %v1079, %v1076
        %v1110 = vpack.c.b16 %v1083, %v1080
        %v1111 = vpack.c.b16 %v1084, %v1081
        %v1112 = vpack.c.b16 %v1085, %v1082
        %v1113 = vpack.c.b16 %v1089, %v1086
        %v1114 = vpack.c.b16 %v1090, %v1087
        %v1115 = vpack.c.b16 %v1091, %v1088
        %1140 = vmatprep.subr.bf16.mxu0 %v1093
        %1141 = vmatpush1.bf16.msra.mxu0 %v1092
        %1142 = vmatprep.subr.bf16.mxu0 %v1096
        %1143 = vmatpush1.bf16.msra.mxu0 %v1095
        %1144 = vmatprep.subr.bf16.mxu0 %v1099
        %1145 = vmatpush1.bf16.msra.mxu0 %v1098
        %1146 = vmatprep.subr.bf16.mxu0 %v1102
        %1147 = vmatpush1.bf16.msra.mxu0 %v1101
        %1148 = vmatprep.subr.bf16.mxu0 %v1105
        %1149 = vmatpush1.bf16.msra.mxu0 %v1104
        %1150 = vmatprep.subr.bf16.mxu0 %v1108
        %1151 = vmatpush1.bf16.msra.mxu0 %v1107
        %1152 = vmatprep.subr.bf16.mxu0 %v1111
        %1153 = vmatpush1.bf16.msra.mxu0 %v1110
        %1154 = vmatprep.subr.bf16.mxu0 %v1114
        %1155 = vmatpush1.bf16.msra.mxu0 %v1113
        %1156 = vmatprep.subr.bf16.mxu0 0
        %1157 = vmatpush1.bf16.msra.mxu0 0
        %1158 = vmatprep.subr.bf16.mxu0 0
        %1159 = vmatpush1.bf16.msra.mxu0 0
        %1160 = vmatprep.subr.bf16.mxu0 0
        %1161 = vmatpush1.bf16.msra.mxu0 0
        %1162 = vmatprep.subr.bf16.mxu0 0
        %1163 = vmatpush1.bf16.msra.mxu0 0
        %1164 = vmatprep.subr.bf16.mxu0 0
        %1165 = vmatpush1.bf16.msra.mxu0 0
        %1166 = vmatprep.subr.bf16.mxu0 0
        %1167 = vmatpush1.bf16.msra.mxu0 0
        %1168 = vmatprep.subr.bf16.mxu0 0
        %1169 = vmatpush1.bf16.msra.mxu0 0
        %1170 = vmatprep.subr.bf16.mxu0 0
        %1171 = vmatpush1.bf16.msra.mxu0 0
        %1172 = vmatprep.mubr.bf16.mxu0 0
        %1173 = vmatmul.mubr.bf16.gmra.mrb[0].mxu0 %v962
        %v1174 = vpop.f32.mrb[0].mxu0
        %v1175 = vadd.f32 %v1000, %v1174
        %v1176 = vpop.f32.mrb[0].mxu0
        %v1177 = vadd.f32 %v1004, %v1176
        %v1178 = vpop.f32.mrb[0].mxu0
        %v1179 = vadd.f32 %v1000, %v1178
        %v1180 = vpop.f32.mrb[0].mxu0
        %v1181 = vadd.f32 %v1004, %v1180
        %1182 = vdwg.mxu0
        %1183 = vmatprep.subr.bf16.mxu0 0
        %1184 = vmatpush1.bf16.msra.mxu0 %v1094
        %1185 = vmatprep.subr.bf16.mxu0 0
        %1186 = vmatpush1.bf16.msra.mxu0 %v1097
        %1187 = vmatprep.subr.bf16.mxu0 0
        %1188 = vmatpush1.bf16.msra.mxu0 %v1100
        %1189 = vmatprep.subr.bf16.mxu0 0
        %1190 = vmatpush1.bf16.msra.mxu0 %v1103
        %1191 = vmatprep.subr.bf16.mxu0 0
        %1192 = vmatpush1.bf16.msra.mxu0 %v1106
        %1193 = vmatprep.subr.bf16.mxu0 0
        %1194 = vmatpush1.bf16.msra.mxu0 %v1109
        %1195 = vmatprep.subr.bf16.mxu0 0
        %1196 = vmatpush1.bf16.msra.mxu0 %v1112
        %1197 = vmatprep.subr.bf16.mxu0 0
        %1198 = vmatpush1.bf16.msra.mxu0 %v1115
        %1199 = vmatprep.subr.bf16.mxu0 0
        %1200 = vmatpush1.bf16.msra.mxu0 0
        %1201 = vmatprep.subr.bf16.mxu0 0
        %1202 = vmatpush1.bf16.msra.mxu0 0
        %1203 = vmatprep.subr.bf16.mxu0 0
        %1204 = vmatpush1.bf16.msra.mxu0 0
        %1205 = vmatprep.subr.bf16.mxu0 0
        %1206 = vmatpush1.bf16.msra.mxu0 0
        %1207 = vmatprep.subr.bf16.mxu0 0
        %1208 = vmatpush1.bf16.msra.mxu0 0
        %1209 = vmatprep.subr.bf16.mxu0 0
        %1210 = vmatpush1.bf16.msra.mxu0 0
        %1211 = vmatprep.subr.bf16.mxu0 0
        %1212 = vmatpush1.bf16.msra.mxu0 0
        %1213 = vmatprep.subr.bf16.mxu0 0
        %1214 = vmatpush1.bf16.msra.mxu0 0
        %1215 = vmatprep.mubr.bf16.mxu0 0
        %1216 = vmatmul.mubr.bf16.gmra.mrb[0].mxu0 %v962
        %v1217 = vpop.f32.mrb[0].mxu0
        %v1218 = vadd.f32 %v1008, %v1217
        %v1219 = vpop.f32.mrb[0].mxu0
        %v1220 = vpop.f32.mrb[0].mxu0
        %v1221 = vadd.f32 %v1008, %v1220
        %v1222 = vpop.f32.mrb[0].mxu0
        %1223 = vdwg.mxu0
        %v1224 = vpack.c.bf16 %v1179, %v1175
        %v1225 = vpack.c.bf16 %v1221, %v1218
        %1226 = vxpose.xlu0.b32.start [1/16] %v1177, 128
        %1227 = vxpose.xlu0.b32.cont [2/16] %v1181, 128
        %1228 = vxpose.xlu0.b32.cont [3/16] 0.0, 128
        %1229 = vxpose.xlu0.b32.cont [4/16] 0.0, 128
        %1230 = vxpose.xlu0.b32.cont [5/16] 0.0, 128
        %1231 = vxpose.xlu0.b32.cont [6/16] 0.0, 128
        %1232 = vxpose.xlu0.b32.cont [7/16] 0.0, 128
        %1233 = vxpose.xlu0.b32.cont [8/16] 0.0, 128
        %1234 = vxpose.xlu0.b32.cont [9/16] 0.0, 128
        %1235 = vxpose.xlu0.b32.cont [10/16] 0.0, 128
        %1236 = vxpose.xlu0.b32.cont [11/16] 0.0, 128
        %1237 = vxpose.xlu0.b32.cont [12/16] 0.0, 128
        %1238 = vxpose.xlu0.b32.cont [13/16] 0.0, 128
        %1239 = vxpose.xlu0.b32.cont [14/16] 0.0, 128
        %1240 = vxpose.xlu0.b32.cont [15/16] 0.0, 128
        %1241 = vxpose.xlu0.b32.end [16/16] 0.0, 128
        %v1242 = vpop.trf.xlu0
        %v1243 = vpop.trf.xlu0
        %v1244 = vpop.trf.xlu0
        %v1245 = vpop.trf.xlu0
        %v1246 = vpop.trf.xlu0
        %v1247 = vpop.trf.xlu0
        %v1248 = vpop.trf.xlu0
        %v1249 = vpop.trf.xlu0
        %v1250 = vpop.trf.xlu0
        %v1251 = vpop.trf.xlu0
        %v1252 = vpop.trf.xlu0
        %v1253 = vpop.trf.xlu0
        %v1254 = vpop.trf.xlu0
        %v1255 = vpop.trf.xlu0
        %v1256 = vpop.trf.xlu0
        %v1257 = vpop.trf.xlu0
        %v1258 = vpack.c.bf16 %v1243, %v1242
        %v1259 = vpack.c.bf16 %v1245, %v1244
        %v1260 = vpack.c.bf16 %v1247, %v1246
        %v1261 = vpack.c.bf16 %v1249, %v1248
        %v1262 = vpack.c.bf16 %v1251, %v1250
        %v1263 = vpack.c.bf16 %v1253, %v1252
        %v1264 = vpack.c.bf16 %v1255, %v1254
        %v1265 = vpack.c.bf16 %v1257, %v1256
        %vm1266 = vcmask 261120
        %v1268 = vsel %vm1266, %v1224, 0
        %1270 = vmatprep.subr.bf16.mxu0 0
        %1271 = vmatpush1.bf16.msra.mxu0 %v1258
        %1272 = vmatprep.subr.bf16.mxu0 0
        %1273 = vmatpush1.bf16.msra.mxu0 %v1259
        %1274 = vmatprep.subr.bf16.mxu0 0
        %1275 = vmatpush1.bf16.msra.mxu0 0
        %1276 = vmatprep.subr.bf16.mxu0 0
        %1277 = vmatpush1.bf16.msra.mxu0 0
        %1278 = vmatprep.subr.bf16.mxu0 0
        %1279 = vmatpush1.bf16.msra.mxu0 0
        %1280 = vmatprep.subr.bf16.mxu0 0
        %1281 = vmatpush1.bf16.msra.mxu0 0
        %1282 = vmatprep.subr.bf16.mxu0 0
        %1283 = vmatpush1.bf16.msra.mxu0 0
        %1284 = vmatprep.subr.bf16.mxu0 0
        %1285 = vmatpush1.bf16.msra.mxu0 0
        %1286 = vmatprep.subr.bf16.mxu0 0
        %1287 = vmatpush1.bf16.msra.mxu0 0
        %1288 = vmatprep.subr.bf16.mxu0 0
        %1289 = vmatpush1.bf16.msra.mxu0 0
        %1290 = vmatprep.subr.bf16.mxu0 0
        %1291 = vmatpush1.bf16.msra.mxu0 0
        %1292 = vmatprep.subr.bf16.mxu0 0
        %1293 = vmatpush1.bf16.msra.mxu0 0
        %1294 = vmatprep.subr.bf16.mxu0 0
        %1295 = vmatpush1.bf16.msra.mxu0 0
        %1296 = vmatprep.subr.bf16.mxu0 0
        %1297 = vmatpush1.bf16.msra.mxu0 0
        %1298 = vmatprep.subr.bf16.mxu0 0
        %1299 = vmatpush1.bf16.msra.mxu0 0
        %1300 = vmatprep.subr.bf16.mxu0 0
        %1301 = vmatpush1.bf16.msra.mxu0 0
        %1302 = vmatprep.mubr.bf16.mxu0 0
        %1303 = vmatmul.mubr.bf16.gmra.mrb[0].mxu0 %v1268
        %v1304 = vpop.f32.mrb[0].mxu0
        %v1305 = vadd.f32 0.0, %v1304
        %v1306 = vpop.f32.mrb[0].mxu0
        %v1307 = vpop.f32.mrb[0].mxu0
        %v1308 = vadd.f32 0.0, %v1307
        %v1309 = vpop.f32.mrb[0].mxu0
        %1310 = vdwg.mxu0
        %1312 = vrot.lane.b32.xlu0 %v1224, 96
        %v1313 = vpop.permute.xlu0 %1312
        %v1315 = vsel %vm1266, %v1313, 0
        %1317 = vmatprep.subr.bf16.mxu0 0
        %1318 = vmatpush1.bf16.msra.mxu0 %v1260
        %1319 = vmatprep.subr.bf16.mxu0 0
        %1320 = vmatpush1.bf16.msra.mxu0 %v1261
        %1321 = vmatprep.subr.bf16.mxu0 0
        %1322 = vmatpush1.bf16.msra.mxu0 0
        %1323 = vmatprep.subr.bf16.mxu0 0
        %1324 = vmatpush1.bf16.msra.mxu0 0
        %1325 = vmatprep.subr.bf16.mxu0 0
        %1326 = vmatpush1.bf16.msra.mxu0 0
        %1327 = vmatprep.subr.bf16.mxu0 0
        %1328 = vmatpush1.bf16.msra.mxu0 0
        %1329 = vmatprep.subr.bf16.mxu0 0
        %1330 = vmatpush1.bf16.msra.mxu0 0
        %1331 = vmatprep.subr.bf16.mxu0 0
        %1332 = vmatpush1.bf16.msra.mxu0 0
        %1333 = vmatprep.subr.bf16.mxu0 0
        %1334 = vmatpush1.bf16.msra.mxu0 0
        %1335 = vmatprep.subr.bf16.mxu0 0
        %1336 = vmatpush1.bf16.msra.mxu0 0
        %1337 = vmatprep.subr.bf16.mxu0 0
        %1338 = vmatpush1.bf16.msra.mxu0 0
        %1339 = vmatprep.subr.bf16.mxu0 0
        %1340 = vmatpush1.bf16.msra.mxu0 0
        %1341 = vmatprep.subr.bf16.mxu0 0
        %1342 = vmatpush1.bf16.msra.mxu0 0
        %1343 = vmatprep.subr.bf16.mxu0 0
        %1344 = vmatpush1.bf16.msra.mxu0 0
        %1345 = vmatprep.subr.bf16.mxu0 0
        %1346 = vmatpush1.bf16.msra.mxu0 0
        %1347 = vmatprep.subr.bf16.mxu0 0
        %1348 = vmatpush1.bf16.msra.mxu0 0
        %1349 = vmatprep.mubr.bf16.mxu0 0
        %1350 = vmatmul.mubr.bf16.gmra.mrb[0].mxu0 %v1315
        %v1351 = vpop.f32.mrb[0].mxu0
        %v1352 = vadd.f32 0.0, %v1351
        %v1353 = vpop.f32.mrb[0].mxu0
        %v1354 = vpop.f32.mrb[0].mxu0
        %v1355 = vadd.f32 0.0, %v1354
        %v1356 = vpop.f32.mrb[0].mxu0
        %1357 = vdwg.mxu0
        %1358 = vrot.lane.b32.xlu0 %v1224, 64
        %v1359 = vpop.permute.xlu0 %1358
        %v1361 = vsel %vm1266, %v1359, 0
        %1363 = vmatprep.subr.bf16.mxu0 0
        %1364 = vmatpush1.bf16.msra.mxu0 %v1262
        %1365 = vmatprep.subr.bf16.mxu0 0
        %1366 = vmatpush1.bf16.msra.mxu0 %v1263
        %1367 = vmatprep.subr.bf16.mxu0 0
        %1368 = vmatpush1.bf16.msra.mxu0 0
        %1369 = vmatprep.subr.bf16.mxu0 0
        %1370 = vmatpush1.bf16.msra.mxu0 0
        %1371 = vmatprep.subr.bf16.mxu0 0
        %1372 = vmatpush1.bf16.msra.mxu0 0
        %1373 = vmatprep.subr.bf16.mxu0 0
        %1374 = vmatpush1.bf16.msra.mxu0 0
        %1375 = vmatprep.subr.bf16.mxu0 0
        %1376 = vmatpush1.bf16.msra.mxu0 0
        %1377 = vmatprep.subr.bf16.mxu0 0
        %1378 = vmatpush1.bf16.msra.mxu0 0
        %1379 = vmatprep.subr.bf16.mxu0 0
        %1380 = vmatpush1.bf16.msra.mxu0 0
        %1381 = vmatprep.subr.bf16.mxu0 0
        %1382 = vmatpush1.bf16.msra.mxu0 0
        %1383 = vmatprep.subr.bf16.mxu0 0
        %1384 = vmatpush1.bf16.msra.mxu0 0
        %1385 = vmatprep.subr.bf16.mxu0 0
        %1386 = vmatpush1.bf16.msra.mxu0 0
        %1387 = vmatprep.subr.bf16.mxu0 0
        %1388 = vmatpush1.bf16.msra.mxu0 0
        %1389 = vmatprep.subr.bf16.mxu0 0
        %1390 = vmatpush1.bf16.msra.mxu0 0
        %1391 = vmatprep.subr.bf16.mxu0 0
        %1392 = vmatpush1.bf16.msra.mxu0 0
        %1393 = vmatprep.subr.bf16.mxu0 0
        %1394 = vmatpush1.bf16.msra.mxu0 0
        %1395 = vmatprep.mubr.bf16.mxu0 0
        %1396 = vmatmul.mubr.bf16.gmra.mrb[0].mxu0 %v1361
        %v1397 = vpop.f32.mrb[0].mxu0
        %v1398 = vadd.f32 0.0, %v1397
        %v1399 = vpop.f32.mrb[0].mxu0
        %v1400 = vpop.f32.mrb[0].mxu0
        %v1401 = vadd.f32 0.0, %v1400
        %v1402 = vpop.f32.mrb[0].mxu0
        %1403 = vdwg.mxu0
        %1404 = vrot.lane.b32.xlu0 %v1224, 32
        %v1405 = vpop.permute.xlu0 %1404
        %v1407 = vsel %vm1266, %v1405, 0
        %1409 = vmatprep.subr.bf16.mxu0 0
        %1410 = vmatpush1.bf16.msra.mxu0 %v1264
        %1411 = vmatprep.subr.bf16.mxu0 0
        %1412 = vmatpush1.bf16.msra.mxu0 %v1265
        %1413 = vmatprep.subr.bf16.mxu0 0
        %1414 = vmatpush1.bf16.msra.mxu0 0
        %1415 = vmatprep.subr.bf16.mxu0 0
        %1416 = vmatpush1.bf16.msra.mxu0 0
        %1417 = vmatprep.subr.bf16.mxu0 0
        %1418 = vmatpush1.bf16.msra.mxu0 0
        %1419 = vmatprep.subr.bf16.mxu0 0
        %1420 = vmatpush1.bf16.msra.mxu0 0
        %1421 = vmatprep.subr.bf16.mxu0 0
        %1422 = vmatpush1.bf16.msra.mxu0 0
        %1423 = vmatprep.subr.bf16.mxu0 0
        %1424 = vmatpush1.bf16.msra.mxu0 0
        %1425 = vmatprep.subr.bf16.mxu0 0
        %1426 = vmatpush1.bf16.msra.mxu0 0
        %1427 = vmatprep.subr.bf16.mxu0 0
        %1428 = vmatpush1.bf16.msra.mxu0 0
        %1429 = vmatprep.subr.bf16.mxu0 0
        %1430 = vmatpush1.bf16.msra.mxu0 0
        %1431 = vmatprep.subr.bf16.mxu0 0
        %1432 = vmatpush1.bf16.msra.mxu0 0
        %1433 = vmatprep.subr.bf16.mxu0 0
        %1434 = vmatpush1.bf16.msra.mxu0 0
        %1435 = vmatprep.subr.bf16.mxu0 0
        %1436 = vmatpush1.bf16.msra.mxu0 0
        %1437 = vmatprep.subr.bf16.mxu0 0
        %1438 = vmatpush1.bf16.msra.mxu0 0
        %1439 = vmatprep.subr.bf16.mxu0 0
        %1440 = vmatpush1.bf16.msra.mxu0 0
        %1441 = vmatprep.mubr.bf16.mxu0 0
        %1442 = vmatmul.mubr.bf16.gmra.mrb[0].mxu0 %v1407
        %v1443 = vpop.f32.mrb[0].mxu0
        %v1444 = vadd.f32 0.0, %v1443
        %v1445 = vpop.f32.mrb[0].mxu0
        %v1446 = vpop.f32.mrb[0].mxu0
        %v1447 = vadd.f32 0.0, %v1446
        %v1448 = vpop.f32.mrb[0].mxu0
        %1449 = vdwg.mxu0
        %v1450 = vadd.f32 %v1305, %v960
        %v1451 = vadd.f32 %v1308, %v961
        %v1452 = vadd.f32 %v1352, %v960
        %v1453 = vadd.f32 %v1355, %v961
        %v1454 = vadd.f32 %v1398, %v960
        %v1455 = vadd.f32 %v1401, %v961
        %v1456 = vadd.f32 %v1444, %v960
        %v1457 = vadd.f32 %v1447, %v961
        %vm1458 = vcmask 130048
        %v1459 = vsel %vm1458, %v1450, -inf
        %1460 = vmax.xlane.f32.xlu0 %v1459
        %v1461 = vpop.xlane.xlu0 %1460
        %v1462 = vsel %vm1458, %v1451, -inf
        %1463 = vmax.xlane.f32.xlu0 %v1462
        %v1464 = vpop.xlane.xlu0 %1463
        %v1465 = vsel %vm1458, %v1452, -inf
        %1466 = vmax.xlane.f32.xlu0 %v1465
        %v1467 = vpop.xlane.xlu0 %1466
        %v1468 = vsel %vm1458, %v1453, -inf
        %1469 = vmax.xlane.f32.xlu0 %v1468
        %v1470 = vpop.xlane.xlu0 %1469
        %v1471 = vsel %vm1458, %v1454, -inf
        %1472 = vmax.xlane.f32.xlu0 %v1471
        %v1473 = vpop.xlane.xlu0 %1472
        %v1474 = vsel %vm1458, %v1455, -inf
        %1475 = vmax.xlane.f32.xlu0 %v1474
        %v1476 = vpop.xlane.xlu0 %1475
        %v1477 = vsel %vm1458, %v1456, -inf
        %1478 = vmax.xlane.f32.xlu0 %v1477
        %v1479 = vpop.xlane.xlu0 %1478
        %v1480 = vsel %vm1458, %v1457, -inf
        %1481 = vmax.xlane.f32.xlu0 %v1480
        %v1482 = vpop.xlane.xlu0 %1481
        %v1483 = vsub.f32 %v1450, %v1461
        %v1484 = vsub.f32 %v1451, %v1464
        %v1485 = vsub.f32 %v1452, %v1467
        %v1486 = vsub.f32 %v1453, %v1470
        %v1487 = vsub.f32 %v1454, %v1473
        %v1488 = vsub.f32 %v1455, %v1476
        %v1489 = vsub.f32 %v1456, %v1479
        %v1490 = vsub.f32 %v1457, %v1482
        %v1491 = vmul.f32 %v1483, 1.442695
        %v1492 = vpow.pop %v1491
        %v1493 = vmul.f32 %v1484, 1.442695
        %v1494 = vpow.pop %v1493
        %v1495 = vmul.f32 %v1485, 1.442695
        %v1496 = vpow.pop %v1495
        %v1497 = vmul.f32 %v1486, 1.442695
        %v1498 = vpow.pop %v1497
        %v1499 = vmul.f32 %v1487, 1.442695
        %v1500 = vpow.pop %v1499
        %v1501 = vmul.f32 %v1488, 1.442695
        %v1502 = vpow.pop %v1501
        %v1503 = vmul.f32 %v1489, 1.442695
        %v1504 = vpow.pop %v1503
        %v1505 = vmul.f32 %v1490, 1.442695
        %v1506 = vpow.pop %v1505
        %v1507 = vsel %vm1458, %v1492, 0.0
        %1508 = vadd.xlane.f32.xlu0 %v1507
        %v1509 = vpop.xlane.xlu0 %1508
        %v1510 = vsel %vm1458, %v1494, 0.0
        %1511 = vadd.xlane.f32.xlu0 %v1510
        %v1512 = vpop.xlane.xlu0 %1511
        %v1513 = vsel %vm1458, %v1496, 0.0
        %1514 = vadd.xlane.f32.xlu0 %v1513
        %v1515 = vpop.xlane.xlu0 %1514
        %v1516 = vsel %vm1458, %v1498, 0.0
        %1517 = vadd.xlane.f32.xlu0 %v1516
        %v1518 = vpop.xlane.xlu0 %1517
        %v1519 = vsel %vm1458, %v1500, 0.0
        %1520 = vadd.xlane.f32.xlu0 %v1519
        %v1521 = vpop.xlane.xlu0 %1520
        %v1522 = vsel %vm1458, %v1502, 0.0
        %1523 = vadd.xlane.f32.xlu0 %v1522
        %v1524 = vpop.xlane.xlu0 %1523
        %v1525 = vsel %vm1458, %v1504, 0.0
        %1526 = vadd.xlane.f32.xlu0 %v1525
        %v1527 = vpop.xlane.xlu0 %1526
        %v1528 = vsel %vm1458, %v1506, 0.0
        %1529 = vadd.xlane.f32.xlu0 %v1528
        %v1530 = vpop.xlane.xlu0 %1529
        %v1531 = vrcp.pop %v1509
        %v1532 = vrcp.pop %v1512
        %v1533 = vrcp.pop %v1515
        %v1534 = vrcp.pop %v1518
        %v1535 = vrcp.pop %v1521
        %v1536 = vrcp.pop %v1524
        %v1537 = vrcp.pop %v1527
        %v1538 = vrcp.pop %v1530
        %v1539 = vmul.f32 %v1492, %v1531
        %v1540 = vmul.f32 %v1494, %v1532
        %v1541 = vmul.f32 %v1496, %v1533
        %v1542 = vmul.f32 %v1498, %v1534
        %v1543 = vmul.f32 %v1500, %v1535
        %v1544 = vmul.f32 %v1502, %v1536
        %v1545 = vmul.f32 %v1504, %v1537
        %v1546 = vmul.f32 %v1506, %v1538
        %v1547 = vpack.c.bf16 %v1540, %v1539
        %v1548 = vpack.c.bf16 %v1542, %v1541
        %v1549 = vpack.c.bf16 %v1544, %v1543
        %v1550 = vpack.c.bf16 %v1546, %v1545
        %v1552 = vsel %vm1458, %v1547, 0
        %1554 = vmatprep.subr.bf16.mxu0 0
        %1555 = vmatpush1.bf16.msra.mxu0 %v1225
        %1556 = vmatprep.subr.bf16.mxu0 0
        %1557 = vmatpush1.bf16.msra.mxu0 0
        %1558 = vmatprep.subr.bf16.mxu0 0
        %1559 = vmatpush1.bf16.msra.mxu0 0
        %1560 = vmatprep.subr.bf16.mxu0 0
        %1561 = vmatpush1.bf16.msra.mxu0 0
        %1562 = vmatprep.subr.bf16.mxu0 0
        %1563 = vmatpush1.bf16.msra.mxu0 0
        %1564 = vmatprep.subr.bf16.mxu0 0
        %1565 = vmatpush1.bf16.msra.mxu0 0
        %1566 = vmatprep.subr.bf16.mxu0 0
        %1567 = vmatpush1.bf16.msra.mxu0 0
        %1568 = vmatprep.subr.bf16.mxu0 0
        %1569 = vmatpush1.bf16.msra.mxu0 0
        %1570 = vmatprep.subr.bf16.mxu0 0
        %1571 = vmatpush1.bf16.msra.mxu0 0
        %1572 = vmatprep.subr.bf16.mxu0 0
        %1573 = vmatpush1.bf16.msra.mxu0 0
        %1574 = vmatprep.subr.bf16.mxu0 0
        %1575 = vmatpush1.bf16.msra.mxu0 0
        %1576 = vmatprep.subr.bf16.mxu0 0
        %1577 = vmatpush1.bf16.msra.mxu0 0
        %1578 = vmatprep.subr.bf16.mxu0 0
        %1579 = vmatpush1.bf16.msra.mxu0 0
        %1580 = vmatprep.subr.bf16.mxu0 0
        %1581 = vmatpush1.bf16.msra.mxu0 0
        %1582 = vmatprep.subr.bf16.mxu0 0
        %1583 = vmatpush1.bf16.msra.mxu0 0
        %1584 = vmatprep.subr.bf16.mxu0 0
        %1585 = vmatpush1.bf16.msra.mxu0 0
        %1586 = vmatprep.mubr.bf16.mxu0 0
        %1587 = vmatmul.mubr.bf16.gmra.mrb[0].mxu0 %v1552
        %v1588 = vpop.f32.mrb[0].mxu0
        %v1589 = vadd.f32 0.0, %v1588
        %v1590 = vpop.f32.mrb[0].mxu0
        %v1591 = vpop.f32.mrb[0].mxu0
        %v1592 = vadd.f32 0.0, %v1591
        %v1593 = vpop.f32.mrb[0].mxu0
        %1594 = vdwg.mxu0
        %v1595 = vpack.c.bf16 %v1592, %v1589
        %v1596 = vld [vmem:[%s945] sm:$0xf]
        %v1597 = vld [vmem:[%s945 + $0x4] sm:$0xf]
        %v1598 = vld [vmem:[%s945 + $0x8] sm:$0xf]
        %v1599 = vld [vmem:[%s945 + $0xc] sm:$0xf]
        %1601 = vrot.lane.b32.xlu0 %v1225, 96
        %v1602 = vpop.permute.xlu0 %1601
        %v1605 = vsel %vm1458, %v1548, 0
        %1607 = vmatprep.subr.bf16.mxu0 0
        %1608 = vmatpush1.bf16.msra.mxu0 %v1602
        %1609 = vmatprep.subr.bf16.mxu0 0
        %1610 = vmatpush1.bf16.msra.mxu0 0
        %1611 = vmatprep.subr.bf16.mxu0 0
        %1612 = vmatpush1.bf16.msra.mxu0 0
        %1613 = vmatprep.subr.bf16.mxu0 0
        %1614 = vmatpush1.bf16.msra.mxu0 0
        %1615 = vmatprep.subr.bf16.mxu0 0
        %1616 = vmatpush1.bf16.msra.mxu0 0
        %1617 = vmatprep.subr.bf16.mxu0 0
        %1618 = vmatpush1.bf16.msra.mxu0 0
        %1619 = vmatprep.subr.bf16.mxu0 0
        %1620 = vmatpush1.bf16.msra.mxu0 0
        %1621 = vmatprep.subr.bf16.mxu0 0
        %1622 = vmatpush1.bf16.msra.mxu0 0
        %1623 = vmatprep.subr.bf16.mxu0 0
        %1624 = vmatpush1.bf16.msra.mxu0 0
        %1625 = vmatprep.subr.bf16.mxu0 0
        %1626 = vmatpush1.bf16.msra.mxu0 0
        %1627 = vmatprep.subr.bf16.mxu0 0
        %1628 = vmatpush1.bf16.msra.mxu0 0
        %1629 = vmatprep.subr.bf16.mxu0 0
        %1630 = vmatpush1.bf16.msra.mxu0 0
        %1631 = vmatprep.subr.bf16.mxu0 0
        %1632 = vmatpush1.bf16.msra.mxu0 0
        %1633 = vmatprep.subr.bf16.mxu0 0
        %1634 = vmatpush1.bf16.msra.mxu0 0
        %1635 = vmatprep.subr.bf16.mxu0 0
        %1636 = vmatpush1.bf16.msra.mxu0 0
        %1637 = vmatprep.subr.bf16.mxu0 0
        %1638 = vmatpush1.bf16.msra.mxu0 0
        %1639 = vmatprep.mubr.bf16.mxu0 0
        %1640 = vmatmul.mubr.bf16.gmra.mrb[0].mxu0 %v1605
        %v1641 = vpop.f32.mrb[0].mxu0
        %v1642 = vadd.f32 0.0, %v1641
        %v1643 = vpop.f32.mrb[0].mxu0
        %v1644 = vpop.f32.mrb[0].mxu0
        %v1645 = vadd.f32 0.0, %v1644
        %v1646 = vpop.f32.mrb[0].mxu0
        %1647 = vdwg.mxu0
        %v1648 = vpack.c.bf16 %v1645, %v1642
        %v1649 = vld [vmem:[%s945 + $0x10] sm:$0xf]
        %v1650 = vld [vmem:[%s945 + $0x14] sm:$0xf]
        %v1651 = vld [vmem:[%s945 + $0x18] sm:$0xf]
        %v1652 = vld [vmem:[%s945 + $0x1c] sm:$0xf]
        %v1657 = vunpack.c.l.b16 %v1649
        %v1658 = vunpack.c.l.b16 %v1650
        %v1659 = vunpack.c.l.b16 %v1651
        %v1660 = vunpack.c.l.b16 %v1652
        %v1661 = vpack.c.b16 %v1658, %v1657
        %v1662 = vpack.c.b16 %v1660, %v1659
        %v1666 = vsel %vm1266, %v1648, 0
        %1668 = vmatprep.subr.bf16.mxu0 0
        %1669 = vmatpush1.bf16.msra.mxu0 %v1661
        %1670 = vmatprep.subr.bf16.mxu0 0
        %1671 = vmatpush1.bf16.msra.mxu0 %v1662
        %1672 = vmatprep.subr.bf16.mxu0 0
        %1673 = vmatpush1.bf16.msra.mxu0 0
        %1674 = vmatprep.subr.bf16.mxu0 0
        %1675 = vmatpush1.bf16.msra.mxu0 0
        %1676 = vmatprep.subr.bf16.mxu0 0
        %1677 = vmatpush1.bf16.msra.mxu0 0
        %1678 = vmatprep.subr.bf16.mxu0 0
        %1679 = vmatpush1.bf16.msra.mxu0 0
        %1680 = vmatprep.subr.bf16.mxu0 0
        %1681 = vmatpush1.bf16.msra.mxu0 0
        %1682 = vmatprep.subr.bf16.mxu0 0
        %1683 = vmatpush1.bf16.msra.mxu0 0
        %1684 = vmatprep.subr.bf16.mxu0 0
        %1685 = vmatpush1.bf16.msra.mxu0 0
        %1686 = vmatprep.subr.bf16.mxu0 0
        %1687 = vmatpush1.bf16.msra.mxu0 0
        %1688 = vmatprep.subr.bf16.mxu0 0
        %1689 = vmatpush1.bf16.msra.mxu0 0
        %1690 = vmatprep.subr.bf16.mxu0 0
        %1691 = vmatpush1.bf16.msra.mxu0 0
        %1692 = vmatprep.subr.bf16.mxu0 0
        %1693 = vmatpush1.bf16.msra.mxu0 0
        %1694 = vmatprep.subr.bf16.mxu0 0
        %1695 = vmatpush1.bf16.msra.mxu0 0
        %1696 = vmatprep.subr.bf16.mxu0 0
        %1697 = vmatpush1.bf16.msra.mxu0 0
        %1698 = vmatprep.subr.bf16.mxu0 0
        %1699 = vmatpush1.bf16.msra.mxu0 0
        %1700 = vmatprep.mubr.bf16.mxu0 0
        %1701 = vmatmul.mubr.bf16.gmra.mrb[0].mxu0 %v1666
        %v1702 = vpop.f32.mrb[0].mxu0
        %v1703 = vadd.f32 0.0, %v1702
        %v1704 = vpop.f32.mrb[0].mxu0
        %v1705 = vpop.f32.mrb[0].mxu0
        %v1706 = vadd.f32 0.0, %v1705
        %v1707 = vpop.f32.mrb[0].mxu0
        %1708 = vdwg.mxu0
        %v1713 = vunpack.c.l.b16 %v1596
        %v1714 = vunpack.c.l.b16 %v1597
        %v1715 = vunpack.c.l.b16 %v1598
        %v1716 = vunpack.c.l.b16 %v1599
        %v1717 = vpack.c.b16 %v1714, %v1713
        %v1718 = vpack.c.b16 %v1716, %v1715
        %v1722 = vsel %vm1266, %v1595, 0
        %1724 = vmatprep.subr.bf16.mxu0 0
        %1725 = vmatpush1.bf16.msra.mxu0 %v1717
        %1726 = vmatprep.subr.bf16.mxu0 0
        %1727 = vmatpush1.bf16.msra.mxu0 %v1718
        %1728 = vmatprep.subr.bf16.mxu0 0
        %1729 = vmatpush1.bf16.msra.mxu0 0
        %1730 = vmatprep.subr.bf16.mxu0 0
        %1731 = vmatpush1.bf16.msra.mxu0 0
        %1732 = vmatprep.subr.bf16.mxu0 0
        %1733 = vmatpush1.bf16.msra.mxu0 0
        %1734 = vmatprep.subr.bf16.mxu0 0
        %1735 = vmatpush1.bf16.msra.mxu0 0
        %1736 = vmatprep.subr.bf16.mxu0 0
        %1737 = vmatpush1.bf16.msra.mxu0 0
        %1738 = vmatprep.subr.bf16.mxu0 0
        %1739 = vmatpush1.bf16.msra.mxu0 0
        %1740 = vmatprep.subr.bf16.mxu0 0
        %1741 = vmatpush1.bf16.msra.mxu0 0
        %1742 = vmatprep.subr.bf16.mxu0 0
        %1743 = vmatpush1.bf16.msra.mxu0 0
        %1744 = vmatprep.subr.bf16.mxu0 0
        %1745 = vmatpush1.bf16.msra.mxu0 0
        %1746 = vmatprep.subr.bf16.mxu0 0
        %1747 = vmatpush1.bf16.msra.mxu0 0
        %1748 = vmatprep.subr.bf16.mxu0 0
        %1749 = vmatpush1.bf16.msra.mxu0 0
        %1750 = vmatprep.subr.bf16.mxu0 0
        %1751 = vmatpush1.bf16.msra.mxu0 0
        %1752 = vmatprep.subr.bf16.mxu0 0
        %1753 = vmatpush1.bf16.msra.mxu0 0
        %1754 = vmatprep.subr.bf16.mxu0 0
        %1755 = vmatpush1.bf16.msra.mxu0 0
        %1756 = vmatprep.mubr.bf16.mxu0 0
        %1757 = vmatmul.mubr.bf16.gmra.mrb[0].mxu0 %v1722
        %v1758 = vpop.f32.mrb[0].mxu0
        %v1759 = vadd.f32 %v1703, %v1758
        %v1760 = vpop.f32.mrb[0].mxu0
        %v1761 = vpop.f32.mrb[0].mxu0
        %v1762 = vadd.f32 %v1706, %v1761
        %v1763 = vpop.f32.mrb[0].mxu0
        %1764 = vdwg.mxu0
        %1765 = vrot.lane.b32.xlu0 %v1225, 64
        %v1766 = vpop.permute.xlu0 %1765
        %v1769 = vsel %vm1458, %v1549, 0
        %1771 = vmatprep.subr.bf16.mxu0 0
        %1772 = vmatpush1.bf16.msra.mxu0 %v1766
        %1773 = vmatprep.subr.bf16.mxu0 0
        %1774 = vmatpush1.bf16.msra.mxu0 0
        %1775 = vmatprep.subr.bf16.mxu0 0
        %1776 = vmatpush1.bf16.msra.mxu0 0
        %1777 = vmatprep.subr.bf16.mxu0 0
        %1778 = vmatpush1.bf16.msra.mxu0 0
        %1779 = vmatprep.subr.bf16.mxu0 0
        %1780 = vmatpush1.bf16.msra.mxu0 0
        %1781 = vmatprep.subr.bf16.mxu0 0
        %1782 = vmatpush1.bf16.msra.mxu0 0
        %1783 = vmatprep.subr.bf16.mxu0 0
        %1784 = vmatpush1.bf16.msra.mxu0 0
        %1785 = vmatprep.subr.bf16.mxu0 0
        %1786 = vmatpush1.bf16.msra.mxu0 0
        %1787 = vmatprep.subr.bf16.mxu0 0
        %1788 = vmatpush1.bf16.msra.mxu0 0
        %1789 = vmatprep.subr.bf16.mxu0 0
        %1790 = vmatpush1.bf16.msra.mxu0 0
        %1791 = vmatprep.subr.bf16.mxu0 0
        %1792 = vmatpush1.bf16.msra.mxu0 0
        %1793 = vmatprep.subr.bf16.mxu0 0
        %1794 = vmatpush1.bf16.msra.mxu0 0
        %1795 = vmatprep.subr.bf16.mxu0 0
        %1796 = vmatpush1.bf16.msra.mxu0 0
        %1797 = vmatprep.subr.bf16.mxu0 0
        %1798 = vmatpush1.bf16.msra.mxu0 0
        %1799 = vmatprep.subr.bf16.mxu0 0
        %1800 = vmatpush1.bf16.msra.mxu0 0
        %1801 = vmatprep.subr.bf16.mxu0 0
        %1802 = vmatpush1.bf16.msra.mxu0 0
        %1803 = vmatprep.mubr.bf16.mxu0 0
        %1804 = vmatmul.mubr.bf16.gmra.mrb[0].mxu0 %v1769
        %v1805 = vpop.f32.mrb[0].mxu0
        %v1806 = vadd.f32 0.0, %v1805
        %v1807 = vpop.f32.mrb[0].mxu0
        %v1808 = vpop.f32.mrb[0].mxu0
        %v1809 = vadd.f32 0.0, %v1808
        %v1810 = vpop.f32.mrb[0].mxu0
        %1811 = vdwg.mxu0
        %v1812 = vpack.c.bf16 %v1809, %v1806
        %v1813 = vld [vmem:[%s945 + $0x20] sm:$0xf]
        %v1814 = vld [vmem:[%s945 + $0x24] sm:$0xf]
        %v1815 = vld [vmem:[%s945 + $0x28] sm:$0xf]
        %v1816 = vld [vmem:[%s945 + $0x2c] sm:$0xf]
        %v1821 = vunpack.c.l.b16 %v1813
        %v1822 = vunpack.c.l.b16 %v1814
        %v1823 = vunpack.c.l.b16 %v1815
        %v1824 = vunpack.c.l.b16 %v1816
        %v1825 = vpack.c.b16 %v1822, %v1821
        %v1826 = vpack.c.b16 %v1824, %v1823
        %v1830 = vsel %vm1266, %v1812, 0
        %1832 = vmatprep.subr.bf16.mxu0 0
        %1833 = vmatpush1.bf16.msra.mxu0 %v1825
        %1834 = vmatprep.subr.bf16.mxu0 0
        %1835 = vmatpush1.bf16.msra.mxu0 %v1826
        %1836 = vmatprep.subr.bf16.mxu0 0
        %1837 = vmatpush1.bf16.msra.mxu0 0
        %1838 = vmatprep.subr.bf16.mxu0 0
        %1839 = vmatpush1.bf16.msra.mxu0 0
        %1840 = vmatprep.subr.bf16.mxu0 0
        %1841 = vmatpush1.bf16.msra.mxu0 0
        %1842 = vmatprep.subr.bf16.mxu0 0
        %1843 = vmatpush1.bf16.msra.mxu0 0
        %1844 = vmatprep.subr.bf16.mxu0 0
        %1845 = vmatpush1.bf16.msra.mxu0 0
        %1846 = vmatprep.subr.bf16.mxu0 0
        %1847 = vmatpush1.bf16.msra.mxu0 0
        %1848 = vmatprep.subr.bf16.mxu0 0
        %1849 = vmatpush1.bf16.msra.mxu0 0
        %1850 = vmatprep.subr.bf16.mxu0 0
        %1851 = vmatpush1.bf16.msra.mxu0 0
        %1852 = vmatprep.subr.bf16.mxu0 0
        %1853 = vmatpush1.bf16.msra.mxu0 0
        %1854 = vmatprep.subr.bf16.mxu0 0
        %1855 = vmatpush1.bf16.msra.mxu0 0
        %1856 = vmatprep.subr.bf16.mxu0 0
        %1857 = vmatpush1.bf16.msra.mxu0 0
        %1858 = vmatprep.subr.bf16.mxu0 0
        %1859 = vmatpush1.bf16.msra.mxu0 0
        %1860 = vmatprep.subr.bf16.mxu0 0
        %1861 = vmatpush1.bf16.msra.mxu0 0
        %1862 = vmatprep.subr.bf16.mxu0 0
        %1863 = vmatpush1.bf16.msra.mxu0 0
        %1864 = vmatprep.mubr.bf16.mxu0 0
        %1865 = vmatmul.mubr.bf16.gmra.mrb[0].mxu0 %v1830
        %v1866 = vpop.f32.mrb[0].mxu0
        %v1867 = vadd.f32 0.0, %v1866
        %v1868 = vpop.f32.mrb[0].mxu0
        %v1869 = vpop.f32.mrb[0].mxu0
        %v1870 = vadd.f32 0.0, %v1869
        %v1871 = vpop.f32.mrb[0].mxu0
        %1872 = vdwg.mxu0
        %v1873 = vadd.f32 %v1759, %v1867
        %v1874 = vadd.f32 %v1762, %v1870
        %1875 = vrot.lane.b32.xlu0 %v1225, 32
        %v1876 = vpop.permute.xlu0 %1875
        %v1879 = vsel %vm1458, %v1550, 0
        %1881 = vmatprep.subr.bf16.mxu0 0
        %1882 = vmatpush1.bf16.msra.mxu0 %v1876
        %1883 = vmatprep.subr.bf16.mxu0 0
        %1884 = vmatpush1.bf16.msra.mxu0 0
        %1885 = vmatprep.subr.bf16.mxu0 0
        %1886 = vmatpush1.bf16.msra.mxu0 0
        %1887 = vmatprep.subr.bf16.mxu0 0
        %1888 = vmatpush1.bf16.msra.mxu0 0
        %1889 = vmatprep.subr.bf16.mxu0 0
        %1890 = vmatpush1.bf16.msra.mxu0 0
        %1891 = vmatprep.subr.bf16.mxu0 0
        %1892 = vmatpush1.bf16.msra.mxu0 0
        %1893 = vmatprep.subr.bf16.mxu0 0
        %1894 = vmatpush1.bf16.msra.mxu0 0
        %1895 = vmatprep.subr.bf16.mxu0 0
        %1896 = vmatpush1.bf16.msra.mxu0 0
        %1897 = vmatprep.subr.bf16.mxu0 0
        %1898 = vmatpush1.bf16.msra.mxu0 0
        %1899 = vmatprep.subr.bf16.mxu0 0
        %1900 = vmatpush1.bf16.msra.mxu0 0
        %1901 = vmatprep.subr.bf16.mxu0 0
        %1902 = vmatpush1.bf16.msra.mxu0 0
        %1903 = vmatprep.subr.bf16.mxu0 0
        %1904 = vmatpush1.bf16.msra.mxu0 0
        %1905 = vmatprep.subr.bf16.mxu0 0
        %1906 = vmatpush1.bf16.msra.mxu0 0
        %1907 = vmatprep.subr.bf16.mxu0 0
        %1908 = vmatpush1.bf16.msra.mxu0 0
        %1909 = vmatprep.subr.bf16.mxu0 0
        %1910 = vmatpush1.bf16.msra.mxu0 0
        %1911 = vmatprep.subr.bf16.mxu0 0
        %1912 = vmatpush1.bf16.msra.mxu0 0
        %1913 = vmatprep.mubr.bf16.mxu0 0
        %1914 = vmatmul.mubr.bf16.gmra.mrb[0].mxu0 %v1879
        %v1915 = vpop.f32.mrb[0].mxu0
        %v1916 = vadd.f32 0.0, %v1915
        %v1917 = vpop.f32.mrb[0].mxu0
        %v1918 = vpop.f32.mrb[0].mxu0
        %v1919 = vadd.f32 0.0, %v1918
        %v1920 = vpop.f32.mrb[0].mxu0
        %1921 = vdwg.mxu0
        %v1922 = vpack.c.bf16 %v1919, %v1916
        %v1923 = vld [vmem:[%s945 + $0x30] sm:$0xf]
        %v1924 = vld [vmem:[%s945 + $0x34] sm:$0xf]
        %v1925 = vld [vmem:[%s945 + $0x38] sm:$0xf]
        %v1926 = vld [vmem:[%s945 + $0x3c] sm:$0xf]
        %v1931 = vunpack.c.l.b16 %v1923
        %v1932 = vunpack.c.l.b16 %v1924
        %v1933 = vunpack.c.l.b16 %v1925
        %v1934 = vunpack.c.l.b16 %v1926
        %v1935 = vpack.c.b16 %v1932, %v1931
        %v1936 = vpack.c.b16 %v1934, %v1933
        %v1940 = vsel %vm1266, %v1922, 0
        %1942 = vmatprep.subr.bf16.mxu0 0
        %1943 = vmatpush1.bf16.msra.mxu0 %v1935
        %1944 = vmatprep.subr.bf16.mxu0 0
        %1945 = vmatpush1.bf16.msra.mxu0 %v1936
        %1946 = vmatprep.subr.bf16.mxu0 0
        %1947 = vmatpush1.bf16.msra.mxu0 0
        %1948 = vmatprep.subr.bf16.mxu0 0
        %1949 = vmatpush1.bf16.msra.mxu0 0
        %1950 = vmatprep.subr.bf16.mxu0 0
        %1951 = vmatpush1.bf16.msra.mxu0 0
        %1952 = vmatprep.subr.bf16.mxu0 0
        %1953 = vmatpush1.bf16.msra.mxu0 0
        %1954 = vmatprep.subr.bf16.mxu0 0
        %1955 = vmatpush1.bf16.msra.mxu0 0
        %1956 = vmatprep.subr.bf16.mxu0 0
        %1957 = vmatpush1.bf16.msra.mxu0 0
        %1958 = vmatprep.subr.bf16.mxu0 0
        %1959 = vmatpush1.bf16.msra.mxu0 0
        %1960 = vmatprep.subr.bf16.mxu0 0
        %1961 = vmatpush1.bf16.msra.mxu0 0
        %1962 = vmatprep.subr.bf16.mxu0 0
        %1963 = vmatpush1.bf16.msra.mxu0 0
        %1964 = vmatprep.subr.bf16.mxu0 0
        %1965 = vmatpush1.bf16.msra.mxu0 0
        %1966 = vmatprep.subr.bf16.mxu0 0
        %1967 = vmatpush1.bf16.msra.mxu0 0
        %1968 = vmatprep.subr.bf16.mxu0 0
        %1969 = vmatpush1.bf16.msra.mxu0 0
        %1970 = vmatprep.subr.bf16.mxu0 0
        %1971 = vmatpush1.bf16.msra.mxu0 0
        %1972 = vmatprep.subr.bf16.mxu0 0
        %1973 = vmatpush1.bf16.msra.mxu0 0
        %1974 = vmatprep.mubr.bf16.mxu0 0
        %1975 = vmatmul.mubr.bf16.gmra.mrb[0].mxu0 %v1940
        %v1976 = vpop.f32.mrb[0].mxu0
        %v1977 = vadd.f32 0.0, %v1976
        %v1978 = vpop.f32.mrb[0].mxu0
        %v1979 = vpop.f32.mrb[0].mxu0
        %v1980 = vadd.f32 0.0, %v1979
        %v1981 = vpop.f32.mrb[0].mxu0
        %1982 = vdwg.mxu0
        %v1983 = vadd.f32 %v1873, %v1977
        %v1984 = vadd.f32 %v1874, %v1980
        %v1985 = vld [vmem:[%s948] sm:$0x1]
        %v1987 = vlaneseq
        %v1988 = vshrl.u32 %v1987, 7
        %v1989 = vsub.s32 0, %v1988
        %v1990 = vrot.slane %v1985, %v1989
        %v1992 = vadd.f32 %v1983, %v1990
        %v1993 = vadd.f32 %v1984, %v1990
        %v1994 = vadd.f32 %v958, %v1992
        %v1995 = vadd.f32 %v959, %v1993
        %v1996 = vld [vmem:[%s771] sm:$0x1]
        %v1997 = vld [vmem:[%s779] sm:$0x1]
        %1998 = vadd.xlane.f32.xlu0 %v1994
        %v1999 = vpop.xlane.xlu0 %1998
        %2000 = vadd.xlane.f32.xlu0 %v1995
        %v2001 = vpop.xlane.xlu0 %2000
        %v2002 = vrcp.pop 128.0
        %v2003 = vmul.f32 %v1999, %v2002
        %v2004 = vmul.f32 %v2001, %v2002
        %v2005 = vsub.f32 %v1994, %v2003
        %v2006 = vsub.f32 %v1995, %v2004
        %v2007 = vmul.f32 %v2005, %v2005
        %v2008 = vmul.f32 %v2006, %v2006
        %2009 = vadd.xlane.f32.xlu0 %v2007
        %v2010 = vpop.xlane.xlu0 %2009
        %2011 = vadd.xlane.f32.xlu0 %v2008
        %v2012 = vpop.xlane.xlu0 %2011
        %v2013 = vmul.f32 %v2010, %v2002
        %v2014 = vmul.f32 %v2012, %v2002
        %v2015 = vadd.f32 %v2013, 1e-05
        %v2016 = vadd.f32 %v2014, 1e-05
        %v2017 = vrsqrt.pop %v2015
        %v2018 = vrsqrt.pop %v2016
        %v2019 = vmul.f32 %v2005, %v2017
        %v2020 = vmul.f32 %v2006, %v2018
        %v2022 = vlaneseq
        %v2023 = vshrl.u32 %v2022, 7
        %v2024 = vsub.s32 0, %v2023
        %v2025 = vrot.slane %v1996, %v2024
        %v2027 = vmul.f32 %v2019, %v2025
        %v2028 = vmul.f32 %v2020, %v2025
        %v2030 = vlaneseq
        %v2031 = vshrl.u32 %v2030, 7
        %v2032 = vsub.s32 0, %v2031
        %v2033 = vrot.slane %v1997, %v2032
        %v2035 = vadd.f32 %v2027, %v2033
        %v2036 = vadd.f32 %v2028, %v2033
        %v2037 = vpack.c.bf16 %v2036, %v2035
        %v2038 = vld [vmem:[%s788] sm:$0xff]
        %v2039 = vld [vmem:[%s788 + $0x8] sm:$0xff]
        %v2040 = vld [vmem:[%s788 + $0x10] sm:$0xff]
        %v2041 = vld [vmem:[%s788 + $0x18] sm:$0xff]
        %v2042 = vld [vmem:[%s788 + $0x20] sm:$0xff]
        %v2043 = vld [vmem:[%s788 + $0x28] sm:$0xff]
        %v2044 = vld [vmem:[%s788 + $0x30] sm:$0xff]
        %v2045 = vld [vmem:[%s788 + $0x38] sm:$0xff]
        %v2046 = vld [vmem:[%s788 + $0x40] sm:$0xff]
        %v2047 = vld [vmem:[%s788 + $0x48] sm:$0xff]
        %v2048 = vld [vmem:[%s788 + $0x50] sm:$0xff]
        %v2049 = vld [vmem:[%s788 + $0x58] sm:$0xff]
        %v2050 = vld [vmem:[%s788 + $0x60] sm:$0xff]
        %v2051 = vld [vmem:[%s788 + $0x68] sm:$0xff]
        %v2052 = vld [vmem:[%s788 + $0x70] sm:$0xff]
        %v2053 = vld [vmem:[%s788 + $0x78] sm:$0xff]
        %v2054 = vld [vmem:[%s797] sm:$0x3]
        %v2056 = vlaneseq
        %v2057 = vshrl.u32 %v2056, 7
        %v2058 = vsub.s32 0, %v2057
        %v2059 = vrot.slane %v2054, %v2058
        %v2060 = vlaneseq
        %v2061 = vshrl.u32 %v2060, 7
        %v2062 = vsub.s32 1, %v2061
        %v2063 = vrot.slane %v2054, %v2062
        %v2082 = vunpack.c.l.b16 %v2038
        %v2083 = vunpack.c.h.b16 %v2038
        %v2084 = vunpack.c.l.b16 %v2039
        %v2085 = vunpack.c.h.b16 %v2039
        %v2086 = vunpack.c.l.b16 %v2040
        %v2087 = vunpack.c.h.b16 %v2040
        %v2088 = vunpack.c.l.b16 %v2041
        %v2089 = vunpack.c.h.b16 %v2041
        %v2090 = vunpack.c.l.b16 %v2042
        %v2091 = vunpack.c.h.b16 %v2042
        %v2092 = vunpack.c.l.b16 %v2043
        %v2093 = vunpack.c.h.b16 %v2043
        %v2094 = vunpack.c.l.b16 %v2044
        %v2095 = vunpack.c.h.b16 %v2044
        %v2096 = vunpack.c.l.b16 %v2045
        %v2097 = vunpack.c.h.b16 %v2045
        %v2098 = vunpack.c.l.b16 %v2046
        %v2099 = vunpack.c.h.b16 %v2046
        %v2100 = vunpack.c.l.b16 %v2047
        %v2101 = vunpack.c.h.b16 %v2047
        %v2102 = vunpack.c.l.b16 %v2048
        %v2103 = vunpack.c.h.b16 %v2048
        %v2104 = vunpack.c.l.b16 %v2049
        %v2105 = vunpack.c.h.b16 %v2049
        %v2106 = vunpack.c.l.b16 %v2050
        %v2107 = vunpack.c.h.b16 %v2050
        %v2108 = vunpack.c.l.b16 %v2051
        %v2109 = vunpack.c.h.b16 %v2051
        %v2110 = vunpack.c.l.b16 %v2052
        %v2111 = vunpack.c.h.b16 %v2052
        %v2112 = vunpack.c.l.b16 %v2053
        %v2113 = vunpack.c.h.b16 %v2053
        %v2114 = vpack.c.b16 %v2084, %v2082
        %v2115 = vpack.c.b16 %v2085, %v2083
        %v2116 = vpack.c.b16 %v2088, %v2086
        %v2117 = vpack.c.b16 %v2089, %v2087
        %v2118 = vpack.c.b16 %v2092, %v2090
        %v2119 = vpack.c.b16 %v2093, %v2091
        %v2120 = vpack.c.b16 %v2096, %v2094
        %v2121 = vpack.c.b16 %v2097, %v2095
        %v2122 = vpack.c.b16 %v2100, %v2098
        %v2123 = vpack.c.b16 %v2101, %v2099
        %v2124 = vpack.c.b16 %v2104, %v2102
        %v2125 = vpack.c.b16 %v2105, %v2103
        %v2126 = vpack.c.b16 %v2108, %v2106
        %v2127 = vpack.c.b16 %v2109, %v2107
        %v2128 = vpack.c.b16 %v2112, %v2110
        %v2129 = vpack.c.b16 %v2113, %v2111
        %2146 = vmatprep.subr.bf16.mxu0 %v2115
        %2147 = vmatpush1.bf16.msra.mxu0 %v2114
        %2148 = vmatprep.subr.bf16.mxu0 %v2117
        %2149 = vmatpush1.bf16.msra.mxu0 %v2116
        %2150 = vmatprep.subr.bf16.mxu0 %v2119
        %2151 = vmatpush1.bf16.msra.mxu0 %v2118
        %2152 = vmatprep.subr.bf16.mxu0 %v2121
        %2153 = vmatpush1.bf16.msra.mxu0 %v2120
        %2154 = vmatprep.subr.bf16.mxu0 %v2123
        %2155 = vmatpush1.bf16.msra.mxu0 %v2122
        %2156 = vmatprep.subr.bf16.mxu0 %v2125
        %2157 = vmatpush1.bf16.msra.mxu0 %v2124
        %2158 = vmatprep.subr.bf16.mxu0 %v2127
        %2159 = vmatpush1.bf16.msra.mxu0 %v2126
        %2160 = vmatprep.subr.bf16.mxu0 %v2129
        %2161 = vmatpush1.bf16.msra.mxu0 %v2128
        %2162 = vmatprep.subr.bf16.mxu0 0
        %2163 = vmatpush1.bf16.msra.mxu0 0
        %2164 = vmatprep.subr.bf16.mxu0 0
        %2165 = vmatpush1.bf16.msra.mxu0 0
        %2166 = vmatprep.subr.bf16.mxu0 0
        %2167 = vmatpush1.bf16.msra.mxu0 0
        %2168 = vmatprep.subr.bf16.mxu0 0
        %2169 = vmatpush1.bf16.msra.mxu0 0
        %2170 = vmatprep.subr.bf16.mxu0 0
        %2171 = vmatpush1.bf16.msra.mxu0 0
        %2172 = vmatprep.subr.bf16.mxu0 0
        %2173 = vmatpush1.bf16.msra.mxu0 0
        %2174 = vmatprep.subr.bf16.mxu0 0
        %2175 = vmatpush1.bf16.msra.mxu0 0
        %2176 = vmatprep.subr.bf16.mxu0 0
        %2177 = vmatpush1.bf16.msra.mxu0 0
        %2178 = vmatprep.mubr.bf16.mxu0 0
        %2179 = vmatmul.mubr.bf16.gmra.mrb[0].mxu0 %v2037
        %v2180 = vpop.f32.mrb[0].mxu0
        %v2181 = vadd.f32 %v2059, %v2180
        %v2182 = vpop.f32.mrb[0].mxu0
        %v2183 = vadd.f32 %v2063, %v2182
        %v2184 = vpop.f32.mrb[0].mxu0
        %v2185 = vadd.f32 %v2059, %v2184
        %v2186 = vpop.f32.mrb[0].mxu0
        %v2187 = vadd.f32 %v2063, %v2186
        %2188 = vdwg.mxu0
        %v2189 = vmax.f32 %v2181, 0.0
        %v2190 = vmax.f32 %v2183, 0.0
        %v2191 = vmax.f32 %v2185, 0.0
        %v2192 = vmax.f32 %v2187, 0.0
        %v2193 = vpack.c.bf16 %v2191, %v2189
        %v2194 = vpack.c.bf16 %v2192, %v2190
        %v2195 = vld [vmem:[%s806] sm:$0xf]
        %v2196 = vld [vmem:[%s806 + $0x4] sm:$0xf]
        %v2197 = vld [vmem:[%s806 + $0x8] sm:$0xf]
        %v2198 = vld [vmem:[%s806 + $0xc] sm:$0xf]
        %v2199 = vld [vmem:[%s806 + $0x10] sm:$0xf]
        %v2200 = vld [vmem:[%s806 + $0x14] sm:$0xf]
        %v2201 = vld [vmem:[%s806 + $0x18] sm:$0xf]
        %v2202 = vld [vmem:[%s806 + $0x1c] sm:$0xf]
        %v2203 = vld [vmem:[%s806 + $0x20] sm:$0xf]
        %v2204 = vld [vmem:[%s806 + $0x24] sm:$0xf]
        %v2205 = vld [vmem:[%s806 + $0x28] sm:$0xf]
        %v2206 = vld [vmem:[%s806 + $0x2c] sm:$0xf]
        %v2207 = vld [vmem:[%s806 + $0x30] sm:$0xf]
        %v2208 = vld [vmem:[%s806 + $0x34] sm:$0xf]
        %v2209 = vld [vmem:[%s806 + $0x38] sm:$0xf]
        %v2210 = vld [vmem:[%s806 + $0x3c] sm:$0xf]
        %v2211 = vld [vmem:[%s806 + $0x40] sm:$0xf]
        %v2212 = vld [vmem:[%s806 + $0x44] sm:$0xf]
        %v2213 = vld [vmem:[%s806 + $0x48] sm:$0xf]
        %v2214 = vld [vmem:[%s806 + $0x4c] sm:$0xf]
        %v2215 = vld [vmem:[%s806 + $0x50] sm:$0xf]
        %v2216 = vld [vmem:[%s806 + $0x54] sm:$0xf]
        %v2217 = vld [vmem:[%s806 + $0x58] sm:$0xf]
        %v2218 = vld [vmem:[%s806 + $0x5c] sm:$0xf]
        %v2219 = vld [vmem:[%s806 + $0x60] sm:$0xf]
        %v2220 = vld [vmem:[%s806 + $0x64] sm:$0xf]
        %v2221 = vld [vmem:[%s806 + $0x68] sm:$0xf]
        %v2222 = vld [vmem:[%s806 + $0x6c] sm:$0xf]
        %v2223 = vld [vmem:[%s806 + $0x70] sm:$0xf]
        %v2224 = vld [vmem:[%s806 + $0x74] sm:$0xf]
        %v2225 = vld [vmem:[%s806 + $0x78] sm:$0xf]
        %v2226 = vld [vmem:[%s806 + $0x7c] sm:$0xf]
        %v2227 = vld [vmem:[%s814] sm:$0x1]
        %v2229 = vlaneseq
        %v2230 = vshrl.u32 %v2229, 7
        %v2231 = vsub.s32 0, %v2230
        %v2232 = vrot.slane %v2227, %v2231
        %v2266 = vunpack.c.l.b16 %v2195
        %v2267 = vunpack.c.l.b16 %v2196
        %v2268 = vunpack.c.l.b16 %v2197
        %v2269 = vunpack.c.l.b16 %v2198
        %v2270 = vunpack.c.l.b16 %v2199
        %v2271 = vunpack.c.l.b16 %v2200
        %v2272 = vunpack.c.l.b16 %v2201
        %v2273 = vunpack.c.l.b16 %v2202
        %v2274 = vunpack.c.l.b16 %v2203
        %v2275 = vunpack.c.l.b16 %v2204
        %v2276 = vunpack.c.l.b16 %v2205
        %v2277 = vunpack.c.l.b16 %v2206
        %v2278 = vunpack.c.l.b16 %v2207
        %v2279 = vunpack.c.l.b16 %v2208
        %v2280 = vunpack.c.l.b16 %v2209
        %v2281 = vunpack.c.l.b16 %v2210
        %v2282 = vunpack.c.l.b16 %v2211
        %v2283 = vunpack.c.l.b16 %v2212
        %v2284 = vunpack.c.l.b16 %v2213
        %v2285 = vunpack.c.l.b16 %v2214
        %v2286 = vunpack.c.l.b16 %v2215
        %v2287 = vunpack.c.l.b16 %v2216
        %v2288 = vunpack.c.l.b16 %v2217
        %v2289 = vunpack.c.l.b16 %v2218
        %v2290 = vunpack.c.l.b16 %v2219
        %v2291 = vunpack.c.l.b16 %v2220
        %v2292 = vunpack.c.l.b16 %v2221
        %v2293 = vunpack.c.l.b16 %v2222
        %v2294 = vunpack.c.l.b16 %v2223
        %v2295 = vunpack.c.l.b16 %v2224
        %v2296 = vunpack.c.l.b16 %v2225
        %v2297 = vunpack.c.l.b16 %v2226
        %v2298 = vpack.c.b16 %v2267, %v2266
        %v2299 = vpack.c.b16 %v2269, %v2268
        %v2300 = vpack.c.b16 %v2271, %v2270
        %v2301 = vpack.c.b16 %v2273, %v2272
        %v2302 = vpack.c.b16 %v2275, %v2274
        %v2303 = vpack.c.b16 %v2277, %v2276
        %v2304 = vpack.c.b16 %v2279, %v2278
        %v2305 = vpack.c.b16 %v2281, %v2280
        %v2306 = vpack.c.b16 %v2283, %v2282
        %v2307 = vpack.c.b16 %v2285, %v2284
        %v2308 = vpack.c.b16 %v2287, %v2286
        %v2309 = vpack.c.b16 %v2289, %v2288
        %v2310 = vpack.c.b16 %v2291, %v2290
        %v2311 = vpack.c.b16 %v2293, %v2292
        %v2312 = vpack.c.b16 %v2295, %v2294
        %v2313 = vpack.c.b16 %v2297, %v2296
        %2330 = vmatprep.subr.bf16.mxu0 0
        %2331 = vmatpush1.bf16.msra.mxu0 %v2298
        %2332 = vmatprep.subr.bf16.mxu0 0
        %2333 = vmatpush1.bf16.msra.mxu0 %v2299
        %2334 = vmatprep.subr.bf16.mxu0 0
        %2335 = vmatpush1.bf16.msra.mxu0 %v2300
        %2336 = vmatprep.subr.bf16.mxu0 0
        %2337 = vmatpush1.bf16.msra.mxu0 %v2301
        %2338 = vmatprep.subr.bf16.mxu0 0
        %2339 = vmatpush1.bf16.msra.mxu0 %v2302
        %2340 = vmatprep.subr.bf16.mxu0 0
        %2341 = vmatpush1.bf16.msra.mxu0 %v2303
        %2342 = vmatprep.subr.bf16.mxu0 0
        %2343 = vmatpush1.bf16.msra.mxu0 %v2304
        %2344 = vmatprep.subr.bf16.mxu0 0
        %2345 = vmatpush1.bf16.msra.mxu0 %v2305
        %2346 = vmatprep.subr.bf16.mxu0 0
        %2347 = vmatpush1.bf16.msra.mxu0 %v2306
        %2348 = vmatprep.subr.bf16.mxu0 0
        %2349 = vmatpush1.bf16.msra.mxu0 %v2307
        %2350 = vmatprep.subr.bf16.mxu0 0
        %2351 = vmatpush1.bf16.msra.mxu0 %v2308
        %2352 = vmatprep.subr.bf16.mxu0 0
        %2353 = vmatpush1.bf16.msra.mxu0 %v2309
        %2354 = vmatprep.subr.bf16.mxu0 0
        %2355 = vmatpush1.bf16.msra.mxu0 %v2310
        %2356 = vmatprep.subr.bf16.mxu0 0
        %2357 = vmatpush1.bf16.msra.mxu0 %v2311
        %2358 = vmatprep.subr.bf16.mxu0 0
        %2359 = vmatpush1.bf16.msra.mxu0 %v2312
        %2360 = vmatprep.subr.bf16.mxu0 0
        %2361 = vmatpush1.bf16.msra.mxu0 %v2313
        %2362 = vmatprep.mubr.bf16.mxu0 %v2194
        %2363 = vmatmul.mubr.bf16.gmra.mrb[0].mxu0 %v2193
        %v2364 = vpop.f32.mrb[0].mxu0
        %v2365 = vadd.f32 %v2232, %v2364
        %v2366 = vpop.f32.mrb[0].mxu0
        %v2367 = vpop.f32.mrb[0].mxu0
        %v2368 = vadd.f32 %v2232, %v2367
        %v2369 = vpop.f32.mrb[0].mxu0
        %2370 = vdwg.mxu0
        %v2371 = vadd.f32 %v2035, %v2365
        %v2372 = vadd.f32 %v2036, %v2368
        %v2373 = vld [vmem:[%s822] sm:$0x1]
        %v2374 = vld [vmem:[%s830] sm:$0x1]
        %2375 = vadd.xlane.f32.xlu0 %v2371
        %v2376 = vpop.xlane.xlu0 %2375
        %2377 = vadd.xlane.f32.xlu0 %v2372
        %v2378 = vpop.xlane.xlu0 %2377
        %v2379 = vmul.f32 %v2376, %v2002
        %v2380 = vmul.f32 %v2378, %v2002
        %v2381 = vsub.f32 %v2371, %v2379
        %v2382 = vsub.f32 %v2372, %v2380
        %v2383 = vmul.f32 %v2381, %v2381
        %v2384 = vmul.f32 %v2382, %v2382
        %2385 = vadd.xlane.f32.xlu0 %v2383
        %v2386 = vpop.xlane.xlu0 %2385
        %2387 = vadd.xlane.f32.xlu0 %v2384
        %v2388 = vpop.xlane.xlu0 %2387
        %v2389 = vmul.f32 %v2386, %v2002
        %v2390 = vmul.f32 %v2388, %v2002
        %v2391 = vadd.f32 %v2389, 1e-05
        %v2392 = vadd.f32 %v2390, 1e-05
        %v2393 = vrsqrt.pop %v2391
        %v2394 = vrsqrt.pop %v2392
        %v2395 = vmul.f32 %v2381, %v2393
        %v2396 = vmul.f32 %v2382, %v2394
        %v2398 = vlaneseq
        %v2399 = vshrl.u32 %v2398, 7
        %v2400 = vsub.s32 0, %v2399
        %v2401 = vrot.slane %v2373, %v2400
        %v2403 = vmul.f32 %v2395, %v2401
        %v2404 = vmul.f32 %v2396, %v2401
        %v2406 = vlaneseq
        %v2407 = vshrl.u32 %v2406, 7
        %v2408 = vsub.s32 0, %v2407
        %v2409 = vrot.slane %v2374, %v2408
        %v2411 = vadd.f32 %v2403, %v2409
        %v2412 = vadd.f32 %v2404, %v2409
        %2413 = vst [vmem:[#allocation2] sm:$0xff] %v2411
        %2414 = vst [vmem:[#allocation2 + $0x8] sm:$0xff] %v2412
        %p2415 = scmp.eq.s32.totalorder %s47, 3
        // Predicated region
        $region145: #{vit_forward.1} parent=91 // pred_check
          %p2416 = pneg %p2415
        $region146: #{vit_forward.1} parent=91 // pred_check_branch
          %2418 = sbr.rel (%p2416) target = $region148
        $region147: #{vit_forward.1} parent=91 // pred_region
          %v2419 = vld [vmem:[%s14] sm:$0x1]
          %v2420 = vld [vmem:[#allocation18] sm:$0x1]
          %vm2421 = vcmask 1041408
          %v2422 = vsel %vm2421, %v2411, 0.0
          %2423 = vadd.xlane.f32.xlu0 %v2422
          %v2424 = vpop.xlane.xlu0 %2423
          %v2425 = vmul.f32 %v2424, %v2002
          %v2426 = vsub.f32 %v2411, %v2425
          %v2427 = vmul.f32 %v2426, %v2426
          %v2428 = vsel %vm2421, %v2427, 0.0
          %2429 = vadd.xlane.f32.xlu0 %v2428
          %v2430 = vpop.xlane.xlu0 %2429
          %v2431 = vmul.f32 %v2430, %v2002
          %v2432 = vadd.f32 %v2431, 1e-05
          %v2433 = vrsqrt.pop %v2432
          %v2434 = vmul.f32 %v2426, %v2433
          %v2436 = vlaneseq
          %v2437 = vshrl.u32 %v2436, 7
          %v2438 = vsub.s32 0, %v2437
          %v2439 = vrot.slane %v2419, %v2438
          %v2441 = vmul.f32 %v2434, %v2439
          %v2443 = vlaneseq
          %v2444 = vshrl.u32 %v2443, 7
          %v2445 = vsub.s32 0, %v2444
          %v2446 = vrot.slane %v2420, %v2445
          %v2448 = vadd.f32 %v2441, %v2446
          %v2449 = vpack.c.bf16 %v2448, %v2448
          %v2450 = vld [vmem:[#allocation20] sm:$0xf]
          %v2451 = vld [vmem:[#allocation20 + $0x4] sm:$0xf]
          %v2452 = vld [vmem:[#allocation20 + $0x8] sm:$0xf]
          %v2453 = vld [vmem:[#allocation20 + $0xc] sm:$0xf]
          %v2454 = vld [vmem:[#allocation20 + $0x10] sm:$0xf]
          %v2455 = vld [vmem:[#allocation20 + $0x14] sm:$0xf]
          %v2456 = vld [vmem:[#allocation20 + $0x18] sm:$0xf]
          %v2457 = vld [vmem:[#allocation20 + $0x1c] sm:$0xf]
          %v2458 = vld [vmem:[#allocation20 + $0x20] sm:$0xf]
          %v2459 = vld [vmem:[#allocation20 + $0x24] sm:$0xf]
          %v2460 = vld [vmem:[#allocation20 + $0x28] sm:$0xf]
          %v2461 = vld [vmem:[#allocation20 + $0x2c] sm:$0xf]
          %v2462 = vld [vmem:[#allocation20 + $0x30] sm:$0xf]
          %v2463 = vld [vmem:[#allocation20 + $0x34] sm:$0xf]
          %v2464 = vld [vmem:[#allocation20 + $0x38] sm:$0xf]
          %v2465 = vld [vmem:[#allocation20 + $0x3c] sm:$0xf]
          %v2466 = vld [vmem:[#allocation21] sm:$0x1]
          %v2468 = vlaneseq
          %v2469 = vshrl.u32 %v2468, 7
          %v2470 = vsub.s32 0, %v2469
          %v2471 = vrot.slane %v2466, %v2470
          %v2489 = vunpack.c.l.b16 %v2450
          %v2490 = vunpack.c.l.b16 %v2451
          %v2491 = vunpack.c.l.b16 %v2452
          %v2492 = vunpack.c.l.b16 %v2453
          %v2493 = vunpack.c.l.b16 %v2454
          %v2494 = vunpack.c.l.b16 %v2455
          %v2495 = vunpack.c.l.b16 %v2456
          %v2496 = vunpack.c.l.b16 %v2457
          %v2497 = vunpack.c.l.b16 %v2458
          %v2498 = vunpack.c.l.b16 %v2459
          %v2499 = vunpack.c.l.b16 %v2460
          %v2500 = vunpack.c.l.b16 %v2461
          %v2501 = vunpack.c.l.b16 %v2462
          %v2502 = vunpack.c.l.b16 %v2463
          %v2503 = vunpack.c.l.b16 %v2464
          %v2504 = vunpack.c.l.b16 %v2465
          %v2505 = vpack.c.b16 %v2490, %v2489
          %v2506 = vpack.c.b16 %v2492, %v2491
          %v2507 = vpack.c.b16 %v2494, %v2493
          %v2508 = vpack.c.b16 %v2496, %v2495
          %v2509 = vpack.c.b16 %v2498, %v2497
          %v2510 = vpack.c.b16 %v2500, %v2499
          %v2511 = vpack.c.b16 %v2502, %v2501
          %v2512 = vpack.c.b16 %v2504, %v2503
          %2521 = vmatprep.subr.bf16.mxu0 0
          %2522 = vmatpush1.bf16.msra.mxu0 %v2505
          %2523 = vmatprep.subr.bf16.mxu0 0
          %2524 = vmatpush1.bf16.msra.mxu0 %v2506
          %2525 = vmatprep.subr.bf16.mxu0 0
          %2526 = vmatpush1.bf16.msra.mxu0 %v2507
          %2527 = vmatprep.subr.bf16.mxu0 0
          %2528 = vmatpush1.bf16.msra.mxu0 %v2508
          %2529 = vmatprep.subr.bf16.mxu0 0
          %2530 = vmatpush1.bf16.msra.mxu0 %v2509
          %2531 = vmatprep.subr.bf16.mxu0 0
          %2532 = vmatpush1.bf16.msra.mxu0 %v2510
          %2533 = vmatprep.subr.bf16.mxu0 0
          %2534 = vmatpush1.bf16.msra.mxu0 %v2511
          %2535 = vmatprep.subr.bf16.mxu0 0
          %2536 = vmatpush1.bf16.msra.mxu0 %v2512
          %2537 = vmatprep.subr.bf16.mxu0 0
          %2538 = vmatpush1.bf16.msra.mxu0 0
          %2539 = vmatprep.subr.bf16.mxu0 0
          %2540 = vmatpush1.bf16.msra.mxu0 0
          %2541 = vmatprep.subr.bf16.mxu0 0
          %2542 = vmatpush1.bf16.msra.mxu0 0
          %2543 = vmatprep.subr.bf16.mxu0 0
          %2544 = vmatpush1.bf16.msra.mxu0 0
          %2545 = vmatprep.subr.bf16.mxu0 0
          %2546 = vmatpush1.bf16.msra.mxu0 0
          %2547 = vmatprep.subr.bf16.mxu0 0
          %2548 = vmatpush1.bf16.msra.mxu0 0
          %2549 = vmatprep.subr.bf16.mxu0 0
          %2550 = vmatpush1.bf16.msra.mxu0 0
          %2551 = vmatprep.subr.bf16.mxu0 0
          %2552 = vmatpush1.bf16.msra.mxu0 0
          %2553 = vmatprep.mubr.bf16.mxu0 0
          %2554 = vmatmul.mubr.bf16.gmra.mrb[0].mxu0 %v2449
          %v2555 = vpop.f32.mrb[0].mxu0
          %v2556 = vadd.f32 %v2471, %v2555
          %v2557 = vpop.f32.mrb[0].mxu0
          %v2558 = vpop.f32.mrb[0].mxu0
          %v2559 = vpop.f32.mrb[0].mxu0
          %2560 = vdwg.mxu0
          %2561 = vst [vmem:[#allocation23] sm:$0x3] %v2556
        $region148: #{vit_forward.1} parent=91 // pred_fallthru
          _
        // Predicated region
        $region149: #{vit_forward.1} parent=91 // pred_check
          %p2562 = pneg %p498
        $region150: #{vit_forward.1} parent=91 // pred_check_branch
          %2564 = sbr.rel (%p2562) target = $region152
        $region151: #{vit_forward.1} parent=91 // pred_region
          %s2566 = ssub.s32 32, 32
          %2567 = vsyncadd [#allocation5], %s2566
          %s2569 = sshll.u32 [#allocation23], 4
          %s2570 = int_to_ptr.vmem [resolvable:$true] %s2569
          %2572 = dma.vmem_to_hbm [thread:$0]  %s2570, 32, %s18, [#allocation5]
        $region152: #{vit_forward.1} parent=91 // pred_fallthru
          _
        // Predicated region
        $region153: #{vit_forward.1} parent=91 // pred_check
          %p2573 = pneg %p498
        $region154: #{vit_forward.1} parent=91 // pred_check_branch
          %2575 = sbr.rel (%p2573) target = $region156
        $region155: #{vit_forward.1} parent=91 // pred_region
          %2576 = dma.done [#allocation5], 32
        $region156: #{vit_forward.1} parent=91 // pred_fallthru
          _
      $region92: #{vit_forward.1} parent=5 // pred_fallthru
        _
      %p2577 = scmp.le.s32.totalorder 2, %s42
      // Predicated region
      $region157: #{vit_forward.1} parent=5 // pred_check
        %p2578 = pneg %p2577
      $region158: #{vit_forward.1} parent=5 // pred_check_branch
        %2580 = sbr.rel (%p2578) target = $region160
      $region159: #{vit_forward.1} parent=5 // pred_region
        %s2581 = ssub.s32 %s42, 2
      $region160: #{vit_forward.1} parent=5 // pred_fallthru
        _
    $region6: #{vit_forward.1} parent=1 // loop_footer
      %s46 = sadd.s32 1, %s42
    $region7: #{vit_forward.1} parent=1 // loop_footer_branch
      %41 = sbr.rel target = $region3
    $region8: #{vit_forward.1} parent=1 // loop_exit
      _
    %2582 = vsyncpa [#allocation4], 1
    %s2583 = scalar_lea.sflag [#allocation4], 1
    %2584 = vsyncpa %s2583, 1
    %2585 = vsyncpa [#allocation7], 1
    %s2586 = scalar_lea.sflag [#allocation7], 1
    %2587 = vsyncpa %s2586, 1
    %2588 = vsyncpa [#allocation10], 1
    %s2589 = scalar_lea.sflag [#allocation10], 1
    %2590 = vsyncpa %s2589, 1
    %2591 = vsyncpa [#allocation13], 1
    %s2592 = scalar_lea.sflag [#allocation13], 1
    %2593 = vsyncpa %s2592, 1
    %2594 = vsyncpa [#allocation16], 1
    %s2595 = scalar_lea.sflag [#allocation16], 1
    %2596 = vsyncpa %s2595, 1
    %2597 = vsyncpa [#allocation19], 1
    %2598 = vsyncpa [#allocation22], 1
    %2599 = vsyncpa [#allocation5], 1
    %s2600 = scalar_lea.sflag [#allocation5], 1
    %2601 = vsyncpa %s2600, 1

</llo_original>
